<compile_context>
chip_gen: v7x
topology: tpu7x:2x2x1
jax: 0.10.0
libtpu: 0.0.40
codegen_flags: <defaults>
</compile_context>

<pallas_src>
import functools
import math

import jax
import jax.numpy as jnp
from jax import lax
from jax.experimental import pallas as pl
from jax.experimental.pallas import tpu as pltpu

NEG_SLOPE = 0.01  # LeakyReLU negative_slope


# ----------------------------- fused tree kernel -----------------------------

def _tree_kernel(x_ref, *refs, level, pad_l, pad_r, k1):
    """Whole SCINet_Tree forward for one batch element, one level at a time.

    refs = [W1_l0, b1_l0, W2_l0, b2_l0, W1_l1, ..., b2_lN, out_ref]; every
    W/b slab has a leading dim of 2: index 0 = fused (phi,psi) pass, index 1 =
    fused (U,P) pass for that level.
    """
    out_ref = refs[-1]
    wrefs = refs[:-1]
    f32 = jnp.float32
    C = x_ref.shape[-1]

    sel_cache = {}  # one selection-matrix pair per unique stream length

    def split_sels(L):
        if L not in sel_cache:
            le, lo = (L + 1) // 2, L // 2
            r = lax.broadcasted_iota(jnp.int32, (le, L), 0)
            c = lax.broadcasted_iota(jnp.int32, (le, L), 1)
            sel_e = (c == 2 * r).astype(f32)
            # replicate-pad the odd stream's last element when L is odd
            sel_o = (c == jnp.minimum(2 * r + 1, 2 * lo - 1)).astype(f32)
            sel_cache[L] = (sel_e, sel_o, le, lo)
        return sel_cache[L]

    def conv(v, w, b, k):
        # Valid 1-D conv as ONE im2col matmul: (Lout, k*F) @ (k*F, Fout) + bias.
        lout = v.shape[0] - k + 1
        patches = jnp.concatenate([v[t:t + lout, :] for t in range(k)], axis=1)
        return jnp.dot(patches, w, preferred_element_type=f32) + b

    def branch_pass(v, w1, b1, w2, b2):
        # ReplicationPad -> Conv1d(k1) -> LeakyReLU -> Dropout -> Conv1d(3) -> Tanh
        # for ALL fused branches at once (lane-block-diagonal weights).
        F = v.shape[1]
        vp = jnp.concatenate(
            [jnp.broadcast_to(v[:1, :], (pad_l, F)), v,
             jnp.broadcast_to(v[-1:, :], (pad_r, F))], axis=0)
        z = conv(vp, w1, b1, k1)
        z = jnp.where(z > 0, z, NEG_SLOPE * z)
        # TODO(synk): nn.Dropout modeled in eval mode (identity) -- no RNG mask.
        z = conv(z, w2, b2, 3)
        return jnp.tanh(z)

    # streams: lane-concat of all node inputs of the current level, (L, n*C)
    streams = x_ref[0].astype(f32)
    row = 0
    for li in range(level + 1):
        n = 1 << li                           # number of nodes at this level
        w1_ref = wrefs[4 * li + 0]
        b1_ref = wrefs[4 * li + 1]
        w2_ref = wrefs[4 * li + 2]
        b2_ref = wrefs[4 * li + 3]

        L = streams.shape[0]
        sel_e, sel_o, le, lo = split_sels(L)
        xe = jnp.dot(sel_e, streams, preferred_element_type=f32)   # (le, n*C)
        xo = jnp.dot(sel_o, streams, preferred_element_type=f32)   # (le, n*C)

        # Fused phi/psi over every node: input blocks [xe_0..xe_{n-1} | xo_*].
        pp = branch_pass(jnp.concatenate([xe, xo], axis=1),
                         w1_ref[0], b1_ref[0], w2_ref[0], b2_ref[0])
        e_pp = jnp.exp(pp)
        d = xo * e_pp[:, :n * C]              # d_j = xo_j * exp(phi_j(xe_j))
        c = xe * e_pp[:, n * C:]              # c_j = xe_j * exp(psi_j(xo_j))

        # Fused U/P over every node: input blocks [d_0..d_{n-1} | c_*].
        up = branch_pass(jnp.concatenate([d, c], axis=1),
                         w1_ref[1], b1_ref[1], w2_ref[1], b2_ref[1])
        eo = c + up[:, :n * C]                # eo_j = c_j + U_j(d_j)
        oo = d - up[:, n * C:]                # oo_j = d_j - P_j(c_j)

        if li == level:
            # Leaf level: emit per-node [even | odd] blocks in split order;
            # the wrapper applies the zip permutation once at the end.
            for j in range(n):
                blk = slice(j * C, (j + 1) * C)
                out_ref[0, row:row + le, :] = eo[:, blk].astype(out_ref.dtype)
                row += le
                out_ref[0, row:row + lo, :] = oo[:lo, blk].astype(out_ref.dtype)
                row += lo
        else:
            # Children streams in order [eo_0, oo_0, eo_1, oo_1, ...] on lanes.
            pieces = []
            for j in range(n):
                blk = slice(j * C, (j + 1) * C)
                pieces.append(eo[:, blk])
                pieces.append(oo[:, blk])
            streams = jnp.concatenate(pieces, axis=1)


# --------------------------- wrapper / weight packing -------------------------

def _nodes_by_level(tree, level):
    levels = [[tree]]
    for _ in range(level):
        nxt = []
        for nd in levels[-1]:
            nxt.append(nd["even"])
            nxt.append(nd["odd"])
        levels.append(nxt)
    return levels


def _pack_conv(ws):
    # ws: list of S per-branch (k, Cin, Cout) weights ->
    # branch-block-diagonal im2col weight (k*S*Cin, S*Cout).
    S = len(ws)
    k, cin, cout = ws[0].shape
    W = jnp.zeros((k, S, cin, S, cout), ws[0].dtype)
    for s, w in enumerate(ws):
        W = W.at[:, s, :, s, :].set(w)
    return W.reshape(k * S * cin, S * cout)


def _pack_level(nodes):
    # Two fused passes per level: (phi,psi) applied to [xe_* | xo_*] and
    # (U,P) applied to [d_* | c_*]; identical shapes so they stack on axis 0.
    packs = []
    for ia, ib in ((0, 1), (2, 3)):           # block = [phi, psi, U, P]
        branches = ([nd["block"][ia] for nd in nodes]
                    + [nd["block"][ib] for nd in nodes])
        w1 = _pack_conv([p[0] for p in branches])
        b1 = jnp.concatenate([p[1] for p in branches], axis=1)
        w2 = _pack_conv([p[2] for p in branches])
        b2 = jnp.concatenate([p[3] for p in branches], axis=1)
        packs.append((w1, b1, w2, b2))
    (w1a, b1a, w2a, b2a), (w1b, b1b, w2b, b2b) = packs
    return (jnp.stack([w1a, w1b]), jnp.stack([b1a, b1b]),
            jnp.stack([w2a, w2b]), jnp.stack([b2a, b2b]))


def _zip_perm(length, level):
    # true_output[i] = kernel_split_order_output[perm[i]] (pure-Python, static).
    le, lo = (length + 1) // 2, length // 2
    if level == 0:
        pe, po = list(range(le)), list(range(lo))
    else:
        pe = _zip_perm(le, level - 1)
        po = _zip_perm(lo, level - 1)
    p = []
    for i in range(min(le, lo)):
        p.append(pe[i])
        p.append(le + po[i])
    if lo < le:
        p.append(pe[-1])
    return p


@functools.partial(jax.jit, static_argnames=("level", "pad_l", "pad_r", "k1"))
def scinet_tree_forward(x, tree, *, level, pad_l, pad_r, k1):
    B, T, C = x.shape
    if T % (1 << level) != 0:
        # TODO(synk): ragged (odd-length) interior splits need per-node lengths
        # within a level; only T divisible by 2**current_level is fused here.
        raise NotImplementedError("seq_len must be divisible by 2**current_level")

    packed = []
    for nodes in _nodes_by_level(tree, level):
        packed.extend(_pack_level(nodes))

    kernel = functools.partial(_tree_kernel, level=level, pad_l=pad_l,
                               pad_r=pad_r, k1=k1)
    in_specs = [pl.BlockSpec((1, T, C), lambda b: (b, 0, 0))]
    in_specs += [pl.BlockSpec(arr.shape, lambda b: (0, 0, 0)) for arr in packed]

    out = pl.pallas_call(
        kernel,
        out_shape=jax.ShapeDtypeStruct((B, T, C), x.dtype),
        grid=(B,),
        in_specs=in_specs,
        out_specs=pl.BlockSpec((1, T, C), lambda b: (b, 0, 0)),
        compiler_params=pltpu.CompilerParams(
            dimension_semantics=("parallel",)),
    )(x, *packed)

    perm = jnp.asarray(_zip_perm(T, level), dtype=jnp.int32)
    return jnp.take(out, perm, axis=1)


# ------------------------------ pure-JAX reference ----------------------------

def _ref_conv(h, w, b):
    k = w.shape[0]
    lout = h.shape[1] - k + 1
    acc = jnp.zeros((h.shape[0], lout, w.shape[2]), jnp.float32) + b.reshape(1, 1, -1)
    for t in range(k):
        acc = acc + jnp.einsum("blc,co->blo", h[:, t:t + lout, :], w[t],
                               precision=lax.Precision.HIGHEST)
    return acc


def _ref_branch(h, params, pad_l, pad_r):
    w1, b1, w2, b2 = params
    hp = jnp.concatenate([jnp.repeat(h[:, :1, :], pad_l, axis=1), h,
                          jnp.repeat(h[:, -1:, :], pad_r, axis=1)], axis=1)
    z = _ref_conv(hp, w1, b1)
    z = jnp.where(z > 0, z, NEG_SLOPE * z)
    return jnp.tanh(_ref_conv(z, w2, b2))


def _ref_zip(even, odd):
    b, le, c = even.shape
    lo = odd.shape[1]
    m = min(le, lo)
    out = jnp.stack([even[:, :m, :], odd[:, :m, :]], axis=2).reshape(b, 2 * m, c)
    if lo < le:
        out = jnp.concatenate([out, even[:, -1:, :]], axis=1)
    return out


def scinet_tree_reference(x, node, level, pad_l, pad_r):
    even, odd = x[:, ::2, :], x[:, 1::2, :]
    flag = 0
    if odd.shape[1] < even.shape[1]:
        odd = jnp.concatenate([odd, odd[:, -1:, :]], axis=1)
        flag = 1
    phi, psi, u, p = node["block"]
    d = odd * jnp.exp(_ref_branch(even, phi, pad_l, pad_r))
    c = even * jnp.exp(_ref_branch(odd, psi, pad_l, pad_r))
    eo = c + _ref_branch(d, u, pad_l, pad_r)
    oo = d - _ref_branch(c, p, pad_l, pad_r)
    if flag == 1:
        oo = oo[:, :-1, :]
    if level == 0:
        return _ref_zip(eo, oo)
    return _ref_zip(scinet_tree_reference(eo, node["even"], level - 1, pad_l, pad_r),
                    scinet_tree_reference(oo, node["odd"], level - 1, pad_l, pad_r))


# --------------------------- deterministic parameters -------------------------

def _make_branch_params(key, cin, hid, k1, k2=3):
    ks = jax.random.split(key, 4)
    lim1 = 1.0 / math.sqrt(cin * k1)   # Conv1d default U(-1/sqrt(fan_in), ...)
    lim2 = 1.0 / math.sqrt(hid * k2)
    w1 = jax.random.uniform(ks[0], (k1, cin, hid), jnp.float32, -lim1, lim1)
    b1 = jax.random.uniform(ks[1], (1, hid), jnp.float32, -lim1, lim1)
    w2 = jax.random.uniform(ks[2], (k2, hid, cin), jnp.float32, -lim2, lim2)
    b2 = jax.random.uniform(ks[3], (1, cin), jnp.float32, -lim2, lim2)
    return (w1, b1, w2, b2)


def make_tree_params(key, level, cin, hid, k1):
    kb, ke, ko = jax.random.split(key, 3)
    kphi, kpsi, ku, kp = jax.random.split(kb, 4)
    node = {"block": [_make_branch_params(kphi, cin, hid, k1),
                      _make_branch_params(kpsi, cin, hid, k1),
                      _make_branch_params(ku, cin, hid, k1),
                      _make_branch_params(kp, cin, hid, k1)]}
    if level != 0:
        node["even"] = make_tree_params(ke, level - 1, cin, hid, k1)
        node["odd"] = make_tree_params(ko, level - 1, cin, hid, k1)
    return node


# ------------------------------------ main ------------------------------------

if __name__ == "__main__":
    B, T, C = 2, 16, 4          # batch, seq_len, in_planes
    hidden_size = 2
    H = int(C * hidden_size)
    kernel_size = 5
    current_level = 2
    dilation = 1                 # module hardcodes dilation = 1
    # TODO(synk): groups>1 (grouped Conv1d) not implemented; groups=1 assumed.

    if kernel_size % 2 == 0:
        pad_l = dilation * (kernel_size - 2) // 2 + 1
        pad_r = dilation * kernel_size // 2 + 1
    else:
        pad_l = dilation * (kernel_size - 1) // 2 + 1
        pad_r = dilation * (kernel_size - 1) // 2 + 1

    root = jax.random.PRNGKey(0)
    kx, kp = jax.random.split(root)
    x = jax.random.normal(kx, (B, T, C), jnp.float32)
    tree = make_tree_params(kp, current_level, C, H, kernel_size)

    out = scinet_tree_forward(x, tree, level=current_level,
                              pad_l=pad_l, pad_r=pad_r, k1=kernel_size)
    out = jax.block_until_ready(out)
    assert out.shape == (B, T, C), out.shape
    assert bool(jnp.all(jnp.isfinite(out)))

    ref = scinet_tree_reference(x, tree, current_level, pad_l, pad_r)
    max_err = float(jnp.max(jnp.abs(out - ref)))
    assert jnp.allclose(out, ref, rtol=2e-2, atol=2e-2), max_err

    print("KERNEL_OK")
</pallas_src>

<mosaic_0001>
module attributes {stable_mosaic.version = 11 : i64} {
  func.func @_tree_kernel(%arg0: i32, %arg1: memref<1x16x4xf32, #tpu.memory_space<vmem>>, %arg2: memref<2x40x16xf32, #tpu.memory_space<vmem>>, %arg3: memref<2x1x16xf32, #tpu.memory_space<vmem>>, %arg4: memref<2x48x8xf32, #tpu.memory_space<vmem>>, %arg5: memref<2x1x8xf32, #tpu.memory_space<vmem>>, %arg6: memref<2x80x32xf32, #tpu.memory_space<vmem>>, %arg7: memref<2x1x32xf32, #tpu.memory_space<vmem>>, %arg8: memref<2x96x16xf32, #tpu.memory_space<vmem>>, %arg9: memref<2x1x16xf32, #tpu.memory_space<vmem>>, %arg10: memref<2x160x64xf32, #tpu.memory_space<vmem>>, %arg11: memref<2x1x64xf32, #tpu.memory_space<vmem>>, %arg12: memref<2x192x32xf32, #tpu.memory_space<vmem>>, %arg13: memref<2x1x32xf32, #tpu.memory_space<vmem>>, %arg14: memref<1x16x4xf32, #tpu.memory_space<vmem>>) attributes {dimension_semantics = [#tpu.dimension_semantics<parallel>], iteration_bounds = array<i64: 2>, scalar_prefetch = 0 : i64, scratch_operands = 0 : i64, tpu.core_type = #tpu.core_type<tc>, window_params = [{transform_indices = @transform_0, window_bounds = array<i64: 1, 16, 4>}, {pipeline_mode = #tpu.pipeline_mode<synchronous>, transform_indices = @transform_1, window_bounds = array<i64: 2, 40, 16>}, {pipeline_mode = #tpu.pipeline_mode<synchronous>, transform_indices = @transform_2, window_bounds = array<i64: 2, 1, 16>}, {pipeline_mode = #tpu.pipeline_mode<synchronous>, transform_indices = @transform_3, window_bounds = array<i64: 2, 48, 8>}, {pipeline_mode = #tpu.pipeline_mode<synchronous>, transform_indices = @transform_4, window_bounds = array<i64: 2, 1, 8>}, {pipeline_mode = #tpu.pipeline_mode<synchronous>, transform_indices = @transform_5, window_bounds = array<i64: 2, 80, 32>}, {pipeline_mode = #tpu.pipeline_mode<synchronous>, transform_indices = @transform_6, window_bounds = array<i64: 2, 1, 32>}, {pipeline_mode = #tpu.pipeline_mode<synchronous>, transform_indices = @transform_7, window_bounds = array<i64: 2, 96, 16>}, {pipeline_mode = #tpu.pipeline_mode<synchronous>, transform_indices = @transform_8, window_bounds = array<i64: 2, 1, 16>}, {pipeline_mode = #tpu.pipeline_mode<synchronous>, transform_indices = @transform_9, window_bounds = array<i64: 2, 160, 64>}, {pipeline_mode = #tpu.pipeline_mode<synchronous>, transform_indices = @transform_10, window_bounds = array<i64: 2, 1, 64>}, {pipeline_mode = #tpu.pipeline_mode<synchronous>, transform_indices = @transform_11, window_bounds = array<i64: 2, 192, 32>}, {pipeline_mode = #tpu.pipeline_mode<synchronous>, transform_indices = @transform_12, window_bounds = array<i64: 2, 1, 32>}, {transform_indices = @transform_13, window_bounds = array<i64: 1, 16, 4>}]} {
    %c0 = arith.constant 0 : index
    %c0_0 = arith.constant 0 : index
    %c0_1 = arith.constant 0 : index
    %0 = vector.load %arg1[%c0, %c0_0, %c0_1] : memref<1x16x4xf32, #tpu.memory_space<vmem>>, vector<1x16x4xf32>
    %1 = vector.shape_cast %0 : vector<1x16x4xf32> to vector<16x4xf32>
    %2 = tpu.iota {dimensions = array<i32: 0>} : vector<8x16xi32>
    %3 = tpu.iota {dimensions = array<i32: 1>} : vector<8x16xi32>
    %c2_i32 = arith.constant 2 : i32
    %4 = vector.broadcast %c2_i32 : i32 to vector<8x16xi32>
    %5 = arith.muli %4, %2 : vector<8x16xi32>
    %6 = arith.cmpi eq, %3, %5 : vector<8x16xi32>
    %7 = arith.extui %6 : vector<8x16xi1> to vector<8x16xi32>
    %8 = arith.sitofp %7 : vector<8x16xi32> to vector<8x16xf32>
    %c2_i32_2 = arith.constant 2 : i32
    %9 = vector.broadcast %c2_i32_2 : i32 to vector<8x16xi32>
    %10 = arith.muli %9, %2 : vector<8x16xi32>
    %c1_i32 = arith.constant 1 : i32
    %11 = vector.broadcast %c1_i32 : i32 to vector<8x16xi32>
    %12 = arith.addi %10, %11 : vector<8x16xi32>
    %c15_i32 = arith.constant 15 : i32
    %13 = vector.broadcast %c15_i32 : i32 to vector<8x16xi32>
    %14 = arith.minsi %12, %13 : vector<8x16xi32>
    %15 = arith.cmpi eq, %3, %14 : vector<8x16xi32>
    %16 = arith.extui %15 : vector<8x16xi1> to vector<8x16xi32>
    %17 = arith.sitofp %16 : vector<8x16xi32> to vector<8x16xf32>
    %cst = arith.constant dense<0.000000e+00> : vector<8x4xf32>
    %18 = tpu.matmul %8, %1, %cst {dimension_numbers = #tpu.dot_dimension_numbers<[1], [0], [0], [1], [0, 0, 1, 1], [], []>} : vector<8x16xf32>, vector<16x4xf32>, vector<8x4xf32> -> vector<8x4xf32>
    %cst_3 = arith.constant dense<0.000000e+00> : vector<8x4xf32>
    %19 = tpu.matmul %17, %1, %cst_3 {dimension_numbers = #tpu.dot_dimension_numbers<[1], [0], [0], [1], [0, 0, 1, 1], [], []>} : vector<8x16xf32>, vector<16x4xf32>, vector<8x4xf32> -> vector<8x4xf32>
    %20 = tpu.concatenate %18, %19 in 1 : vector<8x4xf32>, vector<8x4xf32> -> vector<8x8xf32>
    %c0_4 = arith.constant 0 : index
    %c0_5 = arith.constant 0 : index
    %c0_6 = arith.constant 0 : index
    %21 = vector.load %arg2[%c0_4, %c0_5, %c0_6] : memref<2x40x16xf32, #tpu.memory_space<vmem>>, vector<1x40x16xf32>
    %22 = vector.shape_cast %21 : vector<1x40x16xf32> to vector<40x16xf32>
    %c0_7 = arith.constant 0 : index
    %c0_8 = arith.constant 0 : index
    %c0_9 = arith.constant 0 : index
    %23 = vector.load %arg3[%c0_7, %c0_8, %c0_9] : memref<2x1x16xf32, #tpu.memory_space<vmem>>, vector<1x1x16xf32>
    %24 = vector.shape_cast %23 : vector<1x1x16xf32> to vector<1x16xf32>
    %c0_10 = arith.constant 0 : index
    %c0_11 = arith.constant 0 : index
    %c0_12 = arith.constant 0 : index
    %25 = vector.load %arg4[%c0_10, %c0_11, %c0_12] : memref<2x48x8xf32, #tpu.memory_space<vmem>>, vector<1x48x8xf32>
    %26 = vector.shape_cast %25 : vector<1x48x8xf32> to vector<48x8xf32>
    %c0_13 = arith.constant 0 : index
    %c0_14 = arith.constant 0 : index
    %c0_15 = arith.constant 0 : index
    %27 = vector.load %arg5[%c0_13, %c0_14, %c0_15] : memref<2x1x8xf32, #tpu.memory_space<vmem>>, vector<1x1x8xf32>
    %28 = vector.shape_cast %27 : vector<1x1x8xf32> to vector<1x8xf32>
    %29 = vector.extract_strided_slice %20 {offsets = [0, 0], sizes = [1, 8], strides = [1, 1]} : vector<8x8xf32> to vector<1x8xf32>
    %30 = vector.shape_cast %29 : vector<1x8xf32> to vector<1x8xf32>
    %31 = vector.broadcast %30 : vector<1x8xf32> to vector<3x8xf32>
    %32 = vector.extract_strided_slice %20 {offsets = [7, 0], sizes = [1, 8], strides = [1, 1]} : vector<8x8xf32> to vector<1x8xf32>
    %33 = vector.shape_cast %32 : vector<1x8xf32> to vector<1x8xf32>
    %34 = vector.broadcast %33 : vector<1x8xf32> to vector<3x8xf32>
    %35 = tpu.concatenate %31, %20, %34 in 0 : vector<3x8xf32>, vector<8x8xf32>, vector<3x8xf32> -> vector<14x8xf32>
    %36 = vector.extract_strided_slice %35 {offsets = [0, 0], sizes = [10, 8], strides = [1, 1]} : vector<14x8xf32> to vector<10x8xf32>
    %37 = vector.extract_strided_slice %35 {offsets = [1, 0], sizes = [10, 8], strides = [1, 1]} : vector<14x8xf32> to vector<10x8xf32>
    %38 = vector.extract_strided_slice %35 {offsets = [2, 0], sizes = [10, 8], strides = [1, 1]} : vector<14x8xf32> to vector<10x8xf32>
    %39 = vector.extract_strided_slice %35 {offsets = [3, 0], sizes = [10, 8], strides = [1, 1]} : vector<14x8xf32> to vector<10x8xf32>
    %40 = vector.extract_strided_slice %35 {offsets = [4, 0], sizes = [10, 8], strides = [1, 1]} : vector<14x8xf32> to vector<10x8xf32>
    %41 = tpu.concatenate %36, %37, %38, %39, %40 in 1 : vector<10x8xf32>, vector<10x8xf32>, vector<10x8xf32>, vector<10x8xf32>, vector<10x8xf32> -> vector<10x40xf32>
    %cst_16 = arith.constant dense<0.000000e+00> : vector<10x16xf32>
    %42 = tpu.matmul %41, %22, %cst_16 {dimension_numbers = #tpu.dot_dimension_numbers<[1], [0], [0], [1], [0, 0, 1, 1], [], []>} : vector<10x40xf32>, vector<40x16xf32>, vector<10x16xf32> -> vector<10x16xf32>
    %43 = vector.broadcast %24 : vector<1x16xf32> to vector<10x16xf32>
    %44 = arith.addf %42, %43 : vector<10x16xf32>
    %cst_17 = arith.constant 0.000000e+00 : f32
    %45 = vector.broadcast %cst_17 : f32 to vector<10x16xf32>
    %46 = arith.cmpf ogt, %44, %45 : vector<10x16xf32>
    %cst_18 = arith.constant 0.00999999977 : f32
    %47 = vector.broadcast %cst_18 : f32 to vector<10x16xf32>
    %48 = arith.mulf %47, %44 : vector<10x16xf32>
    %49 = arith.select %46, %44, %48 : vector<10x16xi1>, vector<10x16xf32>
    %50 = vector.extract_strided_slice %49 {offsets = [0, 0], sizes = [8, 16], strides = [1, 1]} : vector<10x16xf32> to vector<8x16xf32>
    %51 = vector.extract_strided_slice %49 {offsets = [1, 0], sizes = [8, 16], strides = [1, 1]} : vector<10x16xf32> to vector<8x16xf32>
    %52 = vector.extract_strided_slice %49 {offsets = [2, 0], sizes = [8, 16], strides = [1, 1]} : vector<10x16xf32> to vector<8x16xf32>
    %53 = tpu.concatenate %50, %51, %52 in 1 : vector<8x16xf32>, vector<8x16xf32>, vector<8x16xf32> -> vector<8x48xf32>
    %cst_19 = arith.constant dense<0.000000e+00> : vector<8x8xf32>
    %54 = tpu.matmul %53, %26, %cst_19 {dimension_numbers = #tpu.dot_dimension_numbers<[1], [0], [0], [1], [0, 0, 1, 1], [], []>} : vector<8x48xf32>, vector<48x8xf32>, vector<8x8xf32> -> vector<8x8xf32>
    %55 = vector.broadcast %28 : vector<1x8xf32> to vector<8x8xf32>
    %56 = arith.addf %54, %55 : vector<8x8xf32>
    %57 = math.tanh %56 : vector<8x8xf32>
    %58 = math.exp %57 : vector<8x8xf32>
    %59 = vector.extract_strided_slice %58 {offsets = [0, 0], sizes = [8, 4], strides = [1, 1]} : vector<8x8xf32> to vector<8x4xf32>
    %60 = arith.mulf %19, %59 : vector<8x4xf32>
    %61 = vector.extract_strided_slice %58 {offsets = [0, 4], sizes = [8, 4], strides = [1, 1]} : vector<8x8xf32> to vector<8x4xf32>
    %62 = arith.mulf %18, %61 : vector<8x4xf32>
    %63 = tpu.concatenate %60, %62 in 1 : vector<8x4xf32>, vector<8x4xf32> -> vector<8x8xf32>
    %c1 = arith.constant 1 : index
    %c0_20 = arith.constant 0 : index
    %c0_21 = arith.constant 0 : index
    %64 = vector.load %arg2[%c1, %c0_20, %c0_21] : memref<2x40x16xf32, #tpu.memory_space<vmem>>, vector<1x40x16xf32>
    %65 = vector.shape_cast %64 : vector<1x40x16xf32> to vector<40x16xf32>
    %c1_22 = arith.constant 1 : index
    %c0_23 = arith.constant 0 : index
    %c0_24 = arith.constant 0 : index
    %66 = vector.load %arg3[%c1_22, %c0_23, %c0_24] : memref<2x1x16xf32, #tpu.memory_space<vmem>>, vector<1x1x16xf32>
    %67 = vector.shape_cast %66 : vector<1x1x16xf32> to vector<1x16xf32>
    %c1_25 = arith.constant 1 : index
    %c0_26 = arith.constant 0 : index
    %c0_27 = arith.constant 0 : index
    %68 = vector.load %arg4[%c1_25, %c0_26, %c0_27] : memref<2x48x8xf32, #tpu.memory_space<vmem>>, vector<1x48x8xf32>
    %69 = vector.shape_cast %68 : vector<1x48x8xf32> to vector<48x8xf32>
    %c1_28 = arith.constant 1 : index
    %c0_29 = arith.constant 0 : index
    %c0_30 = arith.constant 0 : index
    %70 = vector.load %arg5[%c1_28, %c0_29, %c0_30] : memref<2x1x8xf32, #tpu.memory_space<vmem>>, vector<1x1x8xf32>
    %71 = vector.shape_cast %70 : vector<1x1x8xf32> to vector<1x8xf32>
    %72 = vector.extract_strided_slice %63 {offsets = [0, 0], sizes = [1, 8], strides = [1, 1]} : vector<8x8xf32> to vector<1x8xf32>
    %73 = vector.shape_cast %72 : vector<1x8xf32> to vector<1x8xf32>
    %74 = vector.broadcast %73 : vector<1x8xf32> to vector<3x8xf32>
    %75 = vector.extract_strided_slice %63 {offsets = [7, 0], sizes = [1, 8], strides = [1, 1]} : vector<8x8xf32> to vector<1x8xf32>
    %76 = vector.shape_cast %75 : vector<1x8xf32> to vector<1x8xf32>
    %77 = vector.broadcast %76 : vector<1x8xf32> to vector<3x8xf32>
    %78 = tpu.concatenate %74, %63, %77 in 0 : vector<3x8xf32>, vector<8x8xf32>, vector<3x8xf32> -> vector<14x8xf32>
    %79 = vector.extract_strided_slice %78 {offsets = [0, 0], sizes = [10, 8], strides = [1, 1]} : vector<14x8xf32> to vector<10x8xf32>
    %80 = vector.extract_strided_slice %78 {offsets = [1, 0], sizes = [10, 8], strides = [1, 1]} : vector<14x8xf32> to vector<10x8xf32>
    %81 = vector.extract_strided_slice %78 {offsets = [2, 0], sizes = [10, 8], strides = [1, 1]} : vector<14x8xf32> to vector<10x8xf32>
    %82 = vector.extract_strided_slice %78 {offsets = [3, 0], sizes = [10, 8], strides = [1, 1]} : vector<14x8xf32> to vector<10x8xf32>
    %83 = vector.extract_strided_slice %78 {offsets = [4, 0], sizes = [10, 8], strides = [1, 1]} : vector<14x8xf32> to vector<10x8xf32>
    %84 = tpu.concatenate %79, %80, %81, %82, %83 in 1 : vector<10x8xf32>, vector<10x8xf32>, vector<10x8xf32>, vector<10x8xf32>, vector<10x8xf32> -> vector<10x40xf32>
    %cst_31 = arith.constant dense<0.000000e+00> : vector<10x16xf32>
    %85 = tpu.matmul %84, %65, %cst_31 {dimension_numbers = #tpu.dot_dimension_numbers<[1], [0], [0], [1], [0, 0, 1, 1], [], []>} : vector<10x40xf32>, vector<40x16xf32>, vector<10x16xf32> -> vector<10x16xf32>
    %86 = vector.broadcast %67 : vector<1x16xf32> to vector<10x16xf32>
    %87 = arith.addf %85, %86 : vector<10x16xf32>
    %cst_32 = arith.constant 0.000000e+00 : f32
    %88 = vector.broadcast %cst_32 : f32 to vector<10x16xf32>
    %89 = arith.cmpf ogt, %87, %88 : vector<10x16xf32>
    %cst_33 = arith.constant 0.00999999977 : f32
    %90 = vector.broadcast %cst_33 : f32 to vector<10x16xf32>
    %91 = arith.mulf %90, %87 : vector<10x16xf32>
    %92 = arith.select %89, %87, %91 : vector<10x16xi1>, vector<10x16xf32>
    %93 = vector.extract_strided_slice %92 {offsets = [0, 0], sizes = [8, 16], strides = [1, 1]} : vector<10x16xf32> to vector<8x16xf32>
    %94 = vector.extract_strided_slice %92 {offsets = [1, 0], sizes = [8, 16], strides = [1, 1]} : vector<10x16xf32> to vector<8x16xf32>
    %95 = vector.extract_strided_slice %92 {offsets = [2, 0], sizes = [8, 16], strides = [1, 1]} : vector<10x16xf32> to vector<8x16xf32>
    %96 = tpu.concatenate %93, %94, %95 in 1 : vector<8x16xf32>, vector<8x16xf32>, vector<8x16xf32> -> vector<8x48xf32>
    %cst_34 = arith.constant dense<0.000000e+00> : vector<8x8xf32>
    %97 = tpu.matmul %96, %69, %cst_34 {dimension_numbers = #tpu.dot_dimension_numbers<[1], [0], [0], [1], [0, 0, 1, 1], [], []>} : vector<8x48xf32>, vector<48x8xf32>, vector<8x8xf32> -> vector<8x8xf32>
    %98 = vector.broadcast %71 : vector<1x8xf32> to vector<8x8xf32>
    %99 = arith.addf %97, %98 : vector<8x8xf32>
    %100 = math.tanh %99 : vector<8x8xf32>
    %101 = vector.extract_strided_slice %100 {offsets = [0, 0], sizes = [8, 4], strides = [1, 1]} : vector<8x8xf32> to vector<8x4xf32>
    %102 = arith.addf %62, %101 : vector<8x4xf32>
    %103 = vector.extract_strided_slice %100 {offsets = [0, 4], sizes = [8, 4], strides = [1, 1]} : vector<8x8xf32> to vector<8x4xf32>
    %104 = arith.subf %60, %103 : vector<8x4xf32>
    %105 = tpu.concatenate %102, %104 in 1 : vector<8x4xf32>, vector<8x4xf32> -> vector<8x8xf32>
    %106 = tpu.iota {dimensions = array<i32: 0>} : vector<4x8xi32>
    %107 = tpu.iota {dimensions = array<i32: 1>} : vector<4x8xi32>
    %c2_i32_35 = arith.constant 2 : i32
    %108 = vector.broadcast %c2_i32_35 : i32 to vector<4x8xi32>
    %109 = arith.muli %108, %106 : vector<4x8xi32>
    %110 = arith.cmpi eq, %107, %109 : vector<4x8xi32>
    %111 = arith.extui %110 : vector<4x8xi1> to vector<4x8xi32>
    %112 = arith.sitofp %111 : vector<4x8xi32> to vector<4x8xf32>
    %c2_i32_36 = arith.constant 2 : i32
    %113 = vector.broadcast %c2_i32_36 : i32 to vector<4x8xi32>
    %114 = arith.muli %113, %106 : vector<4x8xi32>
    %c1_i32_37 = arith.constant 1 : i32
    %115 = vector.broadcast %c1_i32_37 : i32 to vector<4x8xi32>
    %116 = arith.addi %114, %115 : vector<4x8xi32>
    %c7_i32 = arith.constant 7 : i32
    %117 = vector.broadcast %c7_i32 : i32 to vector<4x8xi32>
    %118 = arith.minsi %116, %117 : vector<4x8xi32>
    %119 = arith.cmpi eq, %107, %118 : vector<4x8xi32>
    %120 = arith.extui %119 : vector<4x8xi1> to vector<4x8xi32>
    %121 = arith.sitofp %120 : vector<4x8xi32> to vector<4x8xf32>
    %cst_38 = arith.constant dense<0.000000e+00> : vector<4x8xf32>
    %122 = tpu.matmul %112, %105, %cst_38 {dimension_numbers = #tpu.dot_dimension_numbers<[1], [0], [0], [1], [0, 0, 1, 1], [], []>} : vector<4x8xf32>, vector<8x8xf32>, vector<4x8xf32> -> vector<4x8xf32>
    %cst_39 = arith.constant dense<0.000000e+00> : vector<4x8xf32>
    %123 = tpu.matmul %121, %105, %cst_39 {dimension_numbers = #tpu.dot_dimension_numbers<[1], [0], [0], [1], [0, 0, 1, 1], [], []>} : vector<4x8xf32>, vector<8x8xf32>, vector<4x8xf32> -> vector<4x8xf32>
    %124 = tpu.concatenate %122, %123 in 1 : vector<4x8xf32>, vector<4x8xf32> -> vector<4x16xf32>
    %c0_40 = arith.constant 0 : index
    %c0_41 = arith.constant 0 : index
    %c0_42 = arith.constant 0 : index
    %125 = vector.load %arg6[%c0_40, %c0_41, %c0_42] : memref<2x80x32xf32, #tpu.memory_space<vmem>>, vector<1x80x32xf32>
    %126 = vector.shape_cast %125 : vector<1x80x32xf32> to vector<80x32xf32>
    %c0_43 = arith.constant 0 : index
    %c0_44 = arith.constant 0 : index
    %c0_45 = arith.constant 0 : index
    %127 = vector.load %arg7[%c0_43, %c0_44, %c0_45] : memref<2x1x32xf32, #tpu.memory_space<vmem>>, vector<1x1x32xf32>
    %128 = vector.shape_cast %127 : vector<1x1x32xf32> to vector<1x32xf32>
    %c0_46 = arith.constant 0 : index
    %c0_47 = arith.constant 0 : index
    %c0_48 = arith.constant 0 : index
    %129 = vector.load %arg8[%c0_46, %c0_47, %c0_48] : memref<2x96x16xf32, #tpu.memory_space<vmem>>, vector<1x96x16xf32>
    %130 = vector.shape_cast %129 : vector<1x96x16xf32> to vector<96x16xf32>
    %c0_49 = arith.constant 0 : index
    %c0_50 = arith.constant 0 : index
    %c0_51 = arith.constant 0 : index
    %131 = vector.load %arg9[%c0_49, %c0_50, %c0_51] : memref<2x1x16xf32, #tpu.memory_space<vmem>>, vector<1x1x16xf32>
    %132 = vector.shape_cast %131 : vector<1x1x16xf32> to vector<1x16xf32>
    %133 = vector.extract_strided_slice %124 {offsets = [0, 0], sizes = [1, 16], strides = [1, 1]} : vector<4x16xf32> to vector<1x16xf32>
    %134 = vector.shape_cast %133 : vector<1x16xf32> to vector<1x16xf32>
    %135 = vector.broadcast %134 : vector<1x16xf32> to vector<3x16xf32>
    %136 = vector.extract_strided_slice %124 {offsets = [3, 0], sizes = [1, 16], strides = [1, 1]} : vector<4x16xf32> to vector<1x16xf32>
    %137 = vector.shape_cast %136 : vector<1x16xf32> to vector<1x16xf32>
    %138 = vector.broadcast %137 : vector<1x16xf32> to vector<3x16xf32>
    %139 = tpu.concatenate %135, %124, %138 in 0 : vector<3x16xf32>, vector<4x16xf32>, vector<3x16xf32> -> vector<10x16xf32>
    %140 = vector.extract_strided_slice %139 {offsets = [0, 0], sizes = [6, 16], strides = [1, 1]} : vector<10x16xf32> to vector<6x16xf32>
    %141 = vector.extract_strided_slice %139 {offsets = [1, 0], sizes = [6, 16], strides = [1, 1]} : vector<10x16xf32> to vector<6x16xf32>
    %142 = vector.extract_strided_slice %139 {offsets = [2, 0], sizes = [6, 16], strides = [1, 1]} : vector<10x16xf32> to vector<6x16xf32>
    %143 = vector.extract_strided_slice %139 {offsets = [3, 0], sizes = [6, 16], strides = [1, 1]} : vector<10x16xf32> to vector<6x16xf32>
    %144 = vector.extract_strided_slice %139 {offsets = [4, 0], sizes = [6, 16], strides = [1, 1]} : vector<10x16xf32> to vector<6x16xf32>
    %145 = tpu.concatenate %140, %141, %142, %143, %144 in 1 : vector<6x16xf32>, vector<6x16xf32>, vector<6x16xf32>, vector<6x16xf32>, vector<6x16xf32> -> vector<6x80xf32>
    %cst_52 = arith.constant dense<0.000000e+00> : vector<6x32xf32>
    %146 = tpu.matmul %145, %126, %cst_52 {dimension_numbers = #tpu.dot_dimension_numbers<[1], [0], [0], [1], [0, 0, 1, 1], [], []>} : vector<6x80xf32>, vector<80x32xf32>, vector<6x32xf32> -> vector<6x32xf32>
    %147 = vector.broadcast %128 : vector<1x32xf32> to vector<6x32xf32>
    %148 = arith.addf %146, %147 : vector<6x32xf32>
    %cst_53 = arith.constant 0.000000e+00 : f32
    %149 = vector.broadcast %cst_53 : f32 to vector<6x32xf32>
    %150 = arith.cmpf ogt, %148, %149 : vector<6x32xf32>
    %cst_54 = arith.constant 0.00999999977 : f32
    %151 = vector.broadcast %cst_54 : f32 to vector<6x32xf32>
    %152 = arith.mulf %151, %148 : vector<6x32xf32>
    %153 = arith.select %150, %148, %152 : vector<6x32xi1>, vector<6x32xf32>
    %154 = vector.extract_strided_slice %153 {offsets = [0, 0], sizes = [4, 32], strides = [1, 1]} : vector<6x32xf32> to vector<4x32xf32>
    %155 = vector.extract_strided_slice %153 {offsets = [1, 0], sizes = [4, 32], strides = [1, 1]} : vector<6x32xf32> to vector<4x32xf32>
    %156 = vector.extract_strided_slice %153 {offsets = [2, 0], sizes = [4, 32], strides = [1, 1]} : vector<6x32xf32> to vector<4x32xf32>
    %157 = tpu.concatenate %154, %155, %156 in 1 : vector<4x32xf32>, vector<4x32xf32>, vector<4x32xf32> -> vector<4x96xf32>
    %cst_55 = arith.constant dense<0.000000e+00> : vector<4x16xf32>
    %158 = tpu.matmul %157, %130, %cst_55 {dimension_numbers = #tpu.dot_dimension_numbers<[1], [0], [0], [1], [0, 0, 1, 1], [], []>} : vector<4x96xf32>, vector<96x16xf32>, vector<4x16xf32> -> vector<4x16xf32>
    %159 = vector.broadcast %132 : vector<1x16xf32> to vector<4x16xf32>
    %160 = arith.addf %158, %159 : vector<4x16xf32>
    %161 = math.tanh %160 : vector<4x16xf32>
    %162 = math.exp %161 : vector<4x16xf32>
    %163 = vector.extract_strided_slice %162 {offsets = [0, 0], sizes = [4, 8], strides = [1, 1]} : vector<4x16xf32> to vector<4x8xf32>
    %164 = arith.mulf %123, %163 : vector<4x8xf32>
    %165 = vector.extract_strided_slice %162 {offsets = [0, 8], sizes = [4, 8], strides = [1, 1]} : vector<4x16xf32> to vector<4x8xf32>
    %166 = arith.mulf %122, %165 : vector<4x8xf32>
    %167 = tpu.concatenate %164, %166 in 1 : vector<4x8xf32>, vector<4x8xf32> -> vector<4x16xf32>
    %c1_56 = arith.constant 1 : index
    %c0_57 = arith.constant 0 : index
    %c0_58 = arith.constant 0 : index
    %168 = vector.load %arg6[%c1_56, %c0_57, %c0_58] : memref<2x80x32xf32, #tpu.memory_space<vmem>>, vector<1x80x32xf32>
    %169 = vector.shape_cast %168 : vector<1x80x32xf32> to vector<80x32xf32>
    %c1_59 = arith.constant 1 : index
    %c0_60 = arith.constant 0 : index
    %c0_61 = arith.constant 0 : index
    %170 = vector.load %arg7[%c1_59, %c0_60, %c0_61] : memref<2x1x32xf32, #tpu.memory_space<vmem>>, vector<1x1x32xf32>
    %171 = vector.shape_cast %170 : vector<1x1x32xf32> to vector<1x32xf32>
    %c1_62 = arith.constant 1 : index
    %c0_63 = arith.constant 0 : index
    %c0_64 = arith.constant 0 : index
    %172 = vector.load %arg8[%c1_62, %c0_63, %c0_64] : memref<2x96x16xf32, #tpu.memory_space<vmem>>, vector<1x96x16xf32>
    %173 = vector.shape_cast %172 : vector<1x96x16xf32> to vector<96x16xf32>
    %c1_65 = arith.constant 1 : index
    %c0_66 = arith.constant 0 : index
    %c0_67 = arith.constant 0 : index
    %174 = vector.load %arg9[%c1_65, %c0_66, %c0_67] : memref<2x1x16xf32, #tpu.memory_space<vmem>>, vector<1x1x16xf32>
    %175 = vector.shape_cast %174 : vector<1x1x16xf32> to vector<1x16xf32>
    %176 = vector.extract_strided_slice %167 {offsets = [0, 0], sizes = [1, 16], strides = [1, 1]} : vector<4x16xf32> to vector<1x16xf32>
    %177 = vector.shape_cast %176 : vector<1x16xf32> to vector<1x16xf32>
    %178 = vector.broadcast %177 : vector<1x16xf32> to vector<3x16xf32>
    %179 = vector.extract_strided_slice %167 {offsets = [3, 0], sizes = [1, 16], strides = [1, 1]} : vector<4x16xf32> to vector<1x16xf32>
    %180 = vector.shape_cast %179 : vector<1x16xf32> to vector<1x16xf32>
    %181 = vector.broadcast %180 : vector<1x16xf32> to vector<3x16xf32>
    %182 = tpu.concatenate %178, %167, %181 in 0 : vector<3x16xf32>, vector<4x16xf32>, vector<3x16xf32> -> vector<10x16xf32>
    %183 = vector.extract_strided_slice %182 {offsets = [0, 0], sizes = [6, 16], strides = [1, 1]} : vector<10x16xf32> to vector<6x16xf32>
    %184 = vector.extract_strided_slice %182 {offsets = [1, 0], sizes = [6, 16], strides = [1, 1]} : vector<10x16xf32> to vector<6x16xf32>
    %185 = vector.extract_strided_slice %182 {offsets = [2, 0], sizes = [6, 16], strides = [1, 1]} : vector<10x16xf32> to vector<6x16xf32>
    %186 = vector.extract_strided_slice %182 {offsets = [3, 0], sizes = [6, 16], strides = [1, 1]} : vector<10x16xf32> to vector<6x16xf32>
    %187 = vector.extract_strided_slice %182 {offsets = [4, 0], sizes = [6, 16], strides = [1, 1]} : vector<10x16xf32> to vector<6x16xf32>
    %188 = tpu.concatenate %183, %184, %185, %186, %187 in 1 : vector<6x16xf32>, vector<6x16xf32>, vector<6x16xf32>, vector<6x16xf32>, vector<6x16xf32> -> vector<6x80xf32>
    %cst_68 = arith.constant dense<0.000000e+00> : vector<6x32xf32>
    %189 = tpu.matmul %188, %169, %cst_68 {dimension_numbers = #tpu.dot_dimension_numbers<[1], [0], [0], [1], [0, 0, 1, 1], [], []>} : vector<6x80xf32>, vector<80x32xf32>, vector<6x32xf32> -> vector<6x32xf32>
    %190 = vector.broadcast %171 : vector<1x32xf32> to vector<6x32xf32>
    %191 = arith.addf %189, %190 : vector<6x32xf32>
    %cst_69 = arith.constant 0.000000e+00 : f32
    %192 = vector.broadcast %cst_69 : f32 to vector<6x32xf32>
    %193 = arith.cmpf ogt, %191, %192 : vector<6x32xf32>
    %cst_70 = arith.constant 0.00999999977 : f32
    %194 = vector.broadcast %cst_70 : f32 to vector<6x32xf32>
    %195 = arith.mulf %194, %191 : vector<6x32xf32>
    %196 = arith.select %193, %191, %195 : vector<6x32xi1>, vector<6x32xf32>
    %197 = vector.extract_strided_slice %196 {offsets = [0, 0], sizes = [4, 32], strides = [1, 1]} : vector<6x32xf32> to vector<4x32xf32>
    %198 = vector.extract_strided_slice %196 {offsets = [1, 0], sizes = [4, 32], strides = [1, 1]} : vector<6x32xf32> to vector<4x32xf32>
    %199 = vector.extract_strided_slice %196 {offsets = [2, 0], sizes = [4, 32], strides = [1, 1]} : vector<6x32xf32> to vector<4x32xf32>
    %200 = tpu.concatenate %197, %198, %199 in 1 : vector<4x32xf32>, vector<4x32xf32>, vector<4x32xf32> -> vector<4x96xf32>
    %cst_71 = arith.constant dense<0.000000e+00> : vector<4x16xf32>
    %201 = tpu.matmul %200, %173, %cst_71 {dimension_numbers = #tpu.dot_dimension_numbers<[1], [0], [0], [1], [0, 0, 1, 1], [], []>} : vector<4x96xf32>, vector<96x16xf32>, vector<4x16xf32> -> vector<4x16xf32>
    %202 = vector.broadcast %175 : vector<1x16xf32> to vector<4x16xf32>
    %203 = arith.addf %201, %202 : vector<4x16xf32>
    %204 = math.tanh %203 : vector<4x16xf32>
    %205 = vector.extract_strided_slice %204 {offsets = [0, 0], sizes = [4, 8], strides = [1, 1]} : vector<4x16xf32> to vector<4x8xf32>
    %206 = arith.addf %166, %205 : vector<4x8xf32>
    %207 = vector.extract_strided_slice %204 {offsets = [0, 8], sizes = [4, 8], strides = [1, 1]} : vector<4x16xf32> to vector<4x8xf32>
    %208 = arith.subf %164, %207 : vector<4x8xf32>
    %209 = vector.extract_strided_slice %206 {offsets = [0, 0], sizes = [4, 4], strides = [1, 1]} : vector<4x8xf32> to vector<4x4xf32>
    %210 = vector.extract_strided_slice %208 {offsets = [0, 0], sizes = [4, 4], strides = [1, 1]} : vector<4x8xf32> to vector<4x4xf32>
    %211 = vector.extract_strided_slice %206 {offsets = [0, 4], sizes = [4, 4], strides = [1, 1]} : vector<4x8xf32> to vector<4x4xf32>
    %212 = vector.extract_strided_slice %208 {offsets = [0, 4], sizes = [4, 4], strides = [1, 1]} : vector<4x8xf32> to vector<4x4xf32>
    %213 = tpu.concatenate %209, %210, %211, %212 in 1 : vector<4x4xf32>, vector<4x4xf32>, vector<4x4xf32>, vector<4x4xf32> -> vector<4x16xf32>
    %214 = tpu.iota {dimensions = array<i32: 0>} : vector<2x4xi32>
    %215 = tpu.iota {dimensions = array<i32: 1>} : vector<2x4xi32>
    %c2_i32_72 = arith.constant 2 : i32
    %216 = vector.broadcast %c2_i32_72 : i32 to vector<2x4xi32>
    %217 = arith.muli %216, %214 : vector<2x4xi32>
    %218 = arith.cmpi eq, %215, %217 : vector<2x4xi32>
    %219 = arith.extui %218 : vector<2x4xi1> to vector<2x4xi32>
    %220 = arith.sitofp %219 : vector<2x4xi32> to vector<2x4xf32>
    %c2_i32_73 = arith.constant 2 : i32
    %221 = vector.broadcast %c2_i32_73 : i32 to vector<2x4xi32>
    %222 = arith.muli %221, %214 : vector<2x4xi32>
    %c1_i32_74 = arith.constant 1 : i32
    %223 = vector.broadcast %c1_i32_74 : i32 to vector<2x4xi32>
    %224 = arith.addi %222, %223 : vector<2x4xi32>
    %c3_i32 = arith.constant 3 : i32
    %225 = vector.broadcast %c3_i32 : i32 to vector<2x4xi32>
    %226 = arith.minsi %224, %225 : vector<2x4xi32>
    %227 = arith.cmpi eq, %215, %226 : vector<2x4xi32>
    %228 = arith.extui %227 : vector<2x4xi1> to vector<2x4xi32>
    %229 = arith.sitofp %228 : vector<2x4xi32> to vector<2x4xf32>
    %cst_75 = arith.constant dense<0.000000e+00> : vector<2x16xf32>
    %230 = tpu.matmul %220, %213, %cst_75 {dimension_numbers = #tpu.dot_dimension_numbers<[1], [0], [0], [1], [0, 0, 1, 1], [], []>} : vector<2x4xf32>, vector<4x16xf32>, vector<2x16xf32> -> vector<2x16xf32>
    %cst_76 = arith.constant dense<0.000000e+00> : vector<2x16xf32>
    %231 = tpu.matmul %229, %213, %cst_76 {dimension_numbers = #tpu.dot_dimension_numbers<[1], [0], [0], [1], [0, 0, 1, 1], [], []>} : vector<2x4xf32>, vector<4x16xf32>, vector<2x16xf32> -> vector<2x16xf32>
    %232 = tpu.concatenate %230, %231 in 1 : vector<2x16xf32>, vector<2x16xf32> -> vector<2x32xf32>
    %c0_77 = arith.constant 0 : index
    %c0_78 = arith.constant 0 : index
    %c0_79 = arith.constant 0 : index
    %233 = vector.load %arg10[%c0_77, %c0_78, %c0_79] : memref<2x160x64xf32, #tpu.memory_space<vmem>>, vector<1x160x64xf32>
    %234 = vector.shape_cast %233 : vector<1x160x64xf32> to vector<160x64xf32>
    %c0_80 = arith.constant 0 : index
    %c0_81 = arith.constant 0 : index
    %c0_82 = arith.constant 0 : index
    %235 = vector.load %arg11[%c0_80, %c0_81, %c0_82] : memref<2x1x64xf32, #tpu.memory_space<vmem>>, vector<1x1x64xf32>
    %236 = vector.shape_cast %235 : vector<1x1x64xf32> to vector<1x64xf32>
    %c0_83 = arith.constant 0 : index
    %c0_84 = arith.constant 0 : index
    %c0_85 = arith.constant 0 : index
    %237 = vector.load %arg12[%c0_83, %c0_84, %c0_85] : memref<2x192x32xf32, #tpu.memory_space<vmem>>, vector<1x192x32xf32>
    %238 = vector.shape_cast %237 : vector<1x192x32xf32> to vector<192x32xf32>
    %c0_86 = arith.constant 0 : index
    %c0_87 = arith.constant 0 : index
    %c0_88 = arith.constant 0 : index
    %239 = vector.load %arg13[%c0_86, %c0_87, %c0_88] : memref<2x1x32xf32, #tpu.memory_space<vmem>>, vector<1x1x32xf32>
    %240 = vector.shape_cast %239 : vector<1x1x32xf32> to vector<1x32xf32>
    %241 = vector.extract_strided_slice %232 {offsets = [0, 0], sizes = [1, 32], strides = [1, 1]} : vector<2x32xf32> to vector<1x32xf32>
    %242 = vector.shape_cast %241 : vector<1x32xf32> to vector<1x32xf32>
    %243 = vector.broadcast %242 : vector<1x32xf32> to vector<3x32xf32>
    %244 = vector.extract_strided_slice %232 {offsets = [1, 0], sizes = [1, 32], strides = [1, 1]} : vector<2x32xf32> to vector<1x32xf32>
    %245 = vector.shape_cast %244 : vector<1x32xf32> to vector<1x32xf32>
    %246 = vector.broadcast %245 : vector<1x32xf32> to vector<3x32xf32>
    %247 = tpu.concatenate %243, %232, %246 in 0 : vector<3x32xf32>, vector<2x32xf32>, vector<3x32xf32> -> vector<8x32xf32>
    %248 = vector.extract_strided_slice %247 {offsets = [0, 0], sizes = [4, 32], strides = [1, 1]} : vector<8x32xf32> to vector<4x32xf32>
    %249 = vector.extract_strided_slice %247 {offsets = [1, 0], sizes = [4, 32], strides = [1, 1]} : vector<8x32xf32> to vector<4x32xf32>
    %250 = vector.extract_strided_slice %247 {offsets = [2, 0], sizes = [4, 32], strides = [1, 1]} : vector<8x32xf32> to vector<4x32xf32>
    %251 = vector.extract_strided_slice %247 {offsets = [3, 0], sizes = [4, 32], strides = [1, 1]} : vector<8x32xf32> to vector<4x32xf32>
    %252 = vector.extract_strided_slice %247 {offsets = [4, 0], sizes = [4, 32], strides = [1, 1]} : vector<8x32xf32> to vector<4x32xf32>
    %253 = tpu.concatenate %248, %249, %250, %251, %252 in 1 : vector<4x32xf32>, vector<4x32xf32>, vector<4x32xf32>, vector<4x32xf32>, vector<4x32xf32> -> vector<4x160xf32>
    %cst_89 = arith.constant dense<0.000000e+00> : vector<4x64xf32>
    %254 = tpu.matmul %253, %234, %cst_89 {dimension_numbers = #tpu.dot_dimension_numbers<[1], [0], [0], [1], [0, 0, 1, 1], [], []>} : vector<4x160xf32>, vector<160x64xf32>, vector<4x64xf32> -> vector<4x64xf32>
    %255 = vector.broadcast %236 : vector<1x64xf32> to vector<4x64xf32>
    %256 = arith.addf %254, %255 : vector<4x64xf32>
    %cst_90 = arith.constant 0.000000e+00 : f32
    %257 = vector.broadcast %cst_90 : f32 to vector<4x64xf32>
    %258 = arith.cmpf ogt, %256, %257 : vector<4x64xf32>
    %cst_91 = arith.constant 0.00999999977 : f32
    %259 = vector.broadcast %cst_91 : f32 to vector<4x64xf32>
    %260 = arith.mulf %259, %256 : vector<4x64xf32>
    %261 = arith.select %258, %256, %260 : vector<4x64xi1>, vector<4x64xf32>
    %262 = vector.extract_strided_slice %261 {offsets = [0, 0], sizes = [2, 64], strides = [1, 1]} : vector<4x64xf32> to vector<2x64xf32>
    %263 = vector.extract_strided_slice %261 {offsets = [1, 0], sizes = [2, 64], strides = [1, 1]} : vector<4x64xf32> to vector<2x64xf32>
    %264 = vector.extract_strided_slice %261 {offsets = [2, 0], sizes = [2, 64], strides = [1, 1]} : vector<4x64xf32> to vector<2x64xf32>
    %265 = tpu.concatenate %262, %263, %264 in 1 : vector<2x64xf32>, vector<2x64xf32>, vector<2x64xf32> -> vector<2x192xf32>
    %cst_92 = arith.constant dense<0.000000e+00> : vector<2x32xf32>
    %266 = tpu.matmul %265, %238, %cst_92 {dimension_numbers = #tpu.dot_dimension_numbers<[1], [0], [0], [1], [0, 0, 1, 1], [], []>} : vector<2x192xf32>, vector<192x32xf32>, vector<2x32xf32> -> vector<2x32xf32>
    %267 = vector.broadcast %240 : vector<1x32xf32> to vector<2x32xf32>
    %268 = arith.addf %266, %267 : vector<2x32xf32>
    %269 = math.tanh %268 : vector<2x32xf32>
    %270 = math.exp %269 : vector<2x32xf32>
    %271 = vector.extract_strided_slice %270 {offsets = [0, 0], sizes = [2, 16], strides = [1, 1]} : vector<2x32xf32> to vector<2x16xf32>
    %272 = arith.mulf %231, %271 : vector<2x16xf32>
    %273 = vector.extract_strided_slice %270 {offsets = [0, 16], sizes = [2, 16], strides = [1, 1]} : vector<2x32xf32> to vector<2x16xf32>
    %274 = arith.mulf %230, %273 : vector<2x16xf32>
    %275 = tpu.concatenate %272, %274 in 1 : vector<2x16xf32>, vector<2x16xf32> -> vector<2x32xf32>
    %c1_93 = arith.constant 1 : index
    %c0_94 = arith.constant 0 : index
    %c0_95 = arith.constant 0 : index
    %276 = vector.load %arg10[%c1_93, %c0_94, %c0_95] : memref<2x160x64xf32, #tpu.memory_space<vmem>>, vector<1x160x64xf32>
    %277 = vector.shape_cast %276 : vector<1x160x64xf32> to vector<160x64xf32>
    %c1_96 = arith.constant 1 : index
    %c0_97 = arith.constant 0 : index
    %c0_98 = arith.constant 0 : index
    %278 = vector.load %arg11[%c1_96, %c0_97, %c0_98] : memref<2x1x64xf32, #tpu.memory_space<vmem>>, vector<1x1x64xf32>
    %279 = vector.shape_cast %278 : vector<1x1x64xf32> to vector<1x64xf32>
    %c1_99 = arith.constant 1 : index
    %c0_100 = arith.constant 0 : index
    %c0_101 = arith.constant 0 : index
    %280 = vector.load %arg12[%c1_99, %c0_100, %c0_101] : memref<2x192x32xf32, #tpu.memory_space<vmem>>, vector<1x192x32xf32>
    %281 = vector.shape_cast %280 : vector<1x192x32xf32> to vector<192x32xf32>
    %c1_102 = arith.constant 1 : index
    %c0_103 = arith.constant 0 : index
    %c0_104 = arith.constant 0 : index
    %282 = vector.load %arg13[%c1_102, %c0_103, %c0_104] : memref<2x1x32xf32, #tpu.memory_space<vmem>>, vector<1x1x32xf32>
    %283 = vector.shape_cast %282 : vector<1x1x32xf32> to vector<1x32xf32>
    %284 = vector.extract_strided_slice %275 {offsets = [0, 0], sizes = [1, 32], strides = [1, 1]} : vector<2x32xf32> to vector<1x32xf32>
    %285 = vector.shape_cast %284 : vector<1x32xf32> to vector<1x32xf32>
    %286 = vector.broadcast %285 : vector<1x32xf32> to vector<3x32xf32>
    %287 = vector.extract_strided_slice %275 {offsets = [1, 0], sizes = [1, 32], strides = [1, 1]} : vector<2x32xf32> to vector<1x32xf32>
    %288 = vector.shape_cast %287 : vector<1x32xf32> to vector<1x32xf32>
    %289 = vector.broadcast %288 : vector<1x32xf32> to vector<3x32xf32>
    %290 = tpu.concatenate %286, %275, %289 in 0 : vector<3x32xf32>, vector<2x32xf32>, vector<3x32xf32> -> vector<8x32xf32>
    %291 = vector.extract_strided_slice %290 {offsets = [0, 0], sizes = [4, 32], strides = [1, 1]} : vector<8x32xf32> to vector<4x32xf32>
    %292 = vector.extract_strided_slice %290 {offsets = [1, 0], sizes = [4, 32], strides = [1, 1]} : vector<8x32xf32> to vector<4x32xf32>
    %293 = vector.extract_strided_slice %290 {offsets = [2, 0], sizes = [4, 32], strides = [1, 1]} : vector<8x32xf32> to vector<4x32xf32>
    %294 = vector.extract_strided_slice %290 {offsets = [3, 0], sizes = [4, 32], strides = [1, 1]} : vector<8x32xf32> to vector<4x32xf32>
    %295 = vector.extract_strided_slice %290 {offsets = [4, 0], sizes = [4, 32], strides = [1, 1]} : vector<8x32xf32> to vector<4x32xf32>
    %296 = tpu.concatenate %291, %292, %293, %294, %295 in 1 : vector<4x32xf32>, vector<4x32xf32>, vector<4x32xf32>, vector<4x32xf32>, vector<4x32xf32> -> vector<4x160xf32>
    %cst_105 = arith.constant dense<0.000000e+00> : vector<4x64xf32>
    %297 = tpu.matmul %296, %277, %cst_105 {dimension_numbers = #tpu.dot_dimension_numbers<[1], [0], [0], [1], [0, 0, 1, 1], [], []>} : vector<4x160xf32>, vector<160x64xf32>, vector<4x64xf32> -> vector<4x64xf32>
    %298 = vector.broadcast %279 : vector<1x64xf32> to vector<4x64xf32>
    %299 = arith.addf %297, %298 : vector<4x64xf32>
    %cst_106 = arith.constant 0.000000e+00 : f32
    %300 = vector.broadcast %cst_106 : f32 to vector<4x64xf32>
    %301 = arith.cmpf ogt, %299, %300 : vector<4x64xf32>
    %cst_107 = arith.constant 0.00999999977 : f32
    %302 = vector.broadcast %cst_107 : f32 to vector<4x64xf32>
    %303 = arith.mulf %302, %299 : vector<4x64xf32>
    %304 = arith.select %301, %299, %303 : vector<4x64xi1>, vector<4x64xf32>
    %305 = vector.extract_strided_slice %304 {offsets = [0, 0], sizes = [2, 64], strides = [1, 1]} : vector<4x64xf32> to vector<2x64xf32>
    %306 = vector.extract_strided_slice %304 {offsets = [1, 0], sizes = [2, 64], strides = [1, 1]} : vector<4x64xf32> to vector<2x64xf32>
    %307 = vector.extract_strided_slice %304 {offsets = [2, 0], sizes = [2, 64], strides = [1, 1]} : vector<4x64xf32> to vector<2x64xf32>
    %308 = tpu.concatenate %305, %306, %307 in 1 : vector<2x64xf32>, vector<2x64xf32>, vector<2x64xf32> -> vector<2x192xf32>
    %cst_108 = arith.constant dense<0.000000e+00> : vector<2x32xf32>
    %309 = tpu.matmul %308, %281, %cst_108 {dimension_numbers = #tpu.dot_dimension_numbers<[1], [0], [0], [1], [0, 0, 1, 1], [], []>} : vector<2x192xf32>, vector<192x32xf32>, vector<2x32xf32> -> vector<2x32xf32>
    %310 = vector.broadcast %283 : vector<1x32xf32> to vector<2x32xf32>
    %311 = arith.addf %309, %310 : vector<2x32xf32>
    %312 = math.tanh %311 : vector<2x32xf32>
    %313 = vector.extract_strided_slice %312 {offsets = [0, 0], sizes = [2, 16], strides = [1, 1]} : vector<2x32xf32> to vector<2x16xf32>
    %314 = arith.addf %274, %313 : vector<2x16xf32>
    %315 = vector.extract_strided_slice %312 {offsets = [0, 16], sizes = [2, 16], strides = [1, 1]} : vector<2x32xf32> to vector<2x16xf32>
    %316 = arith.subf %272, %315 : vector<2x16xf32>
    %317 = vector.extract_strided_slice %314 {offsets = [0, 0], sizes = [2, 4], strides = [1, 1]} : vector<2x16xf32> to vector<2x4xf32>
    %c0_109 = arith.constant 0 : index
    %c0_110 = arith.constant 0 : index
    %c0_111 = arith.constant 0 : index
    %318 = vector.load %arg14[%c0_109, %c0_110, %c0_111] : memref<1x16x4xf32, #tpu.memory_space<vmem>>, vector<1x2x4xf32>
    %319 = vector.shape_cast %318 : vector<1x2x4xf32> to vector<2x4xf32>
    %320 = vector.shape_cast %317 : vector<2x4xf32> to vector<1x2x4xf32>
    tpu.vector_store %arg14[%c0_109, %c0_110, %c0_111], %320 {strides = array<i32>} : memref<1x16x4xf32, #tpu.memory_space<vmem>>, vector<1x2x4xf32>,
    %321 = vector.extract_strided_slice %316 {offsets = [0, 0], sizes = [2, 4], strides = [1, 1]} : vector<2x16xf32> to vector<2x4xf32>
    %c0_112 = arith.constant 0 : index
    %c2 = arith.constant 2 : index
    %c0_113 = arith.constant 0 : index
    %322 = vector.load %arg14[%c0_112, %c2, %c0_113] : memref<1x16x4xf32, #tpu.memory_space<vmem>>, vector<1x2x4xf32>
    %323 = vector.shape_cast %322 : vector<1x2x4xf32> to vector<2x4xf32>
    %324 = vector.shape_cast %321 : vector<2x4xf32> to vector<1x2x4xf32>
    tpu.vector_store %arg14[%c0_112, %c2, %c0_113], %324 {strides = array<i32>} : memref<1x16x4xf32, #tpu.memory_space<vmem>>, vector<1x2x4xf32>,
    %325 = vector.extract_strided_slice %314 {offsets = [0, 4], sizes = [2, 4], strides = [1, 1]} : vector<2x16xf32> to vector<2x4xf32>
    %c0_114 = arith.constant 0 : index
    %c4 = arith.constant 4 : index
    %c0_115 = arith.constant 0 : index
    %326 = vector.load %arg14[%c0_114, %c4, %c0_115] : memref<1x16x4xf32, #tpu.memory_space<vmem>>, vector<1x2x4xf32>
    %327 = vector.shape_cast %326 : vector<1x2x4xf32> to vector<2x4xf32>
    %328 = vector.shape_cast %325 : vector<2x4xf32> to vector<1x2x4xf32>
    tpu.vector_store %arg14[%c0_114, %c4, %c0_115], %328 {strides = array<i32>} : memref<1x16x4xf32, #tpu.memory_space<vmem>>, vector<1x2x4xf32>,
    %329 = vector.extract_strided_slice %316 {offsets = [0, 4], sizes = [2, 4], strides = [1, 1]} : vector<2x16xf32> to vector<2x4xf32>
    %c0_116 = arith.constant 0 : index
    %c6 = arith.constant 6 : index
    %c0_117 = arith.constant 0 : index
    %330 = vector.load %arg14[%c0_116, %c6, %c0_117] : memref<1x16x4xf32, #tpu.memory_space<vmem>>, vector<1x2x4xf32>
    %331 = vector.shape_cast %330 : vector<1x2x4xf32> to vector<2x4xf32>
    %332 = vector.shape_cast %329 : vector<2x4xf32> to vector<1x2x4xf32>
    tpu.vector_store %arg14[%c0_116, %c6, %c0_117], %332 {strides = array<i32>} : memref<1x16x4xf32, #tpu.memory_space<vmem>>, vector<1x2x4xf32>,
    %333 = vector.extract_strided_slice %314 {offsets = [0, 8], sizes = [2, 4], strides = [1, 1]} : vector<2x16xf32> to vector<2x4xf32>
    %c0_118 = arith.constant 0 : index
    %c8 = arith.constant 8 : index
    %c0_119 = arith.constant 0 : index
    %334 = vector.load %arg14[%c0_118, %c8, %c0_119] : memref<1x16x4xf32, #tpu.memory_space<vmem>>, vector<1x2x4xf32>
    %335 = vector.shape_cast %334 : vector<1x2x4xf32> to vector<2x4xf32>
    %336 = vector.shape_cast %333 : vector<2x4xf32> to vector<1x2x4xf32>
    tpu.vector_store %arg14[%c0_118, %c8, %c0_119], %336 {strides = array<i32>} : memref<1x16x4xf32, #tpu.memory_space<vmem>>, vector<1x2x4xf32>,
    %337 = vector.extract_strided_slice %316 {offsets = [0, 8], sizes = [2, 4], strides = [1, 1]} : vector<2x16xf32> to vector<2x4xf32>
    %c0_120 = arith.constant 0 : index
    %c10 = arith.constant 10 : index
    %c0_121 = arith.constant 0 : index
    %338 = vector.load %arg14[%c0_120, %c10, %c0_121] : memref<1x16x4xf32, #tpu.memory_space<vmem>>, vector<1x2x4xf32>
    %339 = vector.shape_cast %338 : vector<1x2x4xf32> to vector<2x4xf32>
    %340 = vector.shape_cast %337 : vector<2x4xf32> to vector<1x2x4xf32>
    tpu.vector_store %arg14[%c0_120, %c10, %c0_121], %340 {strides = array<i32>} : memref<1x16x4xf32, #tpu.memory_space<vmem>>, vector<1x2x4xf32>,
    %341 = vector.extract_strided_slice %314 {offsets = [0, 12], sizes = [2, 4], strides = [1, 1]} : vector<2x16xf32> to vector<2x4xf32>
    %c0_122 = arith.constant 0 : index
    %c12 = arith.constant 12 : index
    %c0_123 = arith.constant 0 : index
    %342 = vector.load %arg14[%c0_122, %c12, %c0_123] : memref<1x16x4xf32, #tpu.memory_space<vmem>>, vector<1x2x4xf32>
    %343 = vector.shape_cast %342 : vector<1x2x4xf32> to vector<2x4xf32>
    %344 = vector.shape_cast %341 : vector<2x4xf32> to vector<1x2x4xf32>
    tpu.vector_store %arg14[%c0_122, %c12, %c0_123], %344 {strides = array<i32>} : memref<1x16x4xf32, #tpu.memory_space<vmem>>, vector<1x2x4xf32>,
    %345 = vector.extract_strided_slice %316 {offsets = [0, 12], sizes = [2, 4], strides = [1, 1]} : vector<2x16xf32> to vector<2x4xf32>
    %c0_124 = arith.constant 0 : index
    %c14 = arith.constant 14 : index
    %c0_125 = arith.constant 0 : index
    %346 = vector.load %arg14[%c0_124, %c14, %c0_125] : memref<1x16x4xf32, #tpu.memory_space<vmem>>, vector<1x2x4xf32>
    %347 = vector.shape_cast %346 : vector<1x2x4xf32> to vector<2x4xf32>
    %348 = vector.shape_cast %345 : vector<2x4xf32> to vector<1x2x4xf32>
    tpu.vector_store %arg14[%c0_124, %c14, %c0_125], %348 {strides = array<i32>} : memref<1x16x4xf32, #tpu.memory_space<vmem>>, vector<1x2x4xf32>,
    return
  }
  func.func @transform_0(%arg0: i32) -> (i32, i32, i32) {
    %c0_i32 = arith.constant 0 : i32
    %c0_i32_0 = arith.constant 0 : i32
    %c0_i32_1 = arith.constant 0 : i32
    return %arg0, %c0_i32, %c0_i32_0 : i32, i32, i32
  }
  func.func @transform_1(%arg0: i32) -> (i32, i32, i32) {
    %c0_i32 = arith.constant 0 : i32
    %c0_i32_0 = arith.constant 0 : i32
    %c0_i32_1 = arith.constant 0 : i32
    %c0_i32_2 = arith.constant 0 : i32
    return %c0_i32, %c0_i32_0, %c0_i32_1 : i32, i32, i32
  }
  func.func @transform_2(%arg0: i32) -> (i32, i32, i32) {
    %c0_i32 = arith.constant 0 : i32
    %c0_i32_0 = arith.constant 0 : i32
    %c0_i32_1 = arith.constant 0 : i32
    %c0_i32_2 = arith.constant 0 : i32
    return %c0_i32, %c0_i32_0, %c0_i32_1 : i32, i32, i32
  }
  func.func @transform_3(%arg0: i32) -> (i32, i32, i32) {
    %c0_i32 = arith.constant 0 : i32
    %c0_i32_0 = arith.constant 0 : i32
    %c0_i32_1 = arith.constant 0 : i32
    %c0_i32_2 = arith.constant 0 : i32
    return %c0_i32, %c0_i32_0, %c0_i32_1 : i32, i32, i32
  }
  func.func @transform_4(%arg0: i32) -> (i32, i32, i32) {
    %c0_i32 = arith.constant 0 : i32
    %c0_i32_0 = arith.constant 0 : i32
    %c0_i32_1 = arith.constant 0 : i32
    %c0_i32_2 = arith.constant 0 : i32
    return %c0_i32, %c0_i32_0, %c0_i32_1 : i32, i32, i32
  }
  func.func @transform_5(%arg0: i32) -> (i32, i32, i32) {
    %c0_i32 = arith.constant 0 : i32
    %c0_i32_0 = arith.constant 0 : i32
    %c0_i32_1 = arith.constant 0 : i32
    %c0_i32_2 = arith.constant 0 : i32
    return %c0_i32, %c0_i32_0, %c0_i32_1 : i32, i32, i32
  }
  func.func @transform_6(%arg0: i32) -> (i32, i32, i32) {
    %c0_i32 = arith.constant 0 : i32
    %c0_i32_0 = arith.constant 0 : i32
    %c0_i32_1 = arith.constant 0 : i32
    %c0_i32_2 = arith.constant 0 : i32
    return %c0_i32, %c0_i32_0, %c0_i32_1 : i32, i32, i32
  }
  func.func @transform_7(%arg0: i32) -> (i32, i32, i32) {
    %c0_i32 = arith.constant 0 : i32
    %c0_i32_0 = arith.constant 0 : i32
    %c0_i32_1 = arith.constant 0 : i32
    %c0_i32_2 = arith.constant 0 : i32
    return %c0_i32, %c0_i32_0, %c0_i32_1 : i32, i32, i32
  }
  func.func @transform_8(%arg0: i32) -> (i32, i32, i32) {
    %c0_i32 = arith.constant 0 : i32
    %c0_i32_0 = arith.constant 0 : i32
    %c0_i32_1 = arith.constant 0 : i32
    %c0_i32_2 = arith.constant 0 : i32
    return %c0_i32, %c0_i32_0, %c0_i32_1 : i32, i32, i32
  }
  func.func @transform_9(%arg0: i32) -> (i32, i32, i32) {
    %c0_i32 = arith.constant 0 : i32
    %c0_i32_0 = arith.constant 0 : i32
    %c0_i32_1 = arith.constant 0 : i32
    %c0_i32_2 = arith.constant 0 : i32
    return %c0_i32, %c0_i32_0, %c0_i32_1 : i32, i32, i32
  }
  func.func @transform_10(%arg0: i32) -> (i32, i32, i32) {
    %c0_i32 = arith.constant 0 : i32
    %c0_i32_0 = arith.constant 0 : i32
    %c0_i32_1 = arith.constant 0 : i32
    %c0_i32_2 = arith.constant 0 : i32
    return %c0_i32, %c0_i32_0, %c0_i32_1 : i32, i32, i32
  }
  func.func @transform_11(%arg0: i32) -> (i32, i32, i32) {
    %c0_i32 = arith.constant 0 : i32
    %c0_i32_0 = arith.constant 0 : i32
    %c0_i32_1 = arith.constant 0 : i32
    %c0_i32_2 = arith.constant 0 : i32
    return %c0_i32, %c0_i32_0, %c0_i32_1 : i32, i32, i32
  }
  func.func @transform_12(%arg0: i32) -> (i32, i32, i32) {
    %c0_i32 = arith.constant 0 : i32
    %c0_i32_0 = arith.constant 0 : i32
    %c0_i32_1 = arith.constant 0 : i32
    %c0_i32_2 = arith.constant 0 : i32
    return %c0_i32, %c0_i32_0, %c0_i32_1 : i32, i32, i32
  }
  func.func @transform_13(%arg0: i32) -> (i32, i32, i32) {
    %c0_i32 = arith.constant 0 : i32
    %c0_i32_0 = arith.constant 0 : i32
    %c0_i32_1 = arith.constant 0 : i32
    return %arg0, %c0_i32, %c0_i32_0 : i32, i32, i32
  }
}

</mosaic_0001>

<llo_original>
// kernel: scinet_tree_forward.1
$region0: #{scinet_tree_forward.1}
  #allocation0 [shape = 'u32[]', space=smem, size = 0x4, offset = 0x4, fixed_abs, tag = 'smem constant byte address 0x4 - core index']
  #allocation1 [shape = 'u32[144,128]{1,0:T(1,128)}', space=vmem, size = 0x12000, scoped, tag = 'internal scratch']
  %s0 = inlined_call_operand.vmem [shape: f32[2,16,4], index: 0, kind: input, shape index: {}]
  %s1 = inlined_call_operand.vmem [shape: f32[2,40,16], index: 1, kind: input, shape index: {}]
  %s2 = inlined_call_operand.vmem [shape: f32[2,1,16], index: 2, kind: input, shape index: {}]
  %s3 = inlined_call_operand.vmem [shape: f32[2,48,8], index: 3, kind: input, shape index: {}]
  %s4 = inlined_call_operand.vmem [shape: f32[2,1,8], index: 4, kind: input, shape index: {}]
  %s5 = inlined_call_operand.vmem [shape: f32[2,80,32], index: 5, kind: input, shape index: {}]
  %s6 = inlined_call_operand.vmem [shape: f32[2,1,32], index: 6, kind: input, shape index: {}]
  %s7 = inlined_call_operand.vmem [shape: f32[2,96,16], index: 7, kind: input, shape index: {}]
  %s8 = inlined_call_operand.vmem [shape: f32[2,1,16], index: 8, kind: input, shape index: {}]
  %s9 = inlined_call_operand.vmem [shape: f32[2,160,64], index: 9, kind: input, shape index: {}]
  %s10 = inlined_call_operand.vmem [shape: f32[2,1,64], index: 10, kind: input, shape index: {}]
  %s11 = inlined_call_operand.vmem [shape: f32[2,192,32], index: 11, kind: input, shape index: {}]
  %s12 = inlined_call_operand.vmem [shape: f32[2,1,32], index: 12, kind: input, shape index: {}]
  %s13 = inlined_call_operand.vmem [shape: f32[2,16,4], index: 13, kind: output, shape index: {}]
  %s14 = sld [smem:[#allocation0]]
  $region85: #{scinet_tree_forward.1} parent=0
    _
  %s16 = ssub.s32 1, %s14
  %s17 = scalar_select 0, %s16, %s14
  loop: start=0, step=1, limit=4
  $region2: #{scinet_tree_forward.1} parent=0 // loop_pre_header
    _
  $region3: #{scinet_tree_forward.1} parent=0 // loop_header
    %s19 = sphi 0, %s23
    %p20 = scmp.ge.s32.totalorder %s19, 4
    %s29 = sphi 0, %s31
    %s32 = sphi 0, %s29
    %s33 = sphi 0, %s32
    %s49 = sphi 0, %s33
    %s53 = sphi 0, %s53
    %s55 = sphi 0, %s53
    %s56 = sphi 0, %s55
    %s70 = sphi 0, %s56
    %s74 = sphi 0, %s74
    %s76 = sphi 0, %s74
    %s77 = sphi 0, %s76
    %s91 = sphi 0, %s77
    %s95 = sphi 0, %s95
    %s97 = sphi 0, %s95
    %s98 = sphi 0, %s97
    %s112 = sphi 0, %s98
    %s116 = sphi 0, %s116
    %s118 = sphi 0, %s116
    %s119 = sphi 0, %s118
    %s133 = sphi 0, %s119
    %s137 = sphi 0, %s137
    %s139 = sphi 0, %s137
    %s140 = sphi 0, %s139
    %s154 = sphi 0, %s140
    %s158 = sphi 0, %s158
    %s160 = sphi 0, %s158
    %s161 = sphi 0, %s160
    %s175 = sphi 0, %s161
    %s179 = sphi 0, %s179
    %s181 = sphi 0, %s179
    %s182 = sphi 0, %s181
    %s196 = sphi 0, %s182
    %s200 = sphi 0, %s200
    %s202 = sphi 0, %s200
    %s203 = sphi 0, %s202
    %s217 = sphi 0, %s203
    %s221 = sphi 0, %s221
    %s223 = sphi 0, %s221
    %s224 = sphi 0, %s223
    %s238 = sphi 0, %s224
    %s242 = sphi 0, %s242
    %s244 = sphi 0, %s242
    %s245 = sphi 0, %s244
    %s259 = sphi 0, %s245
    %s263 = sphi 0, %s263
    %s265 = sphi 0, %s263
    %s266 = sphi 0, %s265
    %s280 = sphi 0, %s266
    %s284 = sphi 0, %s284
    %s286 = sphi 0, %s284
    %s287 = sphi 0, %s286
    %s301 = sphi 0, %s287
    %s307 = sphi 0, %s309
    %s310 = sphi 0, %s307
    %s311 = sphi 0, %s310
    %s327 = sphi 0, %s311
  $region4: #{scinet_tree_forward.1} parent=0 // loop_header_branch
    %22 = sbr.rel (%p20) target = $region8
  $region5: #{scinet_tree_forward.1} parent=0 // loop_body
    %s24 = ssub.s32 %s19, 1
    %s25 = ssub.s32 %s19, 2
    %s26 = sadd.s32 %s19, 1
    %s27 = ssub.s32 %s19, %s26
    %p28 = scmp.eq.s32.totalorder %s27, 0
    %s30 = sadd.s32 %s29, 1
    %s31 = scalar_select %p28, %s29, %s30
    %p34 = pneg %p28
    %p35 = scmp.eq.s32.totalorder %s19, 1
    %p36 = por %p34, %p35
    %p37 = scmp.ne.s32.totalorder %s29, %s32
    %p38 = scmp.eq.s32.totalorder %s19, 0
    %p39 = por %p37, %p38
    %p40 = scmp.ne.s32.totalorder %s29, %s32
    %p41 = scmp.eq.s32.totalorder %s24, 1
    %p42 = por %p40, %p41
    %p43 = scmp.ne.s32.totalorder %s32, %s33
    %p44 = scmp.eq.s32.totalorder %s24, 0
    %p45 = por %p43, %p44
    %p46 = scmp.ne.s32.totalorder %s32, %s33
    %p47 = scmp.eq.s32.totalorder %s25, 1
    %p48 = por %p46, %p47
    %p50 = scmp.ne.s32.totalorder %s33, %s49
    %p51 = scmp.eq.s32.totalorder %s25, 0
    %p52 = por %p50, %p51
    %s54 = sadd.s32 %s53, 1
    %p57 = scmp.eq.s32.totalorder %s19, 1
    %p58 = scmp.ne.s32.totalorder %s53, %s55
    %p59 = scmp.eq.s32.totalorder %s19, 0
    %p60 = por %p58, %p59
    %p61 = scmp.ne.s32.totalorder %s53, %s55
    %p62 = scmp.eq.s32.totalorder %s24, 1
    %p63 = por %p61, %p62
    %p64 = scmp.ne.s32.totalorder %s55, %s56
    %p65 = scmp.eq.s32.totalorder %s24, 0
    %p66 = por %p64, %p65
    %p67 = scmp.ne.s32.totalorder %s55, %s56
    %p68 = scmp.eq.s32.totalorder %s25, 1
    %p69 = por %p67, %p68
    %p71 = scmp.ne.s32.totalorder %s56, %s70
    %p72 = scmp.eq.s32.totalorder %s25, 0
    %p73 = por %p71, %p72
    %s75 = sadd.s32 %s74, 1
    %p78 = scmp.eq.s32.totalorder %s19, 1
    %p79 = scmp.ne.s32.totalorder %s74, %s76
    %p80 = scmp.eq.s32.totalorder %s19, 0
    %p81 = por %p79, %p80
    %p82 = scmp.ne.s32.totalorder %s74, %s76
    %p83 = scmp.eq.s32.totalorder %s24, 1
    %p84 = por %p82, %p83
    %p85 = scmp.ne.s32.totalorder %s76, %s77
    %p86 = scmp.eq.s32.totalorder %s24, 0
    %p87 = por %p85, %p86
    %p88 = scmp.ne.s32.totalorder %s76, %s77
    %p89 = scmp.eq.s32.totalorder %s25, 1
    %p90 = por %p88, %p89
    %p92 = scmp.ne.s32.totalorder %s77, %s91
    %p93 = scmp.eq.s32.totalorder %s25, 0
    %p94 = por %p92, %p93
    %s96 = sadd.s32 %s95, 1
    %p99 = scmp.eq.s32.totalorder %s19, 1
    %p100 = scmp.ne.s32.totalorder %s95, %s97
    %p101 = scmp.eq.s32.totalorder %s19, 0
    %p102 = por %p100, %p101
    %p103 = scmp.ne.s32.totalorder %s95, %s97
    %p104 = scmp.eq.s32.totalorder %s24, 1
    %p105 = por %p103, %p104
    %p106 = scmp.ne.s32.totalorder %s97, %s98
    %p107 = scmp.eq.s32.totalorder %s24, 0
    %p108 = por %p106, %p107
    %p109 = scmp.ne.s32.totalorder %s97, %s98
    %p110 = scmp.eq.s32.totalorder %s25, 1
    %p111 = por %p109, %p110
    %p113 = scmp.ne.s32.totalorder %s98, %s112
    %p114 = scmp.eq.s32.totalorder %s25, 0
    %p115 = por %p113, %p114
    %s117 = sadd.s32 %s116, 1
    %p120 = scmp.eq.s32.totalorder %s19, 1
    %p121 = scmp.ne.s32.totalorder %s116, %s118
    %p122 = scmp.eq.s32.totalorder %s19, 0
    %p123 = por %p121, %p122
    %p124 = scmp.ne.s32.totalorder %s116, %s118
    %p125 = scmp.eq.s32.totalorder %s24, 1
    %p126 = por %p124, %p125
    %p127 = scmp.ne.s32.totalorder %s118, %s119
    %p128 = scmp.eq.s32.totalorder %s24, 0
    %p129 = por %p127, %p128
    %p130 = scmp.ne.s32.totalorder %s118, %s119
    %p131 = scmp.eq.s32.totalorder %s25, 1
    %p132 = por %p130, %p131
    %p134 = scmp.ne.s32.totalorder %s119, %s133
    %p135 = scmp.eq.s32.totalorder %s25, 0
    %p136 = por %p134, %p135
    %s138 = sadd.s32 %s137, 1
    %p141 = scmp.eq.s32.totalorder %s19, 1
    %p142 = scmp.ne.s32.totalorder %s137, %s139
    %p143 = scmp.eq.s32.totalorder %s19, 0
    %p144 = por %p142, %p143
    %p145 = scmp.ne.s32.totalorder %s137, %s139
    %p146 = scmp.eq.s32.totalorder %s24, 1
    %p147 = por %p145, %p146
    %p148 = scmp.ne.s32.totalorder %s139, %s140
    %p149 = scmp.eq.s32.totalorder %s24, 0
    %p150 = por %p148, %p149
    %p151 = scmp.ne.s32.totalorder %s139, %s140
    %p152 = scmp.eq.s32.totalorder %s25, 1
    %p153 = por %p151, %p152
    %p155 = scmp.ne.s32.totalorder %s140, %s154
    %p156 = scmp.eq.s32.totalorder %s25, 0
    %p157 = por %p155, %p156
    %s159 = sadd.s32 %s158, 1
    %p162 = scmp.eq.s32.totalorder %s19, 1
    %p163 = scmp.ne.s32.totalorder %s158, %s160
    %p164 = scmp.eq.s32.totalorder %s19, 0
    %p165 = por %p163, %p164
    %p166 = scmp.ne.s32.totalorder %s158, %s160
    %p167 = scmp.eq.s32.totalorder %s24, 1
    %p168 = por %p166, %p167
    %p169 = scmp.ne.s32.totalorder %s160, %s161
    %p170 = scmp.eq.s32.totalorder %s24, 0
    %p171 = por %p169, %p170
    %p172 = scmp.ne.s32.totalorder %s160, %s161
    %p173 = scmp.eq.s32.totalorder %s25, 1
    %p174 = por %p172, %p173
    %p176 = scmp.ne.s32.totalorder %s161, %s175
    %p177 = scmp.eq.s32.totalorder %s25, 0
    %p178 = por %p176, %p177
    %s180 = sadd.s32 %s179, 1
    %p183 = scmp.eq.s32.totalorder %s19, 1
    %p184 = scmp.ne.s32.totalorder %s179, %s181
    %p185 = scmp.eq.s32.totalorder %s19, 0
    %p186 = por %p184, %p185
    %p187 = scmp.ne.s32.totalorder %s179, %s181
    %p188 = scmp.eq.s32.totalorder %s24, 1
    %p189 = por %p187, %p188
    %p190 = scmp.ne.s32.totalorder %s181, %s182
    %p191 = scmp.eq.s32.totalorder %s24, 0
    %p192 = por %p190, %p191
    %p193 = scmp.ne.s32.totalorder %s181, %s182
    %p194 = scmp.eq.s32.totalorder %s25, 1
    %p195 = por %p193, %p194
    %p197 = scmp.ne.s32.totalorder %s182, %s196
    %p198 = scmp.eq.s32.totalorder %s25, 0
    %p199 = por %p197, %p198
    %s201 = sadd.s32 %s200, 1
    %p204 = scmp.eq.s32.totalorder %s19, 1
    %p205 = scmp.ne.s32.totalorder %s200, %s202
    %p206 = scmp.eq.s32.totalorder %s19, 0
    %p207 = por %p205, %p206
    %p208 = scmp.ne.s32.totalorder %s200, %s202
    %p209 = scmp.eq.s32.totalorder %s24, 1
    %p210 = por %p208, %p209
    %p211 = scmp.ne.s32.totalorder %s202, %s203
    %p212 = scmp.eq.s32.totalorder %s24, 0
    %p213 = por %p211, %p212
    %p214 = scmp.ne.s32.totalorder %s202, %s203
    %p215 = scmp.eq.s32.totalorder %s25, 1
    %p216 = por %p214, %p215
    %p218 = scmp.ne.s32.totalorder %s203, %s217
    %p219 = scmp.eq.s32.totalorder %s25, 0
    %p220 = por %p218, %p219
    %s222 = sadd.s32 %s221, 1
    %p225 = scmp.eq.s32.totalorder %s19, 1
    %p226 = scmp.ne.s32.totalorder %s221, %s223
    %p227 = scmp.eq.s32.totalorder %s19, 0
    %p228 = por %p226, %p227
    %p229 = scmp.ne.s32.totalorder %s221, %s223
    %p230 = scmp.eq.s32.totalorder %s24, 1
    %p231 = por %p229, %p230
    %p232 = scmp.ne.s32.totalorder %s223, %s224
    %p233 = scmp.eq.s32.totalorder %s24, 0
    %p234 = por %p232, %p233
    %p235 = scmp.ne.s32.totalorder %s223, %s224
    %p236 = scmp.eq.s32.totalorder %s25, 1
    %p237 = por %p235, %p236
    %p239 = scmp.ne.s32.totalorder %s224, %s238
    %p240 = scmp.eq.s32.totalorder %s25, 0
    %p241 = por %p239, %p240
    %s243 = sadd.s32 %s242, 1
    %p246 = scmp.eq.s32.totalorder %s19, 1
    %p247 = scmp.ne.s32.totalorder %s242, %s244
    %p248 = scmp.eq.s32.totalorder %s19, 0
    %p249 = por %p247, %p248
    %p250 = scmp.ne.s32.totalorder %s242, %s244
    %p251 = scmp.eq.s32.totalorder %s24, 1
    %p252 = por %p250, %p251
    %p253 = scmp.ne.s32.totalorder %s244, %s245
    %p254 = scmp.eq.s32.totalorder %s24, 0
    %p255 = por %p253, %p254
    %p256 = scmp.ne.s32.totalorder %s244, %s245
    %p257 = scmp.eq.s32.totalorder %s25, 1
    %p258 = por %p256, %p257
    %p260 = scmp.ne.s32.totalorder %s245, %s259
    %p261 = scmp.eq.s32.totalorder %s25, 0
    %p262 = por %p260, %p261
    %s264 = sadd.s32 %s263, 1
    %p267 = scmp.eq.s32.totalorder %s19, 1
    %p268 = scmp.ne.s32.totalorder %s263, %s265
    %p269 = scmp.eq.s32.totalorder %s19, 0
    %p270 = por %p268, %p269
    %p271 = scmp.ne.s32.totalorder %s263, %s265
    %p272 = scmp.eq.s32.totalorder %s24, 1
    %p273 = por %p271, %p272
    %p274 = scmp.ne.s32.totalorder %s265, %s266
    %p275 = scmp.eq.s32.totalorder %s24, 0
    %p276 = por %p274, %p275
    %p277 = scmp.ne.s32.totalorder %s265, %s266
    %p278 = scmp.eq.s32.totalorder %s25, 1
    %p279 = por %p277, %p278
    %p281 = scmp.ne.s32.totalorder %s266, %s280
    %p282 = scmp.eq.s32.totalorder %s25, 0
    %p283 = por %p281, %p282
    %s285 = sadd.s32 %s284, 1
    %p288 = scmp.eq.s32.totalorder %s19, 1
    %p289 = scmp.ne.s32.totalorder %s284, %s286
    %p290 = scmp.eq.s32.totalorder %s19, 0
    %p291 = por %p289, %p290
    %p292 = scmp.ne.s32.totalorder %s284, %s286
    %p293 = scmp.eq.s32.totalorder %s24, 1
    %p294 = por %p292, %p293
    %p295 = scmp.ne.s32.totalorder %s286, %s287
    %p296 = scmp.eq.s32.totalorder %s24, 0
    %p297 = por %p295, %p296
    %p298 = scmp.ne.s32.totalorder %s286, %s287
    %p299 = scmp.eq.s32.totalorder %s25, 1
    %p300 = por %p298, %p299
    %p302 = scmp.ne.s32.totalorder %s287, %s301
    %p303 = scmp.eq.s32.totalorder %s25, 0
    %p304 = por %p302, %p303
    %s305 = ssub.s32 %s19, %s26
    %p306 = scmp.eq.s32.totalorder %s305, 0
    %s308 = sadd.s32 %s307, 1
    %s309 = scalar_select %p306, %s307, %s308
    %p312 = pneg %p306
    %p313 = scmp.eq.s32.totalorder %s19, 1
    %p314 = por %p312, %p313
    %p315 = scmp.ne.s32.totalorder %s307, %s310
    %p316 = scmp.eq.s32.totalorder %s19, 0
    %p317 = por %p315, %p316
    %p318 = scmp.ne.s32.totalorder %s307, %s310
    %p319 = scmp.eq.s32.totalorder %s24, 1
    %p320 = por %p318, %p319
    %p321 = scmp.ne.s32.totalorder %s310, %s311
    %p322 = scmp.eq.s32.totalorder %s24, 0
    %p323 = por %p321, %p322
    %p324 = scmp.ne.s32.totalorder %s310, %s311
    %p325 = scmp.eq.s32.totalorder %s25, 1
    %p326 = por %p324, %p325
    %p328 = scmp.ne.s32.totalorder %s311, %s327
    %p329 = scmp.eq.s32.totalorder %s25, 0
    %p330 = por %p328, %p329
    %p331 = scmp.le.s32.totalorder 1, %s19
    %p332 = scmp.lt.s32.totalorder %s19, 3
    %p333 = pnand %p331, %p332
    %p334 = pneg %p333
    // Predicated region
    $region9: #{scinet_tree_forward.1} parent=5 // pred_check
      _
    $region10: #{scinet_tree_forward.1} parent=5 // pred_check_branch
      %336 = sbr.rel (%p333) target = $region12
    $region11: #{scinet_tree_forward.1} parent=5 // pred_region
      %s337 = ssub.s32 %s19, 1
      // Predicated region
      $region13: #{scinet_tree_forward.1} parent=11 // pred_check
        %p338 = pneg %p66
      $region14: #{scinet_tree_forward.1} parent=11 // pred_check_branch
        %340 = sbr.rel (%p338) target = $region16
      $region15: #{scinet_tree_forward.1} parent=11 // pred_region
        _
      $region16: #{scinet_tree_forward.1} parent=11 // pred_fallthru
        _
      // Predicated region
      $region17: #{scinet_tree_forward.1} parent=11 // pred_check
        %p341 = pneg %p87
      $region18: #{scinet_tree_forward.1} parent=11 // pred_check_branch
        %343 = sbr.rel (%p341) target = $region20
      $region19: #{scinet_tree_forward.1} parent=11 // pred_region
        _
      $region20: #{scinet_tree_forward.1} parent=11 // pred_fallthru
        _
      // Predicated region
      $region21: #{scinet_tree_forward.1} parent=11 // pred_check
        %p344 = pneg %p108
      $region22: #{scinet_tree_forward.1} parent=11 // pred_check_branch
        %346 = sbr.rel (%p344) target = $region24
      $region23: #{scinet_tree_forward.1} parent=11 // pred_region
        _
      $region24: #{scinet_tree_forward.1} parent=11 // pred_fallthru
        _
      // Predicated region
      $region25: #{scinet_tree_forward.1} parent=11 // pred_check
        %p347 = pneg %p129
      $region26: #{scinet_tree_forward.1} parent=11 // pred_check_branch
        %349 = sbr.rel (%p347) target = $region28
      $region27: #{scinet_tree_forward.1} parent=11 // pred_region
        _
      $region28: #{scinet_tree_forward.1} parent=11 // pred_fallthru
        _
      // Predicated region
      $region29: #{scinet_tree_forward.1} parent=11 // pred_check
        %p350 = pneg %p150
      $region30: #{scinet_tree_forward.1} parent=11 // pred_check_branch
        %352 = sbr.rel (%p350) target = $region32
      $region31: #{scinet_tree_forward.1} parent=11 // pred_region
        _
      $region32: #{scinet_tree_forward.1} parent=11 // pred_fallthru
        _
      // Predicated region
      $region33: #{scinet_tree_forward.1} parent=11 // pred_check
        %p353 = pneg %p171
      $region34: #{scinet_tree_forward.1} parent=11 // pred_check_branch
        %355 = sbr.rel (%p353) target = $region36
      $region35: #{scinet_tree_forward.1} parent=11 // pred_region
        _
      $region36: #{scinet_tree_forward.1} parent=11 // pred_fallthru
        _
      // Predicated region
      $region37: #{scinet_tree_forward.1} parent=11 // pred_check
        %p356 = pneg %p192
      $region38: #{scinet_tree_forward.1} parent=11 // pred_check_branch
        %358 = sbr.rel (%p356) target = $region40
      $region39: #{scinet_tree_forward.1} parent=11 // pred_region
        _
      $region40: #{scinet_tree_forward.1} parent=11 // pred_fallthru
        _
      // Predicated region
      $region41: #{scinet_tree_forward.1} parent=11 // pred_check
        %p359 = pneg %p213
      $region42: #{scinet_tree_forward.1} parent=11 // pred_check_branch
        %361 = sbr.rel (%p359) target = $region44
      $region43: #{scinet_tree_forward.1} parent=11 // pred_region
        _
      $region44: #{scinet_tree_forward.1} parent=11 // pred_fallthru
        _
      // Predicated region
      $region45: #{scinet_tree_forward.1} parent=11 // pred_check
        %p362 = pneg %p234
      $region46: #{scinet_tree_forward.1} parent=11 // pred_check_branch
        %364 = sbr.rel (%p362) target = $region48
      $region47: #{scinet_tree_forward.1} parent=11 // pred_region
        _
      $region48: #{scinet_tree_forward.1} parent=11 // pred_fallthru
        _
      // Predicated region
      $region49: #{scinet_tree_forward.1} parent=11 // pred_check
        %p365 = pneg %p255
      $region50: #{scinet_tree_forward.1} parent=11 // pred_check_branch
        %367 = sbr.rel (%p365) target = $region52
      $region51: #{scinet_tree_forward.1} parent=11 // pred_region
        _
      $region52: #{scinet_tree_forward.1} parent=11 // pred_fallthru
        _
      // Predicated region
      $region53: #{scinet_tree_forward.1} parent=11 // pred_check
        %p368 = pneg %p276
      $region54: #{scinet_tree_forward.1} parent=11 // pred_check_branch
        %370 = sbr.rel (%p368) target = $region56
      $region55: #{scinet_tree_forward.1} parent=11 // pred_region
        _
      $region56: #{scinet_tree_forward.1} parent=11 // pred_fallthru
        _
      // Predicated region
      $region57: #{scinet_tree_forward.1} parent=11 // pred_check
        %p371 = pneg %p297
      $region58: #{scinet_tree_forward.1} parent=11 // pred_check_branch
        %373 = sbr.rel (%p371) target = $region60
      $region59: #{scinet_tree_forward.1} parent=11 // pred_region
        _
      $region60: #{scinet_tree_forward.1} parent=11 // pred_fallthru
        _
    $region12: #{scinet_tree_forward.1} parent=5 // pred_fallthru
      _
    %p374 = scmp.lt.s32.totalorder %s19, 2
    // Predicated region
    $region61: #{scinet_tree_forward.1} parent=5 // pred_check
      %p375 = pneg %p374
    $region62: #{scinet_tree_forward.1} parent=5 // pred_check_branch
      %377 = sbr.rel (%p375) target = $region64
    $region63: #{scinet_tree_forward.1} parent=5 // pred_region
      // Predicated region
      $region65: #{scinet_tree_forward.1} parent=63 // pred_check
        %p378 = pneg %p39
      $region66: #{scinet_tree_forward.1} parent=63 // pred_check_branch
        %380 = sbr.rel (%p378) target = $region68
      $region67: #{scinet_tree_forward.1} parent=63 // pred_region
        %p381 = scmp.lt.s32.totalorder %s19, 1
        %s382 = scalar_select %p381, %s19, 1
        %s383 = smul.addr %s382, 2
        %s384 = smul.addr %s383, 8
        %s385 = scalar_lea.vmem %s0, %s384
      $region68: #{scinet_tree_forward.1} parent=63 // pred_fallthru
        _
    $region64: #{scinet_tree_forward.1} parent=5 // pred_fallthru
      _
    %p386 = scmp.le.s32.totalorder 1, %s19
    %p387 = scmp.lt.s32.totalorder %s19, 3
    %p388 = pnand %p386, %p387
    %p389 = pneg %p388
    // Predicated region
    $region69: #{scinet_tree_forward.1} parent=5 // pred_check
      _
    $region70: #{scinet_tree_forward.1} parent=5 // pred_check_branch
      %391 = sbr.rel (%p388) target = $region72
    $region71: #{scinet_tree_forward.1} parent=5 // pred_region
      %s392 = ssub.s32 %s19, 1
      %p393 = scmp.lt.s32.totalorder %s24, 1
      %s394 = scalar_select %p393, %s24, 1
      %s395 = smul.addr %s394, 2
      %s396 = smul.addr %s395, 8
      %s397 = scalar_lea.vmem %s0, %s396
      %p398 = pneg %p45
      %p399 = pneg %p42
      %p400 = pneg %p66
      %p401 = pneg %p63
      %p402 = pneg %p87
      %p403 = pneg %p84
      %p404 = pneg %p108
      %p405 = pneg %p105
      %p406 = pneg %p129
      %p407 = pneg %p126
      %p408 = pneg %p150
      %p409 = pneg %p147
      %p410 = pneg %p171
      %p411 = pneg %p168
      %p412 = pneg %p192
      %p413 = pneg %p189
      %p414 = pneg %p213
      %p415 = pneg %p210
      %p416 = pneg %p234
      %p417 = pneg %p231
      %p418 = pneg %p255
      %p419 = pneg %p252
      %p420 = pneg %p276
      %p421 = pneg %p273
      %p422 = pneg %p297
      %p423 = pneg %p294
      %p424 = pneg %p323
      %p425 = pneg %p320
      %p426 = scmp.lt.s32.totalorder %s24, 1
      %s427 = scalar_select %p426, %s24, 1
      %s428 = smul.addr %s427, 2
      %s429 = smul.addr %s428, 8
      %s430 = scalar_lea.vmem %s13, %s429
      %p431 = scmp.lt.s32.totalorder %s24, 1
      %s432 = scalar_select %p431, %s24, 1
      %s433 = smul.addr %s432, 2
      %s434 = smul.addr %s433, 8
      %s435 = scalar_lea.vmem %s0, %s434
      %p436 = scmp.lt.s32.totalorder %s24, 1
      %s437 = scalar_select %p436, %s24, 1
      %s438 = smul.addr %s437, 2
      %s439 = smul.addr %s438, 8
      %s440 = scalar_lea.vmem %s13, %s439
      %v441 = vld [vmem:[%s435] sm:$0xff]
      %v442 = vld [vmem:[%s435 + $0x8] sm:$0xff]
      %v443 = vlaneseq
      %v444 = vshrl.u32 %v443, 7
      %v445 = vlaneseq
      %v446 = vand.u32 %v445, 127
      %v447 = vmul.u32 %v444, 2
      %vm448 = vcmp.eq.s32.totalorder %v446, %v447
      %v449 = vsel %vm448, 1, 0
      %v450 = vcvt.s32.f32 %v449
      %v451 = vadd.s32 %v447, 1
      %vm452 = vcmp.lt.s32.totalorder %v451, 15
      %v453 = vsel %vm452, %v451, 15
      %vm454 = vcmp.eq.s32.totalorder %v446, %v453
      %v455 = vsel %vm454, 1, 0
      %v456 = vcvt.s32.f32 %v455
      %vm457 = vcmask 130048
      %v459 = vsel %vm457, %v450, 0
      %461 = vmatprep.subr.mxu0 0.0
      %462 = vmatpush1.msra.mxu0 %v441
      %463 = vmatprep.subr.mxu0 0.0
      %464 = vmatpush1.msra.mxu0 %v442
      %465 = vmatprep.subr.mxu0 0.0
      %466 = vmatpush1.msra.mxu0 0.0
      %467 = vmatprep.subr.mxu0 0.0
      %468 = vmatpush1.msra.mxu0 0.0
      %469 = vmatprep.subr.mxu0 0.0
      %470 = vmatpush1.msra.mxu0 0.0
      %471 = vmatprep.subr.mxu0 0.0
      %472 = vmatpush1.msra.mxu0 0.0
      %473 = vmatprep.subr.mxu0 0.0
      %474 = vmatpush1.msra.mxu0 0.0
      %475 = vmatprep.subr.mxu0 0.0
      %476 = vmatpush1.msra.mxu0 0.0
      %477 = vmatprep.subr.mxu0 0.0
      %478 = vmatpush1.msra.mxu0 0.0
      %479 = vmatprep.subr.mxu0 0.0
      %480 = vmatpush1.msra.mxu0 0.0
      %481 = vmatprep.subr.mxu0 0.0
      %482 = vmatpush1.msra.mxu0 0.0
      %483 = vmatprep.subr.mxu0 0.0
      %484 = vmatpush1.msra.mxu0 0.0
      %485 = vmatprep.subr.mxu0 0.0
      %486 = vmatpush1.msra.mxu0 0.0
      %487 = vmatprep.subr.mxu0 0.0
      %488 = vmatpush1.msra.mxu0 0.0
      %489 = vmatprep.subr.mxu0 0.0
      %490 = vmatpush1.msra.mxu0 0.0
      %491 = vmatprep.subr.mxu0 0.0
      %492 = vmatpush1.msra.mxu0 0.0
      %493 = vmatprep.subr.mxu0 0.0
      %494 = vmatpush1.msra.mxu0 0.0
      %495 = vmatprep.subr.mxu0 0.0
      %496 = vmatpush1.msra.mxu0 0.0
      %497 = vmatprep.subr.mxu0 0.0
      %498 = vmatpush1.msra.mxu0 0.0
      %499 = vmatprep.subr.mxu0 0.0
      %500 = vmatpush1.msra.mxu0 0.0
      %501 = vmatprep.subr.mxu0 0.0
      %502 = vmatpush1.msra.mxu0 0.0
      %503 = vmatprep.subr.mxu0 0.0
      %504 = vmatpush1.msra.mxu0 0.0
      %505 = vmatprep.subr.mxu0 0.0
      %506 = vmatpush1.msra.mxu0 0.0
      %507 = vmatprep.subr.mxu0 0.0
      %508 = vmatpush1.msra.mxu0 0.0
      %509 = vmatprep.subr.mxu0 0.0
      %510 = vmatpush1.msra.mxu0 0.0
      %511 = vmatprep.subr.mxu0 0.0
      %512 = vmatpush1.msra.mxu0 0.0
      %513 = vmatprep.subr.mxu0 0.0
      %514 = vmatpush1.msra.mxu0 0.0
      %515 = vmatprep.subr.mxu0 0.0
      %516 = vmatpush1.msra.mxu0 0.0
      %517 = vmatprep.subr.mxu0 0.0
      %518 = vmatpush1.msra.mxu0 0.0
      %519 = vmatprep.subr.mxu0 0.0
      %520 = vmatpush1.msra.mxu0 0.0
      %521 = vmatprep.subr.mxu0 0.0
      %522 = vmatpush1.msra.mxu0 0.0
      %523 = vmatprep.subr.mxu0 0.0
      %524 = vmatpush1.msra.mxu0 0.0
      %525 = vmatprep.mubr.f32.mxu0 0.0
      %526 = vmatmul.mubr.f32.gmra.mrb[0].mxu0 %v459
      %v527 = vpop.f32.mrb[0].mxu0
      %v528 = vadd.f32 0.0, %v527
      %v529 = vpop.f32.mrb[0].mxu0
      %530 = vdwg.mxu0
      %v532 = vsel %vm457, %v456, 0
      %534 = vmatprep.subr.mxu0 0.0
      %535 = vmatpush1.msra.mxu0 %v441
      %536 = vmatprep.subr.mxu0 0.0
      %537 = vmatpush1.msra.mxu0 %v442
      %538 = vmatprep.subr.mxu0 0.0
      %539 = vmatpush1.msra.mxu0 0.0
      %540 = vmatprep.subr.mxu0 0.0
      %541 = vmatpush1.msra.mxu0 0.0
      %542 = vmatprep.subr.mxu0 0.0
      %543 = vmatpush1.msra.mxu0 0.0
      %544 = vmatprep.subr.mxu0 0.0
      %545 = vmatpush1.msra.mxu0 0.0
      %546 = vmatprep.subr.mxu0 0.0
      %547 = vmatpush1.msra.mxu0 0.0
      %548 = vmatprep.subr.mxu0 0.0
      %549 = vmatpush1.msra.mxu0 0.0
      %550 = vmatprep.subr.mxu0 0.0
      %551 = vmatpush1.msra.mxu0 0.0
      %552 = vmatprep.subr.mxu0 0.0
      %553 = vmatpush1.msra.mxu0 0.0
      %554 = vmatprep.subr.mxu0 0.0
      %555 = vmatpush1.msra.mxu0 0.0
      %556 = vmatprep.subr.mxu0 0.0
      %557 = vmatpush1.msra.mxu0 0.0
      %558 = vmatprep.subr.mxu0 0.0
      %559 = vmatpush1.msra.mxu0 0.0
      %560 = vmatprep.subr.mxu0 0.0
      %561 = vmatpush1.msra.mxu0 0.0
      %562 = vmatprep.subr.mxu0 0.0
      %563 = vmatpush1.msra.mxu0 0.0
      %564 = vmatprep.subr.mxu0 0.0
      %565 = vmatpush1.msra.mxu0 0.0
      %566 = vmatprep.subr.mxu0 0.0
      %567 = vmatpush1.msra.mxu0 0.0
      %568 = vmatprep.subr.mxu0 0.0
      %569 = vmatpush1.msra.mxu0 0.0
      %570 = vmatprep.subr.mxu0 0.0
      %571 = vmatpush1.msra.mxu0 0.0
      %572 = vmatprep.subr.mxu0 0.0
      %573 = vmatpush1.msra.mxu0 0.0
      %574 = vmatprep.subr.mxu0 0.0
      %575 = vmatpush1.msra.mxu0 0.0
      %576 = vmatprep.subr.mxu0 0.0
      %577 = vmatpush1.msra.mxu0 0.0
      %578 = vmatprep.subr.mxu0 0.0
      %579 = vmatpush1.msra.mxu0 0.0
      %580 = vmatprep.subr.mxu0 0.0
      %581 = vmatpush1.msra.mxu0 0.0
      %582 = vmatprep.subr.mxu0 0.0
      %583 = vmatpush1.msra.mxu0 0.0
      %584 = vmatprep.subr.mxu0 0.0
      %585 = vmatpush1.msra.mxu0 0.0
      %586 = vmatprep.subr.mxu0 0.0
      %587 = vmatpush1.msra.mxu0 0.0
      %588 = vmatprep.subr.mxu0 0.0
      %589 = vmatpush1.msra.mxu0 0.0
      %590 = vmatprep.subr.mxu0 0.0
      %591 = vmatpush1.msra.mxu0 0.0
      %592 = vmatprep.subr.mxu0 0.0
      %593 = vmatpush1.msra.mxu0 0.0
      %594 = vmatprep.subr.mxu0 0.0
      %595 = vmatpush1.msra.mxu0 0.0
      %596 = vmatprep.subr.mxu0 0.0
      %597 = vmatpush1.msra.mxu0 0.0
      %598 = vmatprep.mubr.f32.mxu0 0.0
      %599 = vmatmul.mubr.f32.gmra.mrb[0].mxu0 %v532
      %v600 = vpop.f32.mrb[0].mxu0
      %v601 = vadd.f32 0.0, %v600
      %v602 = vpop.f32.mrb[0].mxu0
      %603 = vdwg.mxu0
      %605 = vrot.lane.b32.xlu0 %v601, 4
      %v606 = vpop.permute.xlu0 %605
      %vm608 = vcmask 31744
      %v609 = vsel %vm608, %v528, %v606
      %v610 = vld [vmem:[%s1] sm:$0xff]
      %v611 = vld [vmem:[%s1 + $0x8] sm:$0xff]
      %v612 = vld [vmem:[%s1 + $0x10] sm:$0xff]
      %v613 = vld [vmem:[%s1 + $0x18] sm:$0xff]
      %v614 = vld [vmem:[%s1 + $0x20] sm:$0xff]
      %v615 = vld [vmem:[%s2] sm:$0x1]
      %v616 = vld [vmem:[%s3] sm:$0xff]
      %v617 = vld [vmem:[%s3 + $0x8] sm:$0xff]
      %v618 = vld [vmem:[%s3 + $0x10] sm:$0xff]
      %v619 = vld [vmem:[%s3 + $0x18] sm:$0xff]
      %v620 = vld [vmem:[%s3 + $0x20] sm:$0xff]
      %v621 = vld [vmem:[%s3 + $0x28] sm:$0xff]
      %v622 = vld [vmem:[%s4] sm:$0x1]
      %v623 = vlaneseq
      %v624 = vshrl.u32 %v623, 7
      %v625 = vsub.s32 0, %v624
      %v626 = vrot.slane %v609, %v625
      %v627 = vlaneseq
      %v628 = vshrl.u32 %v627, 7
      %v629 = vsub.s32 7, %v628
      %v630 = vrot.slane %v609, %v629
      %v632 = vrot.slane %v609, 5
      %vm634 = vcmask 1042432
      %v635 = vsel %vm634, %v626, %v632
      %v636 = vsel %vm634, %v632, %v630
      %vm639 = vcmask 1046528
      %v640 = vrot.slane %v635, 1
      %v641 = vrot.slane %v636, 1
      %v642 = vsel %vm639, %v640, %v641
      %643 = vrot.lane.b32.xlu0 %v642, 8
      %v644 = vpop.permute.xlu0 %643
      %645 = vrot.lane.b32.xlu0 %v641, 8
      %v646 = vpop.permute.xlu0 %645
      %vm649 = vcmask 1045504
      %v650 = vrot.slane %v635, 2
      %v651 = vrot.slane %v636, 2
      %v652 = vsel %vm649, %v650, %v651
      %653 = vrot.lane.b32.xlu0 %v652, 16
      %v654 = vpop.permute.xlu0 %653
      %655 = vrot.lane.b32.xlu0 %v651, 16
      %v656 = vpop.permute.xlu0 %655
      %vm659 = vcmask 1044480
      %v660 = vrot.slane %v635, 3
      %v661 = vrot.slane %v636, 3
      %v662 = vsel %vm659, %v660, %v661
      %663 = vrot.lane.b32.xlu0 %v662, 24
      %v664 = vpop.permute.xlu0 %663
      %665 = vrot.lane.b32.xlu0 %v661, 24
      %v666 = vpop.permute.xlu0 %665
      %vm669 = vcmask 1043456
      %v670 = vrot.slane %v635, 4
      %v671 = vrot.slane %v636, 4
      %v672 = vsel %vm669, %v670, %v671
      %673 = vrot.lane.b32.xlu0 %v672, 32
      %v674 = vpop.permute.xlu0 %673
      %675 = vrot.lane.b32.xlu0 %v671, 32
      %v676 = vpop.permute.xlu0 %675
      %vm679 = vcmask 64512
      %v680 = vsel %vm679, %v635, %v644
      %v681 = vsel %vm679, %v636, %v646
      %v682 = vsel %vm457, %v680, %v654
      %v683 = vsel %vm457, %v681, %v656
      %vm684 = vcmask 195584
      %v685 = vsel %vm684, %v682, %v664
      %v686 = vsel %vm684, %v683, %v666
      %vm687 = vcmask 261120
      %v688 = vsel %vm687, %v685, %v674
      %v689 = vsel %vm687, %v686, %v676
      %v691 = vlaneseq
      %v692 = vshrl.u32 %v691, 7
      %v693 = vsub.s32 0, %v692
      %v694 = vrot.slane %v615, %v693
      %vm696 = vcmask 326656
      %v698 = vsel %vm696, %v688, 0
      %v701 = vsel %vm696, %v689, 0
      %703 = vmatprep.subr.mxu0 0.0
      %704 = vmatpush1.msra.mxu0 %v610
      %705 = vmatprep.subr.mxu0 0.0
      %706 = vmatpush1.msra.mxu0 %v611
      %707 = vmatprep.subr.mxu0 0.0
      %708 = vmatpush1.msra.mxu0 %v612
      %709 = vmatprep.subr.mxu0 0.0
      %710 = vmatpush1.msra.mxu0 %v613
      %711 = vmatprep.subr.mxu0 0.0
      %712 = vmatpush1.msra.mxu0 %v614
      %713 = vmatprep.subr.mxu0 0.0
      %714 = vmatpush1.msra.mxu0 0.0
      %715 = vmatprep.subr.mxu0 0.0
      %716 = vmatpush1.msra.mxu0 0.0
      %717 = vmatprep.subr.mxu0 0.0
      %718 = vmatpush1.msra.mxu0 0.0
      %719 = vmatprep.subr.mxu0 0.0
      %720 = vmatpush1.msra.mxu0 0.0
      %721 = vmatprep.subr.mxu0 0.0
      %722 = vmatpush1.msra.mxu0 0.0
      %723 = vmatprep.subr.mxu0 0.0
      %724 = vmatpush1.msra.mxu0 0.0
      %725 = vmatprep.subr.mxu0 0.0
      %726 = vmatpush1.msra.mxu0 0.0
      %727 = vmatprep.subr.mxu0 0.0
      %728 = vmatpush1.msra.mxu0 0.0
      %729 = vmatprep.subr.mxu0 0.0
      %730 = vmatpush1.msra.mxu0 0.0
      %731 = vmatprep.subr.mxu0 0.0
      %732 = vmatpush1.msra.mxu0 0.0
      %733 = vmatprep.subr.mxu0 0.0
      %734 = vmatpush1.msra.mxu0 0.0
      %735 = vmatprep.subr.mxu0 0.0
      %736 = vmatpush1.msra.mxu0 0.0
      %737 = vmatprep.subr.mxu0 0.0
      %738 = vmatpush1.msra.mxu0 0.0
      %739 = vmatprep.subr.mxu0 0.0
      %740 = vmatpush1.msra.mxu0 0.0
      %741 = vmatprep.subr.mxu0 0.0
      %742 = vmatpush1.msra.mxu0 0.0
      %743 = vmatprep.subr.mxu0 0.0
      %744 = vmatpush1.msra.mxu0 0.0
      %745 = vmatprep.subr.mxu0 0.0
      %746 = vmatpush1.msra.mxu0 0.0
      %747 = vmatprep.subr.mxu0 0.0
      %748 = vmatpush1.msra.mxu0 0.0
      %749 = vmatprep.subr.mxu0 0.0
      %750 = vmatpush1.msra.mxu0 0.0
      %751 = vmatprep.subr.mxu0 0.0
      %752 = vmatpush1.msra.mxu0 0.0
      %753 = vmatprep.subr.mxu0 0.0
      %754 = vmatpush1.msra.mxu0 0.0
      %755 = vmatprep.subr.mxu0 0.0
      %756 = vmatpush1.msra.mxu0 0.0
      %757 = vmatprep.subr.mxu0 0.0
      %758 = vmatpush1.msra.mxu0 0.0
      %759 = vmatprep.subr.mxu0 0.0
      %760 = vmatpush1.msra.mxu0 0.0
      %761 = vmatprep.subr.mxu0 0.0
      %762 = vmatpush1.msra.mxu0 0.0
      %763 = vmatprep.subr.mxu0 0.0
      %764 = vmatpush1.msra.mxu0 0.0
      %765 = vmatprep.subr.mxu0 0.0
      %766 = vmatpush1.msra.mxu0 0.0
      %767 = vmatprep.mubr.f32.mxu0 0.0
      %768 = vmatmul.mubr.f32.gmra.mrb[0].mxu0 %v698
      %v769 = vpop.f32.mrb[0].mxu0
      %v770 = vadd.f32 %v694, %v769
      %v771 = vpop.f32.mrb[0].mxu0
      %772 = vmatprep.mubr.f32.mxu0 0.0
      %773 = vmatmul.mubr.f32.gmra.mrb[0].mxu0 %v701
      %v774 = vpop.f32.mrb[0].mxu0
      %v775 = vadd.f32 %v694, %v774
      %v776 = vpop.f32.mrb[0].mxu0
      %777 = vdwg.mxu0
      %vm778 = vcmp.gt.f32.partialorder %v770, 0.0
      %vm779 = vcmp.gt.f32.partialorder %v775, 0.0
      %v780 = vmul.f32 %v770, 0.01
      %v781 = vmul.f32 %v775, 0.01
      %v782 = vsel %vm778, %v770, %v780
      %v783 = vsel %vm779, %v775, %v781
      %v786 = vrot.slane %v782, 1
      %v787 = vrot.slane %v783, 1
      %v788 = vsel %vm639, %v786, %v787
      %789 = vrot.lane.b32.xlu0 %v788, 16
      %v790 = vpop.permute.xlu0 %789
      %v792 = vrot.slane %v782, 2
      %v793 = vrot.slane %v783, 2
      %v794 = vsel %vm649, %v792, %v793
      %795 = vrot.lane.b32.xlu0 %v794, 32
      %v796 = vpop.permute.xlu0 %795
      %v798 = vsel %vm457, %v782, %v790
      %v799 = vsel %vm687, %v798, %v796
      %v801 = vlaneseq
      %v802 = vshrl.u32 %v801, 7
      %v803 = vsub.s32 0, %v802
      %v804 = vrot.slane %v622, %v803
      %vm806 = vcmask 392192
      %v808 = vsel %vm806, %v799, 0
      %810 = vmatprep.subr.mxu0 0.0
      %811 = vmatpush1.msra.mxu0 %v616
      %812 = vmatprep.subr.mxu0 0.0
      %813 = vmatpush1.msra.mxu0 %v617
      %814 = vmatprep.subr.mxu0 0.0
      %815 = vmatpush1.msra.mxu0 %v618
      %816 = vmatprep.subr.mxu0 0.0
      %817 = vmatpush1.msra.mxu0 %v619
      %818 = vmatprep.subr.mxu0 0.0
      %819 = vmatpush1.msra.mxu0 %v620
      %820 = vmatprep.subr.mxu0 0.0
      %821 = vmatpush1.msra.mxu0 %v621
      %822 = vmatprep.subr.mxu0 0.0
      %823 = vmatpush1.msra.mxu0 0.0
      %824 = vmatprep.subr.mxu0 0.0
      %825 = vmatpush1.msra.mxu0 0.0
      %826 = vmatprep.subr.mxu0 0.0
      %827 = vmatpush1.msra.mxu0 0.0
      %828 = vmatprep.subr.mxu0 0.0
      %829 = vmatpush1.msra.mxu0 0.0
      %830 = vmatprep.subr.mxu0 0.0
      %831 = vmatpush1.msra.mxu0 0.0
      %832 = vmatprep.subr.mxu0 0.0
      %833 = vmatpush1.msra.mxu0 0.0
      %834 = vmatprep.subr.mxu0 0.0
      %835 = vmatpush1.msra.mxu0 0.0
      %836 = vmatprep.subr.mxu0 0.0
      %837 = vmatpush1.msra.mxu0 0.0
      %838 = vmatprep.subr.mxu0 0.0
      %839 = vmatpush1.msra.mxu0 0.0
      %840 = vmatprep.subr.mxu0 0.0
      %841 = vmatpush1.msra.mxu0 0.0
      %842 = vmatprep.subr.mxu0 0.0
      %843 = vmatpush1.msra.mxu0 0.0
      %844 = vmatprep.subr.mxu0 0.0
      %845 = vmatpush1.msra.mxu0 0.0
      %846 = vmatprep.subr.mxu0 0.0
      %847 = vmatpush1.msra.mxu0 0.0
      %848 = vmatprep.subr.mxu0 0.0
      %849 = vmatpush1.msra.mxu0 0.0
      %850 = vmatprep.subr.mxu0 0.0
      %851 = vmatpush1.msra.mxu0 0.0
      %852 = vmatprep.subr.mxu0 0.0
      %853 = vmatpush1.msra.mxu0 0.0
      %854 = vmatprep.subr.mxu0 0.0
      %855 = vmatpush1.msra.mxu0 0.0
      %856 = vmatprep.subr.mxu0 0.0
      %857 = vmatpush1.msra.mxu0 0.0
      %858 = vmatprep.subr.mxu0 0.0
      %859 = vmatpush1.msra.mxu0 0.0
      %860 = vmatprep.subr.mxu0 0.0
      %861 = vmatpush1.msra.mxu0 0.0
      %862 = vmatprep.subr.mxu0 0.0
      %863 = vmatpush1.msra.mxu0 0.0
      %864 = vmatprep.subr.mxu0 0.0
      %865 = vmatpush1.msra.mxu0 0.0
      %866 = vmatprep.subr.mxu0 0.0
      %867 = vmatpush1.msra.mxu0 0.0
      %868 = vmatprep.subr.mxu0 0.0
      %869 = vmatpush1.msra.mxu0 0.0
      %870 = vmatprep.subr.mxu0 0.0
      %871 = vmatpush1.msra.mxu0 0.0
      %872 = vmatprep.subr.mxu0 0.0
      %873 = vmatpush1.msra.mxu0 0.0
      %874 = vmatprep.mubr.f32.mxu0 0.0
      %875 = vmatmul.mubr.f32.gmra.mrb[0].mxu0 %v808
      %v876 = vpop.f32.mrb[0].mxu0
      %v877 = vadd.f32 %v804, %v876
      %v878 = vpop.f32.mrb[0].mxu0
      %879 = vdwg.mxu0
      %v880 = vtanh.pop %v877
      %v881 = vmul.f32 %v880, 1.442695
      %v882 = vpow.pop %v881
      %v883 = vmul.f32 %v601, %v882
      %885 = vrot.lane.b32.xlu0 %v882, 124
      %v886 = vpop.permute.xlu0 %885
      %v888 = vmul.f32 %v528, %v886
      %890 = vrot.lane.b32.xlu0 %v888, 4
      %v891 = vpop.permute.xlu0 %890
      %v893 = vsel %vm608, %v883, %v891
      %s894 = scalar_lea.vmem %s1, 40
      %v895 = vld [vmem:[%s894] sm:$0xff]
      %v896 = vld [vmem:[%s894 + $0x8] sm:$0xff]
      %v897 = vld [vmem:[%s894 + $0x10] sm:$0xff]
      %v898 = vld [vmem:[%s894 + $0x18] sm:$0xff]
      %v899 = vld [vmem:[%s894 + $0x20] sm:$0xff]
      %s900 = scalar_lea.vmem %s2, 1
      %v901 = vld [vmem:[%s900] sm:$0x1]
      %s902 = scalar_lea.vmem %s3, 48
      %v903 = vld [vmem:[%s902] sm:$0xff]
      %v904 = vld [vmem:[%s902 + $0x8] sm:$0xff]
      %v905 = vld [vmem:[%s902 + $0x10] sm:$0xff]
      %v906 = vld [vmem:[%s902 + $0x18] sm:$0xff]
      %v907 = vld [vmem:[%s902 + $0x20] sm:$0xff]
      %v908 = vld [vmem:[%s902 + $0x28] sm:$0xff]
      %s909 = scalar_lea.vmem %s4, 1
      %v910 = vld [vmem:[%s909] sm:$0x1]
      %v911 = vlaneseq
      %v912 = vshrl.u32 %v911, 7
      %v913 = vsub.s32 0, %v912
      %v914 = vrot.slane %v893, %v913
      %v915 = vlaneseq
      %v916 = vshrl.u32 %v915, 7
      %v917 = vsub.s32 7, %v916
      %v918 = vrot.slane %v893, %v917
      %v920 = vrot.slane %v893, 5
      %v922 = vsel %vm634, %v914, %v920
      %v923 = vsel %vm634, %v920, %v918
      %v926 = vrot.slane %v922, 1
      %v927 = vrot.slane %v923, 1
      %v928 = vsel %vm639, %v926, %v927
      %929 = vrot.lane.b32.xlu0 %v928, 8
      %v930 = vpop.permute.xlu0 %929
      %931 = vrot.lane.b32.xlu0 %v927, 8
      %v932 = vpop.permute.xlu0 %931
      %v935 = vrot.slane %v922, 2
      %v936 = vrot.slane %v923, 2
      %v937 = vsel %vm649, %v935, %v936
      %938 = vrot.lane.b32.xlu0 %v937, 16
      %v939 = vpop.permute.xlu0 %938
      %940 = vrot.lane.b32.xlu0 %v936, 16
      %v941 = vpop.permute.xlu0 %940
      %v944 = vrot.slane %v922, 3
      %v945 = vrot.slane %v923, 3
      %v946 = vsel %vm659, %v944, %v945
      %947 = vrot.lane.b32.xlu0 %v946, 24
      %v948 = vpop.permute.xlu0 %947
      %949 = vrot.lane.b32.xlu0 %v945, 24
      %v950 = vpop.permute.xlu0 %949
      %v953 = vrot.slane %v922, 4
      %v954 = vrot.slane %v923, 4
      %v955 = vsel %vm669, %v953, %v954
      %956 = vrot.lane.b32.xlu0 %v955, 32
      %v957 = vpop.permute.xlu0 %956
      %958 = vrot.lane.b32.xlu0 %v954, 32
      %v959 = vpop.permute.xlu0 %958
      %v962 = vsel %vm679, %v922, %v930
      %v963 = vsel %vm679, %v923, %v932
      %v964 = vsel %vm457, %v962, %v939
      %v965 = vsel %vm457, %v963, %v941
      %v966 = vsel %vm684, %v964, %v948
      %v967 = vsel %vm684, %v965, %v950
      %v968 = vsel %vm687, %v966, %v957
      %v969 = vsel %vm687, %v967, %v959
      %v971 = vlaneseq
      %v972 = vshrl.u32 %v971, 7
      %v973 = vsub.s32 0, %v972
      %v974 = vrot.slane %v901, %v973
      %v977 = vsel %vm696, %v968, 0
      %v980 = vsel %vm696, %v969, 0
      %982 = vmatprep.subr.mxu0 0.0
      %983 = vmatpush1.msra.mxu0 %v895
      %984 = vmatprep.subr.mxu0 0.0
      %985 = vmatpush1.msra.mxu0 %v896
      %986 = vmatprep.subr.mxu0 0.0
      %987 = vmatpush1.msra.mxu0 %v897
      %988 = vmatprep.subr.mxu0 0.0
      %989 = vmatpush1.msra.mxu0 %v898
      %990 = vmatprep.subr.mxu0 0.0
      %991 = vmatpush1.msra.mxu0 %v899
      %992 = vmatprep.subr.mxu0 0.0
      %993 = vmatpush1.msra.mxu0 0.0
      %994 = vmatprep.subr.mxu0 0.0
      %995 = vmatpush1.msra.mxu0 0.0
      %996 = vmatprep.subr.mxu0 0.0
      %997 = vmatpush1.msra.mxu0 0.0
      %998 = vmatprep.subr.mxu0 0.0
      %999 = vmatpush1.msra.mxu0 0.0
      %1000 = vmatprep.subr.mxu0 0.0
      %1001 = vmatpush1.msra.mxu0 0.0
      %1002 = vmatprep.subr.mxu0 0.0
      %1003 = vmatpush1.msra.mxu0 0.0
      %1004 = vmatprep.subr.mxu0 0.0
      %1005 = vmatpush1.msra.mxu0 0.0
      %1006 = vmatprep.subr.mxu0 0.0
      %1007 = vmatpush1.msra.mxu0 0.0
      %1008 = vmatprep.subr.mxu0 0.0
      %1009 = vmatpush1.msra.mxu0 0.0
      %1010 = vmatprep.subr.mxu0 0.0
      %1011 = vmatpush1.msra.mxu0 0.0
      %1012 = vmatprep.subr.mxu0 0.0
      %1013 = vmatpush1.msra.mxu0 0.0
      %1014 = vmatprep.subr.mxu0 0.0
      %1015 = vmatpush1.msra.mxu0 0.0
      %1016 = vmatprep.subr.mxu0 0.0
      %1017 = vmatpush1.msra.mxu0 0.0
      %1018 = vmatprep.subr.mxu0 0.0
      %1019 = vmatpush1.msra.mxu0 0.0
      %1020 = vmatprep.subr.mxu0 0.0
      %1021 = vmatpush1.msra.mxu0 0.0
      %1022 = vmatprep.subr.mxu0 0.0
      %1023 = vmatpush1.msra.mxu0 0.0
      %1024 = vmatprep.subr.mxu0 0.0
      %1025 = vmatpush1.msra.mxu0 0.0
      %1026 = vmatprep.subr.mxu0 0.0
      %1027 = vmatpush1.msra.mxu0 0.0
      %1028 = vmatprep.subr.mxu0 0.0
      %1029 = vmatpush1.msra.mxu0 0.0
      %1030 = vmatprep.subr.mxu0 0.0
      %1031 = vmatpush1.msra.mxu0 0.0
      %1032 = vmatprep.subr.mxu0 0.0
      %1033 = vmatpush1.msra.mxu0 0.0
      %1034 = vmatprep.subr.mxu0 0.0
      %1035 = vmatpush1.msra.mxu0 0.0
      %1036 = vmatprep.subr.mxu0 0.0
      %1037 = vmatpush1.msra.mxu0 0.0
      %1038 = vmatprep.subr.mxu0 0.0
      %1039 = vmatpush1.msra.mxu0 0.0
      %1040 = vmatprep.subr.mxu0 0.0
      %1041 = vmatpush1.msra.mxu0 0.0
      %1042 = vmatprep.subr.mxu0 0.0
      %1043 = vmatpush1.msra.mxu0 0.0
      %1044 = vmatprep.subr.mxu0 0.0
      %1045 = vmatpush1.msra.mxu0 0.0
      %1046 = vmatprep.mubr.f32.mxu0 0.0
      %1047 = vmatmul.mubr.f32.gmra.mrb[0].mxu0 %v977
      %v1048 = vpop.f32.mrb[0].mxu0
      %v1049 = vadd.f32 %v974, %v1048
      %v1050 = vpop.f32.mrb[0].mxu0
      %1051 = vmatprep.mubr.f32.mxu0 0.0
      %1052 = vmatmul.mubr.f32.gmra.mrb[0].mxu0 %v980
      %v1053 = vpop.f32.mrb[0].mxu0
      %v1054 = vadd.f32 %v974, %v1053
      %v1055 = vpop.f32.mrb[0].mxu0
      %1056 = vdwg.mxu0
      %vm1057 = vcmp.gt.f32.partialorder %v1049, 0.0
      %vm1058 = vcmp.gt.f32.partialorder %v1054, 0.0
      %v1059 = vmul.f32 %v1049, 0.01
      %v1060 = vmul.f32 %v1054, 0.01
      %v1061 = vsel %vm1057, %v1049, %v1059
      %v1062 = vsel %vm1058, %v1054, %v1060
      %v1065 = vrot.slane %v1061, 1
      %v1066 = vrot.slane %v1062, 1
      %v1067 = vsel %vm639, %v1065, %v1066
      %1068 = vrot.lane.b32.xlu0 %v1067, 16
      %v1069 = vpop.permute.xlu0 %1068
      %v1071 = vrot.slane %v1061, 2
      %v1072 = vrot.slane %v1062, 2
      %v1073 = vsel %vm649, %v1071, %v1072
      %1074 = vrot.lane.b32.xlu0 %v1073, 32
      %v1075 = vpop.permute.xlu0 %1074
      %v1077 = vsel %vm457, %v1061, %v1069
      %v1078 = vsel %vm687, %v1077, %v1075
      %v1080 = vlaneseq
      %v1081 = vshrl.u32 %v1080, 7
      %v1082 = vsub.s32 0, %v1081
      %v1083 = vrot.slane %v910, %v1082
      %v1086 = vsel %vm806, %v1078, 0
      %1088 = vmatprep.subr.mxu0 0.0
      %1089 = vmatpush1.msra.mxu0 %v903
      %1090 = vmatprep.subr.mxu0 0.0
      %1091 = vmatpush1.msra.mxu0 %v904
      %1092 = vmatprep.subr.mxu0 0.0
      %1093 = vmatpush1.msra.mxu0 %v905
      %1094 = vmatprep.subr.mxu0 0.0
      %1095 = vmatpush1.msra.mxu0 %v906
      %1096 = vmatprep.subr.mxu0 0.0
      %1097 = vmatpush1.msra.mxu0 %v907
      %1098 = vmatprep.subr.mxu0 0.0
      %1099 = vmatpush1.msra.mxu0 %v908
      %1100 = vmatprep.subr.mxu0 0.0
      %1101 = vmatpush1.msra.mxu0 0.0
      %1102 = vmatprep.subr.mxu0 0.0
      %1103 = vmatpush1.msra.mxu0 0.0
      %1104 = vmatprep.subr.mxu0 0.0
      %1105 = vmatpush1.msra.mxu0 0.0
      %1106 = vmatprep.subr.mxu0 0.0
      %1107 = vmatpush1.msra.mxu0 0.0
      %1108 = vmatprep.subr.mxu0 0.0
      %1109 = vmatpush1.msra.mxu0 0.0
      %1110 = vmatprep.subr.mxu0 0.0
      %1111 = vmatpush1.msra.mxu0 0.0
      %1112 = vmatprep.subr.mxu0 0.0
      %1113 = vmatpush1.msra.mxu0 0.0
      %1114 = vmatprep.subr.mxu0 0.0
      %1115 = vmatpush1.msra.mxu0 0.0
      %1116 = vmatprep.subr.mxu0 0.0
      %1117 = vmatpush1.msra.mxu0 0.0
      %1118 = vmatprep.subr.mxu0 0.0
      %1119 = vmatpush1.msra.mxu0 0.0
      %1120 = vmatprep.subr.mxu0 0.0
      %1121 = vmatpush1.msra.mxu0 0.0
      %1122 = vmatprep.subr.mxu0 0.0
      %1123 = vmatpush1.msra.mxu0 0.0
      %1124 = vmatprep.subr.mxu0 0.0
      %1125 = vmatpush1.msra.mxu0 0.0
      %1126 = vmatprep.subr.mxu0 0.0
      %1127 = vmatpush1.msra.mxu0 0.0
      %1128 = vmatprep.subr.mxu0 0.0
      %1129 = vmatpush1.msra.mxu0 0.0
      %1130 = vmatprep.subr.mxu0 0.0
      %1131 = vmatpush1.msra.mxu0 0.0
      %1132 = vmatprep.subr.mxu0 0.0
      %1133 = vmatpush1.msra.mxu0 0.0
      %1134 = vmatprep.subr.mxu0 0.0
      %1135 = vmatpush1.msra.mxu0 0.0
      %1136 = vmatprep.subr.mxu0 0.0
      %1137 = vmatpush1.msra.mxu0 0.0
      %1138 = vmatprep.subr.mxu0 0.0
      %1139 = vmatpush1.msra.mxu0 0.0
      %1140 = vmatprep.subr.mxu0 0.0
      %1141 = vmatpush1.msra.mxu0 0.0
      %1142 = vmatprep.subr.mxu0 0.0
      %1143 = vmatpush1.msra.mxu0 0.0
      %1144 = vmatprep.subr.mxu0 0.0
      %1145 = vmatpush1.msra.mxu0 0.0
      %1146 = vmatprep.subr.mxu0 0.0
      %1147 = vmatpush1.msra.mxu0 0.0
      %1148 = vmatprep.subr.mxu0 0.0
      %1149 = vmatpush1.msra.mxu0 0.0
      %1150 = vmatprep.subr.mxu0 0.0
      %1151 = vmatpush1.msra.mxu0 0.0
      %1152 = vmatprep.mubr.f32.mxu0 0.0
      %1153 = vmatmul.mubr.f32.gmra.mrb[0].mxu0 %v1086
      %v1154 = vpop.f32.mrb[0].mxu0
      %v1155 = vadd.f32 %v1083, %v1154
      %v1156 = vpop.f32.mrb[0].mxu0
      %1157 = vdwg.mxu0
      %v1158 = vtanh.pop %v1155
      %v1159 = vadd.f32 %v888, %v1158
      %1161 = vrot.lane.b32.xlu0 %v1158, 124
      %v1162 = vpop.permute.xlu0 %1161
      %v1164 = vsub.f32 %v883, %v1162
      %1166 = vrot.lane.b32.xlu0 %v1164, 4
      %v1167 = vpop.permute.xlu0 %1166
      %v1169 = vsel %vm608, %v1159, %v1167
      %vm1170 = vcmp.lt.s32.totalorder %v451, 7
      %v1171 = vsel %vm1170, %v451, 7
      %vm1172 = vcmp.eq.s32.totalorder %v446, %v1171
      %v1173 = vsel %vm1172, 1, 0
      %v1174 = vcvt.s32.f32 %v1173
      %v1175 = vsel %vm679, %v450, 0
      %1177 = vmatprep.subr.mxu0 0.0
      %1178 = vmatpush1.msra.mxu0 %v1169
      %1179 = vmatprep.subr.mxu0 0.0
      %1180 = vmatpush1.msra.mxu0 0.0
      %1181 = vmatprep.subr.mxu0 0.0
      %1182 = vmatpush1.msra.mxu0 0.0
      %1183 = vmatprep.subr.mxu0 0.0
      %1184 = vmatpush1.msra.mxu0 0.0
      %1185 = vmatprep.subr.mxu0 0.0
      %1186 = vmatpush1.msra.mxu0 0.0
      %1187 = vmatprep.subr.mxu0 0.0
      %1188 = vmatpush1.msra.mxu0 0.0
      %1189 = vmatprep.subr.mxu0 0.0
      %1190 = vmatpush1.msra.mxu0 0.0
      %1191 = vmatprep.subr.mxu0 0.0
      %1192 = vmatpush1.msra.mxu0 0.0
      %1193 = vmatprep.subr.mxu0 0.0
      %1194 = vmatpush1.msra.mxu0 0.0
      %1195 = vmatprep.subr.mxu0 0.0
      %1196 = vmatpush1.msra.mxu0 0.0
      %1197 = vmatprep.subr.mxu0 0.0
      %1198 = vmatpush1.msra.mxu0 0.0
      %1199 = vmatprep.subr.mxu0 0.0
      %1200 = vmatpush1.msra.mxu0 0.0
      %1201 = vmatprep.subr.mxu0 0.0
      %1202 = vmatpush1.msra.mxu0 0.0
      %1203 = vmatprep.subr.mxu0 0.0
      %1204 = vmatpush1.msra.mxu0 0.0
      %1205 = vmatprep.subr.mxu0 0.0
      %1206 = vmatpush1.msra.mxu0 0.0
      %1207 = vmatprep.subr.mxu0 0.0
      %1208 = vmatpush1.msra.mxu0 0.0
      %1209 = vmatprep.subr.mxu0 0.0
      %1210 = vmatpush1.msra.mxu0 0.0
      %1211 = vmatprep.subr.mxu0 0.0
      %1212 = vmatpush1.msra.mxu0 0.0
      %1213 = vmatprep.subr.mxu0 0.0
      %1214 = vmatpush1.msra.mxu0 0.0
      %1215 = vmatprep.subr.mxu0 0.0
      %1216 = vmatpush1.msra.mxu0 0.0
      %1217 = vmatprep.subr.mxu0 0.0
      %1218 = vmatpush1.msra.mxu0 0.0
      %1219 = vmatprep.subr.mxu0 0.0
      %1220 = vmatpush1.msra.mxu0 0.0
      %1221 = vmatprep.subr.mxu0 0.0
      %1222 = vmatpush1.msra.mxu0 0.0
      %1223 = vmatprep.subr.mxu0 0.0
      %1224 = vmatpush1.msra.mxu0 0.0
      %1225 = vmatprep.subr.mxu0 0.0
      %1226 = vmatpush1.msra.mxu0 0.0
      %1227 = vmatprep.subr.mxu0 0.0
      %1228 = vmatpush1.msra.mxu0 0.0
      %1229 = vmatprep.subr.mxu0 0.0
      %1230 = vmatpush1.msra.mxu0 0.0
      %1231 = vmatprep.subr.mxu0 0.0
      %1232 = vmatpush1.msra.mxu0 0.0
      %1233 = vmatprep.subr.mxu0 0.0
      %1234 = vmatpush1.msra.mxu0 0.0
      %1235 = vmatprep.subr.mxu0 0.0
      %1236 = vmatpush1.msra.mxu0 0.0
      %1237 = vmatprep.subr.mxu0 0.0
      %1238 = vmatpush1.msra.mxu0 0.0
      %1239 = vmatprep.subr.mxu0 0.0
      %1240 = vmatpush1.msra.mxu0 0.0
      %1241 = vmatprep.mubr.f32.mxu0 0.0
      %1242 = vmatmul.mubr.f32.gmra.mrb[0].mxu0 %v1175
      %v1243 = vpop.f32.mrb[0].mxu0
      %v1244 = vadd.f32 0.0, %v1243
      %v1245 = vpop.f32.mrb[0].mxu0
      %1246 = vdwg.mxu0
      %v1248 = vsel %vm679, %v1174, 0
      %1250 = vmatprep.subr.mxu0 0.0
      %1251 = vmatpush1.msra.mxu0 %v1169
      %1252 = vmatprep.subr.mxu0 0.0
      %1253 = vmatpush1.msra.mxu0 0.0
      %1254 = vmatprep.subr.mxu0 0.0
      %1255 = vmatpush1.msra.mxu0 0.0
      %1256 = vmatprep.subr.mxu0 0.0
      %1257 = vmatpush1.msra.mxu0 0.0
      %1258 = vmatprep.subr.mxu0 0.0
      %1259 = vmatpush1.msra.mxu0 0.0
      %1260 = vmatprep.subr.mxu0 0.0
      %1261 = vmatpush1.msra.mxu0 0.0
      %1262 = vmatprep.subr.mxu0 0.0
      %1263 = vmatpush1.msra.mxu0 0.0
      %1264 = vmatprep.subr.mxu0 0.0
      %1265 = vmatpush1.msra.mxu0 0.0
      %1266 = vmatprep.subr.mxu0 0.0
      %1267 = vmatpush1.msra.mxu0 0.0
      %1268 = vmatprep.subr.mxu0 0.0
      %1269 = vmatpush1.msra.mxu0 0.0
      %1270 = vmatprep.subr.mxu0 0.0
      %1271 = vmatpush1.msra.mxu0 0.0
      %1272 = vmatprep.subr.mxu0 0.0
      %1273 = vmatpush1.msra.mxu0 0.0
      %1274 = vmatprep.subr.mxu0 0.0
      %1275 = vmatpush1.msra.mxu0 0.0
      %1276 = vmatprep.subr.mxu0 0.0
      %1277 = vmatpush1.msra.mxu0 0.0
      %1278 = vmatprep.subr.mxu0 0.0
      %1279 = vmatpush1.msra.mxu0 0.0
      %1280 = vmatprep.subr.mxu0 0.0
      %1281 = vmatpush1.msra.mxu0 0.0
      %1282 = vmatprep.subr.mxu0 0.0
      %1283 = vmatpush1.msra.mxu0 0.0
      %1284 = vmatprep.subr.mxu0 0.0
      %1285 = vmatpush1.msra.mxu0 0.0
      %1286 = vmatprep.subr.mxu0 0.0
      %1287 = vmatpush1.msra.mxu0 0.0
      %1288 = vmatprep.subr.mxu0 0.0
      %1289 = vmatpush1.msra.mxu0 0.0
      %1290 = vmatprep.subr.mxu0 0.0
      %1291 = vmatpush1.msra.mxu0 0.0
      %1292 = vmatprep.subr.mxu0 0.0
      %1293 = vmatpush1.msra.mxu0 0.0
      %1294 = vmatprep.subr.mxu0 0.0
      %1295 = vmatpush1.msra.mxu0 0.0
      %1296 = vmatprep.subr.mxu0 0.0
      %1297 = vmatpush1.msra.mxu0 0.0
      %1298 = vmatprep.subr.mxu0 0.0
      %1299 = vmatpush1.msra.mxu0 0.0
      %1300 = vmatprep.subr.mxu0 0.0
      %1301 = vmatpush1.msra.mxu0 0.0
      %1302 = vmatprep.subr.mxu0 0.0
      %1303 = vmatpush1.msra.mxu0 0.0
      %1304 = vmatprep.subr.mxu0 0.0
      %1305 = vmatpush1.msra.mxu0 0.0
      %1306 = vmatprep.subr.mxu0 0.0
      %1307 = vmatpush1.msra.mxu0 0.0
      %1308 = vmatprep.subr.mxu0 0.0
      %1309 = vmatpush1.msra.mxu0 0.0
      %1310 = vmatprep.subr.mxu0 0.0
      %1311 = vmatpush1.msra.mxu0 0.0
      %1312 = vmatprep.subr.mxu0 0.0
      %1313 = vmatpush1.msra.mxu0 0.0
      %1314 = vmatprep.mubr.f32.mxu0 0.0
      %1315 = vmatmul.mubr.f32.gmra.mrb[0].mxu0 %v1248
      %v1316 = vpop.f32.mrb[0].mxu0
      %v1317 = vadd.f32 0.0, %v1316
      %v1318 = vpop.f32.mrb[0].mxu0
      %1319 = vdwg.mxu0
      %1321 = vrot.lane.b32.xlu0 %v1317, 8
      %v1322 = vpop.permute.xlu0 %1321
      %v1324 = vsel %vm679, %v1244, %v1322
      %v1325 = vld [vmem:[%s5] sm:$0xff]
      %v1326 = vld [vmem:[%s5 + $0x8] sm:$0xff]
      %v1327 = vld [vmem:[%s5 + $0x10] sm:$0xff]
      %v1328 = vld [vmem:[%s5 + $0x18] sm:$0xff]
      %v1329 = vld [vmem:[%s5 + $0x20] sm:$0xff]
      %v1330 = vld [vmem:[%s5 + $0x28] sm:$0xff]
      %v1331 = vld [vmem:[%s5 + $0x30] sm:$0xff]
      %v1332 = vld [vmem:[%s5 + $0x38] sm:$0xff]
      %v1333 = vld [vmem:[%s5 + $0x40] sm:$0xff]
      %v1334 = vld [vmem:[%s5 + $0x48] sm:$0xff]
      %v1335 = vld [vmem:[%s6] sm:$0x1]
      %v1336 = vld [vmem:[%s7] sm:$0xff]
      %v1337 = vld [vmem:[%s7 + $0x8] sm:$0xff]
      %v1338 = vld [vmem:[%s7 + $0x10] sm:$0xff]
      %v1339 = vld [vmem:[%s7 + $0x18] sm:$0xff]
      %v1340 = vld [vmem:[%s7 + $0x20] sm:$0xff]
      %v1341 = vld [vmem:[%s7 + $0x28] sm:$0xff]
      %v1342 = vld [vmem:[%s7 + $0x30] sm:$0xff]
      %v1343 = vld [vmem:[%s7 + $0x38] sm:$0xff]
      %v1344 = vld [vmem:[%s7 + $0x40] sm:$0xff]
      %v1345 = vld [vmem:[%s7 + $0x48] sm:$0xff]
      %v1346 = vld [vmem:[%s7 + $0x50] sm:$0xff]
      %v1347 = vld [vmem:[%s7 + $0x58] sm:$0xff]
      %v1348 = vld [vmem:[%s8] sm:$0x1]
      %v1349 = vlaneseq
      %v1350 = vshrl.u32 %v1349, 7
      %v1351 = vsub.s32 0, %v1350
      %v1352 = vrot.slane %v1324, %v1351
      %v1353 = vlaneseq
      %v1354 = vshrl.u32 %v1353, 7
      %v1355 = vsub.s32 3, %v1354
      %v1356 = vrot.slane %v1324, %v1355
      %v1358 = vrot.slane %v1324, 5
      %v1361 = vsel %vm634, %v1352, %v1358
      %v1362 = vsel %vm639, %v1361, %v1356
      %v1364 = vrot.slane %v1362, 1
      %1365 = vrot.lane.b32.xlu0 %v1364, 16
      %v1366 = vpop.permute.xlu0 %1365
      %v1368 = vrot.slane %v1362, 2
      %1369 = vrot.lane.b32.xlu0 %v1368, 32
      %v1370 = vpop.permute.xlu0 %1369
      %v1372 = vrot.slane %v1362, 3
      %v1373 = vrot.slane %v1356, 3
      %v1374 = vsel %vm659, %v1372, %v1373
      %1375 = vrot.lane.b32.xlu0 %v1374, 48
      %v1376 = vpop.permute.xlu0 %1375
      %v1378 = vrot.slane %v1362, 4
      %v1379 = vrot.slane %v1356, 4
      %v1380 = vsel %vm669, %v1378, %v1379
      %1381 = vrot.lane.b32.xlu0 %v1380, 64
      %v1382 = vpop.permute.xlu0 %1381
      %v1384 = vsel %vm457, %v1362, %v1366
      %v1385 = vsel %vm687, %v1384, %v1370
      %v1386 = vsel %vm806, %v1385, %v1376
      %vm1387 = vcmask 523264
      %v1388 = vsel %vm1387, %v1386, %v1382
      %v1390 = vlaneseq
      %v1391 = vshrl.u32 %v1390, 7
      %v1392 = vsub.s32 0, %v1391
      %v1393 = vrot.slane %v1335, %v1392
      %vm1395 = vcmask 654336
      %v1397 = vsel %vm1395, %v1388, 0
      %1399 = vmatprep.subr.mxu0 0.0
      %1400 = vmatpush1.msra.mxu0 %v1325
      %1401 = vmatprep.subr.mxu0 0.0
      %1402 = vmatpush1.msra.mxu0 %v1326
      %1403 = vmatprep.subr.mxu0 0.0
      %1404 = vmatpush1.msra.mxu0 %v1327
      %1405 = vmatprep.subr.mxu0 0.0
      %1406 = vmatpush1.msra.mxu0 %v1328
      %1407 = vmatprep.subr.mxu0 0.0
      %1408 = vmatpush1.msra.mxu0 %v1329
      %1409 = vmatprep.subr.mxu0 0.0
      %1410 = vmatpush1.msra.mxu0 %v1330
      %1411 = vmatprep.subr.mxu0 0.0
      %1412 = vmatpush1.msra.mxu0 %v1331
      %1413 = vmatprep.subr.mxu0 0.0
      %1414 = vmatpush1.msra.mxu0 %v1332
      %1415 = vmatprep.subr.mxu0 0.0
      %1416 = vmatpush1.msra.mxu0 %v1333
      %1417 = vmatprep.subr.mxu0 0.0
      %1418 = vmatpush1.msra.mxu0 %v1334
      %1419 = vmatprep.subr.mxu0 0.0
      %1420 = vmatpush1.msra.mxu0 0.0
      %1421 = vmatprep.subr.mxu0 0.0
      %1422 = vmatpush1.msra.mxu0 0.0
      %1423 = vmatprep.subr.mxu0 0.0
      %1424 = vmatpush1.msra.mxu0 0.0
      %1425 = vmatprep.subr.mxu0 0.0
      %1426 = vmatpush1.msra.mxu0 0.0
      %1427 = vmatprep.subr.mxu0 0.0
      %1428 = vmatpush1.msra.mxu0 0.0
      %1429 = vmatprep.subr.mxu0 0.0
      %1430 = vmatpush1.msra.mxu0 0.0
      %1431 = vmatprep.subr.mxu0 0.0
      %1432 = vmatpush1.msra.mxu0 0.0
      %1433 = vmatprep.subr.mxu0 0.0
      %1434 = vmatpush1.msra.mxu0 0.0
      %1435 = vmatprep.subr.mxu0 0.0
      %1436 = vmatpush1.msra.mxu0 0.0
      %1437 = vmatprep.subr.mxu0 0.0
      %1438 = vmatpush1.msra.mxu0 0.0
      %1439 = vmatprep.subr.mxu0 0.0
      %1440 = vmatpush1.msra.mxu0 0.0
      %1441 = vmatprep.subr.mxu0 0.0
      %1442 = vmatpush1.msra.mxu0 0.0
      %1443 = vmatprep.subr.mxu0 0.0
      %1444 = vmatpush1.msra.mxu0 0.0
      %1445 = vmatprep.subr.mxu0 0.0
      %1446 = vmatpush1.msra.mxu0 0.0
      %1447 = vmatprep.subr.mxu0 0.0
      %1448 = vmatpush1.msra.mxu0 0.0
      %1449 = vmatprep.subr.mxu0 0.0
      %1450 = vmatpush1.msra.mxu0 0.0
      %1451 = vmatprep.subr.mxu0 0.0
      %1452 = vmatpush1.msra.mxu0 0.0
      %1453 = vmatprep.subr.mxu0 0.0
      %1454 = vmatpush1.msra.mxu0 0.0
      %1455 = vmatprep.subr.mxu0 0.0
      %1456 = vmatpush1.msra.mxu0 0.0
      %1457 = vmatprep.subr.mxu0 0.0
      %1458 = vmatpush1.msra.mxu0 0.0
      %1459 = vmatprep.subr.mxu0 0.0
      %1460 = vmatpush1.msra.mxu0 0.0
      %1461 = vmatprep.subr.mxu0 0.0
      %1462 = vmatpush1.msra.mxu0 0.0
      %1463 = vmatprep.mubr.f32.mxu0 0.0
      %1464 = vmatmul.mubr.f32.gmra.mrb[0].mxu0 %v1397
      %v1465 = vpop.f32.mrb[0].mxu0
      %v1466 = vadd.f32 %v1393, %v1465
      %v1467 = vpop.f32.mrb[0].mxu0
      %1468 = vdwg.mxu0
      %vm1469 = vcmp.gt.f32.partialorder %v1466, 0.0
      %v1470 = vmul.f32 %v1466, 0.01
      %v1471 = vsel %vm1469, %v1466, %v1470
      %v1473 = vrot.slane %v1471, 1
      %1474 = vrot.lane.b32.xlu0 %v1473, 32
      %v1475 = vpop.permute.xlu0 %1474
      %v1477 = vrot.slane %v1471, 2
      %1478 = vrot.lane.b32.xlu0 %v1477, 64
      %v1479 = vpop.permute.xlu0 %1478
      %v1481 = vsel %vm687, %v1471, %v1475
      %v1482 = vsel %vm1387, %v1481, %v1479
      %v1484 = vlaneseq
      %v1485 = vshrl.u32 %v1484, 7
      %v1486 = vsub.s32 0, %v1485
      %v1487 = vrot.slane %v1348, %v1486
      %vm1489 = vcmask 785408
      %v1491 = vsel %vm1489, %v1482, 0
      %1493 = vmatprep.subr.mxu0 0.0
      %1494 = vmatpush1.msra.mxu0 %v1336
      %1495 = vmatprep.subr.mxu0 0.0
      %1496 = vmatpush1.msra.mxu0 %v1337
      %1497 = vmatprep.subr.mxu0 0.0
      %1498 = vmatpush1.msra.mxu0 %v1338
      %1499 = vmatprep.subr.mxu0 0.0
      %1500 = vmatpush1.msra.mxu0 %v1339
      %1501 = vmatprep.subr.mxu0 0.0
      %1502 = vmatpush1.msra.mxu0 %v1340
      %1503 = vmatprep.subr.mxu0 0.0
      %1504 = vmatpush1.msra.mxu0 %v1341
      %1505 = vmatprep.subr.mxu0 0.0
      %1506 = vmatpush1.msra.mxu0 %v1342
      %1507 = vmatprep.subr.mxu0 0.0
      %1508 = vmatpush1.msra.mxu0 %v1343
      %1509 = vmatprep.subr.mxu0 0.0
      %1510 = vmatpush1.msra.mxu0 %v1344
      %1511 = vmatprep.subr.mxu0 0.0
      %1512 = vmatpush1.msra.mxu0 %v1345
      %1513 = vmatprep.subr.mxu0 0.0
      %1514 = vmatpush1.msra.mxu0 %v1346
      %1515 = vmatprep.subr.mxu0 0.0
      %1516 = vmatpush1.msra.mxu0 %v1347
      %1517 = vmatprep.subr.mxu0 0.0
      %1518 = vmatpush1.msra.mxu0 0.0
      %1519 = vmatprep.subr.mxu0 0.0
      %1520 = vmatpush1.msra.mxu0 0.0
      %1521 = vmatprep.subr.mxu0 0.0
      %1522 = vmatpush1.msra.mxu0 0.0
      %1523 = vmatprep.subr.mxu0 0.0
      %1524 = vmatpush1.msra.mxu0 0.0
      %1525 = vmatprep.subr.mxu0 0.0
      %1526 = vmatpush1.msra.mxu0 0.0
      %1527 = vmatprep.subr.mxu0 0.0
      %1528 = vmatpush1.msra.mxu0 0.0
      %1529 = vmatprep.subr.mxu0 0.0
      %1530 = vmatpush1.msra.mxu0 0.0
      %1531 = vmatprep.subr.mxu0 0.0
      %1532 = vmatpush1.msra.mxu0 0.0
      %1533 = vmatprep.subr.mxu0 0.0
      %1534 = vmatpush1.msra.mxu0 0.0
      %1535 = vmatprep.subr.mxu0 0.0
      %1536 = vmatpush1.msra.mxu0 0.0
      %1537 = vmatprep.subr.mxu0 0.0
      %1538 = vmatpush1.msra.mxu0 0.0
      %1539 = vmatprep.subr.mxu0 0.0
      %1540 = vmatpush1.msra.mxu0 0.0
      %1541 = vmatprep.subr.mxu0 0.0
      %1542 = vmatpush1.msra.mxu0 0.0
      %1543 = vmatprep.subr.mxu0 0.0
      %1544 = vmatpush1.msra.mxu0 0.0
      %1545 = vmatprep.subr.mxu0 0.0
      %1546 = vmatpush1.msra.mxu0 0.0
      %1547 = vmatprep.subr.mxu0 0.0
      %1548 = vmatpush1.msra.mxu0 0.0
      %1549 = vmatprep.subr.mxu0 0.0
      %1550 = vmatpush1.msra.mxu0 0.0
      %1551 = vmatprep.subr.mxu0 0.0
      %1552 = vmatpush1.msra.mxu0 0.0
      %1553 = vmatprep.subr.mxu0 0.0
      %1554 = vmatpush1.msra.mxu0 0.0
      %1555 = vmatprep.subr.mxu0 0.0
      %1556 = vmatpush1.msra.mxu0 0.0
      %1557 = vmatprep.mubr.f32.mxu0 0.0
      %1558 = vmatmul.mubr.f32.gmra.mrb[0].mxu0 %v1491
      %v1559 = vpop.f32.mrb[0].mxu0
      %v1560 = vadd.f32 %v1487, %v1559
      %v1561 = vpop.f32.mrb[0].mxu0
      %1562 = vdwg.mxu0
      %v1563 = vtanh.pop %v1560
      %v1564 = vmul.f32 %v1563, 1.442695
      %v1565 = vpow.pop %v1564
      %v1566 = vmul.f32 %v1317, %v1565
      %1568 = vrot.lane.b32.xlu0 %v1565, 120
      %v1569 = vpop.permute.xlu0 %1568
      %v1571 = vmul.f32 %v1244, %v1569
      %1573 = vrot.lane.b32.xlu0 %v1571, 8
      %v1574 = vpop.permute.xlu0 %1573
      %v1576 = vsel %vm679, %v1566, %v1574
      %s1577 = scalar_lea.vmem %s5, 80
      %v1578 = vld [vmem:[%s1577] sm:$0xff]
      %v1579 = vld [vmem:[%s1577 + $0x8] sm:$0xff]
      %v1580 = vld [vmem:[%s1577 + $0x10] sm:$0xff]
      %v1581 = vld [vmem:[%s1577 + $0x18] sm:$0xff]
      %v1582 = vld [vmem:[%s1577 + $0x20] sm:$0xff]
      %v1583 = vld [vmem:[%s1577 + $0x28] sm:$0xff]
      %v1584 = vld [vmem:[%s1577 + $0x30] sm:$0xff]
      %v1585 = vld [vmem:[%s1577 + $0x38] sm:$0xff]
      %v1586 = vld [vmem:[%s1577 + $0x40] sm:$0xff]
      %v1587 = vld [vmem:[%s1577 + $0x48] sm:$0xff]
      %s1588 = scalar_lea.vmem %s6, 1
      %v1589 = vld [vmem:[%s1588] sm:$0x1]
      %s1590 = scalar_lea.vmem %s7, 96
      %v1591 = vld [vmem:[%s1590] sm:$0xff]
      %v1592 = vld [vmem:[%s1590 + $0x8] sm:$0xff]
      %v1593 = vld [vmem:[%s1590 + $0x10] sm:$0xff]
      %v1594 = vld [vmem:[%s1590 + $0x18] sm:$0xff]
      %v1595 = vld [vmem:[%s1590 + $0x20] sm:$0xff]
      %v1596 = vld [vmem:[%s1590 + $0x28] sm:$0xff]
      %v1597 = vld [vmem:[%s1590 + $0x30] sm:$0xff]
      %v1598 = vld [vmem:[%s1590 + $0x38] sm:$0xff]
      %v1599 = vld [vmem:[%s1590 + $0x40] sm:$0xff]
      %v1600 = vld [vmem:[%s1590 + $0x48] sm:$0xff]
      %v1601 = vld [vmem:[%s1590 + $0x50] sm:$0xff]
      %v1602 = vld [vmem:[%s1590 + $0x58] sm:$0xff]
      %s1603 = scalar_lea.vmem %s8, 1
      %v1604 = vld [vmem:[%s1603] sm:$0x1]
      %v1605 = vlaneseq
      %v1606 = vshrl.u32 %v1605, 7
      %v1607 = vsub.s32 0, %v1606
      %v1608 = vrot.slane %v1576, %v1607
      %v1609 = vlaneseq
      %v1610 = vshrl.u32 %v1609, 7
      %v1611 = vsub.s32 3, %v1610
      %v1612 = vrot.slane %v1576, %v1611
      %v1614 = vrot.slane %v1576, 5
      %v1617 = vsel %vm634, %v1608, %v1614
      %v1618 = vsel %vm639, %v1617, %v1612
      %v1620 = vrot.slane %v1618, 1
      %1621 = vrot.lane.b32.xlu0 %v1620, 16
      %v1622 = vpop.permute.xlu0 %1621
      %v1624 = vrot.slane %v1618, 2
      %1625 = vrot.lane.b32.xlu0 %v1624, 32
      %v1626 = vpop.permute.xlu0 %1625
      %v1628 = vrot.slane %v1618, 3
      %v1629 = vrot.slane %v1612, 3
      %v1630 = vsel %vm659, %v1628, %v1629
      %1631 = vrot.lane.b32.xlu0 %v1630, 48
      %v1632 = vpop.permute.xlu0 %1631
      %v1634 = vrot.slane %v1618, 4
      %v1635 = vrot.slane %v1612, 4
      %v1636 = vsel %vm669, %v1634, %v1635
      %1637 = vrot.lane.b32.xlu0 %v1636, 64
      %v1638 = vpop.permute.xlu0 %1637
      %v1640 = vsel %vm457, %v1618, %v1622
      %v1641 = vsel %vm687, %v1640, %v1626
      %v1642 = vsel %vm806, %v1641, %v1632
      %v1643 = vsel %vm1387, %v1642, %v1638
      %v1645 = vlaneseq
      %v1646 = vshrl.u32 %v1645, 7
      %v1647 = vsub.s32 0, %v1646
      %v1648 = vrot.slane %v1589, %v1647
      %v1651 = vsel %vm1395, %v1643, 0
      %1653 = vmatprep.subr.mxu0 0.0
      %1654 = vmatpush1.msra.mxu0 %v1578
      %1655 = vmatprep.subr.mxu0 0.0
      %1656 = vmatpush1.msra.mxu0 %v1579
      %1657 = vmatprep.subr.mxu0 0.0
      %1658 = vmatpush1.msra.mxu0 %v1580
      %1659 = vmatprep.subr.mxu0 0.0
      %1660 = vmatpush1.msra.mxu0 %v1581
      %1661 = vmatprep.subr.mxu0 0.0
      %1662 = vmatpush1.msra.mxu0 %v1582
      %1663 = vmatprep.subr.mxu0 0.0
      %1664 = vmatpush1.msra.mxu0 %v1583
      %1665 = vmatprep.subr.mxu0 0.0
      %1666 = vmatpush1.msra.mxu0 %v1584
      %1667 = vmatprep.subr.mxu0 0.0
      %1668 = vmatpush1.msra.mxu0 %v1585
      %1669 = vmatprep.subr.mxu0 0.0
      %1670 = vmatpush1.msra.mxu0 %v1586
      %1671 = vmatprep.subr.mxu0 0.0
      %1672 = vmatpush1.msra.mxu0 %v1587
      %1673 = vmatprep.subr.mxu0 0.0
      %1674 = vmatpush1.msra.mxu0 0.0
      %1675 = vmatprep.subr.mxu0 0.0
      %1676 = vmatpush1.msra.mxu0 0.0
      %1677 = vmatprep.subr.mxu0 0.0
      %1678 = vmatpush1.msra.mxu0 0.0
      %1679 = vmatprep.subr.mxu0 0.0
      %1680 = vmatpush1.msra.mxu0 0.0
      %1681 = vmatprep.subr.mxu0 0.0
      %1682 = vmatpush1.msra.mxu0 0.0
      %1683 = vmatprep.subr.mxu0 0.0
      %1684 = vmatpush1.msra.mxu0 0.0
      %1685 = vmatprep.subr.mxu0 0.0
      %1686 = vmatpush1.msra.mxu0 0.0
      %1687 = vmatprep.subr.mxu0 0.0
      %1688 = vmatpush1.msra.mxu0 0.0
      %1689 = vmatprep.subr.mxu0 0.0
      %1690 = vmatpush1.msra.mxu0 0.0
      %1691 = vmatprep.subr.mxu0 0.0
      %1692 = vmatpush1.msra.mxu0 0.0
      %1693 = vmatprep.subr.mxu0 0.0
      %1694 = vmatpush1.msra.mxu0 0.0
      %1695 = vmatprep.subr.mxu0 0.0
      %1696 = vmatpush1.msra.mxu0 0.0
      %1697 = vmatprep.subr.mxu0 0.0
      %1698 = vmatpush1.msra.mxu0 0.0
      %1699 = vmatprep.subr.mxu0 0.0
      %1700 = vmatpush1.msra.mxu0 0.0
      %1701 = vmatprep.subr.mxu0 0.0
      %1702 = vmatpush1.msra.mxu0 0.0
      %1703 = vmatprep.subr.mxu0 0.0
      %1704 = vmatpush1.msra.mxu0 0.0
      %1705 = vmatprep.subr.mxu0 0.0
      %1706 = vmatpush1.msra.mxu0 0.0
      %1707 = vmatprep.subr.mxu0 0.0
      %1708 = vmatpush1.msra.mxu0 0.0
      %1709 = vmatprep.subr.mxu0 0.0
      %1710 = vmatpush1.msra.mxu0 0.0
      %1711 = vmatprep.subr.mxu0 0.0
      %1712 = vmatpush1.msra.mxu0 0.0
      %1713 = vmatprep.subr.mxu0 0.0
      %1714 = vmatpush1.msra.mxu0 0.0
      %1715 = vmatprep.subr.mxu0 0.0
      %1716 = vmatpush1.msra.mxu0 0.0
      %1717 = vmatprep.mubr.f32.mxu0 0.0
      %1718 = vmatmul.mubr.f32.gmra.mrb[0].mxu0 %v1651
      %v1719 = vpop.f32.mrb[0].mxu0
      %v1720 = vadd.f32 %v1648, %v1719
      %v1721 = vpop.f32.mrb[0].mxu0
      %1722 = vdwg.mxu0
      %vm1723 = vcmp.gt.f32.partialorder %v1720, 0.0
      %v1724 = vmul.f32 %v1720, 0.01
      %v1725 = vsel %vm1723, %v1720, %v1724
      %v1727 = vrot.slane %v1725, 1
      %1728 = vrot.lane.b32.xlu0 %v1727, 32
      %v1729 = vpop.permute.xlu0 %1728
      %v1731 = vrot.slane %v1725, 2
      %1732 = vrot.lane.b32.xlu0 %v1731, 64
      %v1733 = vpop.permute.xlu0 %1732
      %v1735 = vsel %vm687, %v1725, %v1729
      %v1736 = vsel %vm1387, %v1735, %v1733
      %v1738 = vlaneseq
      %v1739 = vshrl.u32 %v1738, 7
      %v1740 = vsub.s32 0, %v1739
      %v1741 = vrot.slane %v1604, %v1740
      %v1744 = vsel %vm1489, %v1736, 0
      %1746 = vmatprep.subr.mxu0 0.0
      %1747 = vmatpush1.msra.mxu0 %v1591
      %1748 = vmatprep.subr.mxu0 0.0
      %1749 = vmatpush1.msra.mxu0 %v1592
      %1750 = vmatprep.subr.mxu0 0.0
      %1751 = vmatpush1.msra.mxu0 %v1593
      %1752 = vmatprep.subr.mxu0 0.0
      %1753 = vmatpush1.msra.mxu0 %v1594
      %1754 = vmatprep.subr.mxu0 0.0
      %1755 = vmatpush1.msra.mxu0 %v1595
      %1756 = vmatprep.subr.mxu0 0.0
      %1757 = vmatpush1.msra.mxu0 %v1596
      %1758 = vmatprep.subr.mxu0 0.0
      %1759 = vmatpush1.msra.mxu0 %v1597
      %1760 = vmatprep.subr.mxu0 0.0
      %1761 = vmatpush1.msra.mxu0 %v1598
      %1762 = vmatprep.subr.mxu0 0.0
      %1763 = vmatpush1.msra.mxu0 %v1599
      %1764 = vmatprep.subr.mxu0 0.0
      %1765 = vmatpush1.msra.mxu0 %v1600
      %1766 = vmatprep.subr.mxu0 0.0
      %1767 = vmatpush1.msra.mxu0 %v1601
      %1768 = vmatprep.subr.mxu0 0.0
      %1769 = vmatpush1.msra.mxu0 %v1602
      %1770 = vmatprep.subr.mxu0 0.0
      %1771 = vmatpush1.msra.mxu0 0.0
      %1772 = vmatprep.subr.mxu0 0.0
      %1773 = vmatpush1.msra.mxu0 0.0
      %1774 = vmatprep.subr.mxu0 0.0
      %1775 = vmatpush1.msra.mxu0 0.0
      %1776 = vmatprep.subr.mxu0 0.0
      %1777 = vmatpush1.msra.mxu0 0.0
      %1778 = vmatprep.subr.mxu0 0.0
      %1779 = vmatpush1.msra.mxu0 0.0
      %1780 = vmatprep.subr.mxu0 0.0
      %1781 = vmatpush1.msra.mxu0 0.0
      %1782 = vmatprep.subr.mxu0 0.0
      %1783 = vmatpush1.msra.mxu0 0.0
      %1784 = vmatprep.subr.mxu0 0.0
      %1785 = vmatpush1.msra.mxu0 0.0
      %1786 = vmatprep.subr.mxu0 0.0
      %1787 = vmatpush1.msra.mxu0 0.0
      %1788 = vmatprep.subr.mxu0 0.0
      %1789 = vmatpush1.msra.mxu0 0.0
      %1790 = vmatprep.subr.mxu0 0.0
      %1791 = vmatpush1.msra.mxu0 0.0
      %1792 = vmatprep.subr.mxu0 0.0
      %1793 = vmatpush1.msra.mxu0 0.0
      %1794 = vmatprep.subr.mxu0 0.0
      %1795 = vmatpush1.msra.mxu0 0.0
      %1796 = vmatprep.subr.mxu0 0.0
      %1797 = vmatpush1.msra.mxu0 0.0
      %1798 = vmatprep.subr.mxu0 0.0
      %1799 = vmatpush1.msra.mxu0 0.0
      %1800 = vmatprep.subr.mxu0 0.0
      %1801 = vmatpush1.msra.mxu0 0.0
      %1802 = vmatprep.subr.mxu0 0.0
      %1803 = vmatpush1.msra.mxu0 0.0
      %1804 = vmatprep.subr.mxu0 0.0
      %1805 = vmatpush1.msra.mxu0 0.0
      %1806 = vmatprep.subr.mxu0 0.0
      %1807 = vmatpush1.msra.mxu0 0.0
      %1808 = vmatprep.subr.mxu0 0.0
      %1809 = vmatpush1.msra.mxu0 0.0
      %1810 = vmatprep.mubr.f32.mxu0 0.0
      %1811 = vmatmul.mubr.f32.gmra.mrb[0].mxu0 %v1744
      %v1812 = vpop.f32.mrb[0].mxu0
      %v1813 = vadd.f32 %v1741, %v1812
      %v1814 = vpop.f32.mrb[0].mxu0
      %1815 = vdwg.mxu0
      %v1816 = vtanh.pop %v1813
      %v1817 = vadd.f32 %v1571, %v1816
      %1819 = vrot.lane.b32.xlu0 %v1816, 120
      %v1820 = vpop.permute.xlu0 %1819
      %v1822 = vsub.f32 %v1566, %v1820
      %1824 = vrot.lane.b32.xlu0 %v1822, 4
      %v1825 = vpop.permute.xlu0 %1824
      %1828 = vrot.lane.b32.xlu0 %v1817, 4
      %v1829 = vpop.permute.xlu0 %1828
      %1831 = vrot.lane.b32.xlu0 %v1822, 8
      %v1832 = vpop.permute.xlu0 %1831
      %v1834 = vsel %vm608, %v1817, %v1825
      %v1835 = vsel %vm679, %v1834, %v1829
      %vm1836 = vcmask 97280
      %v1837 = vsel %vm1836, %v1835, %v1832
      %vm1838 = vcmp.lt.s32.totalorder %v451, 3
      %v1839 = vsel %vm1838, %v451, 3
      %vm1840 = vcmp.eq.s32.totalorder %v446, %v1839
      %v1841 = vsel %vm1840, 1, 0
      %v1842 = vcvt.s32.f32 %v1841
      %v1843 = vsel %vm608, %v450, 0
      %v1846 = vsel %vm669, %v1837, 0
      %1848 = vmatprep.subr.mxu0 0.0
      %1849 = vmatpush1.msra.mxu0 %v1846
      %1850 = vmatprep.subr.mxu0 0.0
      %1851 = vmatpush1.msra.mxu0 0.0
      %1852 = vmatprep.subr.mxu0 0.0
      %1853 = vmatpush1.msra.mxu0 0.0
      %1854 = vmatprep.subr.mxu0 0.0
      %1855 = vmatpush1.msra.mxu0 0.0
      %1856 = vmatprep.subr.mxu0 0.0
      %1857 = vmatpush1.msra.mxu0 0.0
      %1858 = vmatprep.subr.mxu0 0.0
      %1859 = vmatpush1.msra.mxu0 0.0
      %1860 = vmatprep.subr.mxu0 0.0
      %1861 = vmatpush1.msra.mxu0 0.0
      %1862 = vmatprep.subr.mxu0 0.0
      %1863 = vmatpush1.msra.mxu0 0.0
      %1864 = vmatprep.subr.mxu0 0.0
      %1865 = vmatpush1.msra.mxu0 0.0
      %1866 = vmatprep.subr.mxu0 0.0
      %1867 = vmatpush1.msra.mxu0 0.0
      %1868 = vmatprep.subr.mxu0 0.0
      %1869 = vmatpush1.msra.mxu0 0.0
      %1870 = vmatprep.subr.mxu0 0.0
      %1871 = vmatpush1.msra.mxu0 0.0
      %1872 = vmatprep.subr.mxu0 0.0
      %1873 = vmatpush1.msra.mxu0 0.0
      %1874 = vmatprep.subr.mxu0 0.0
      %1875 = vmatpush1.msra.mxu0 0.0
      %1876 = vmatprep.subr.mxu0 0.0
      %1877 = vmatpush1.msra.mxu0 0.0
      %1878 = vmatprep.subr.mxu0 0.0
      %1879 = vmatpush1.msra.mxu0 0.0
      %1880 = vmatprep.subr.mxu0 0.0
      %1881 = vmatpush1.msra.mxu0 0.0
      %1882 = vmatprep.subr.mxu0 0.0
      %1883 = vmatpush1.msra.mxu0 0.0
      %1884 = vmatprep.subr.mxu0 0.0
      %1885 = vmatpush1.msra.mxu0 0.0
      %1886 = vmatprep.subr.mxu0 0.0
      %1887 = vmatpush1.msra.mxu0 0.0
      %1888 = vmatprep.subr.mxu0 0.0
      %1889 = vmatpush1.msra.mxu0 0.0
      %1890 = vmatprep.subr.mxu0 0.0
      %1891 = vmatpush1.msra.mxu0 0.0
      %1892 = vmatprep.subr.mxu0 0.0
      %1893 = vmatpush1.msra.mxu0 0.0
      %1894 = vmatprep.subr.mxu0 0.0
      %1895 = vmatpush1.msra.mxu0 0.0
      %1896 = vmatprep.subr.mxu0 0.0
      %1897 = vmatpush1.msra.mxu0 0.0
      %1898 = vmatprep.subr.mxu0 0.0
      %1899 = vmatpush1.msra.mxu0 0.0
      %1900 = vmatprep.subr.mxu0 0.0
      %1901 = vmatpush1.msra.mxu0 0.0
      %1902 = vmatprep.subr.mxu0 0.0
      %1903 = vmatpush1.msra.mxu0 0.0
      %1904 = vmatprep.subr.mxu0 0.0
      %1905 = vmatpush1.msra.mxu0 0.0
      %1906 = vmatprep.subr.mxu0 0.0
      %1907 = vmatpush1.msra.mxu0 0.0
      %1908 = vmatprep.subr.mxu0 0.0
      %1909 = vmatpush1.msra.mxu0 0.0
      %1910 = vmatprep.subr.mxu0 0.0
      %1911 = vmatpush1.msra.mxu0 0.0
      %1912 = vmatprep.mubr.f32.mxu0 0.0
      %1913 = vmatmul.mubr.f32.gmra.mrb[0].mxu0 %v1843
      %v1914 = vpop.f32.mrb[0].mxu0
      %v1915 = vadd.f32 0.0, %v1914
      %v1916 = vpop.f32.mrb[0].mxu0
      %1917 = vdwg.mxu0
      %v1919 = vsel %vm608, %v1842, 0
      %1921 = vmatprep.subr.mxu0 0.0
      %1922 = vmatpush1.msra.mxu0 %v1846
      %1923 = vmatprep.subr.mxu0 0.0
      %1924 = vmatpush1.msra.mxu0 0.0
      %1925 = vmatprep.subr.mxu0 0.0
      %1926 = vmatpush1.msra.mxu0 0.0
      %1927 = vmatprep.subr.mxu0 0.0
      %1928 = vmatpush1.msra.mxu0 0.0
      %1929 = vmatprep.subr.mxu0 0.0
      %1930 = vmatpush1.msra.mxu0 0.0
      %1931 = vmatprep.subr.mxu0 0.0
      %1932 = vmatpush1.msra.mxu0 0.0
      %1933 = vmatprep.subr.mxu0 0.0
      %1934 = vmatpush1.msra.mxu0 0.0
      %1935 = vmatprep.subr.mxu0 0.0
      %1936 = vmatpush1.msra.mxu0 0.0
      %1937 = vmatprep.subr.mxu0 0.0
      %1938 = vmatpush1.msra.mxu0 0.0
      %1939 = vmatprep.subr.mxu0 0.0
      %1940 = vmatpush1.msra.mxu0 0.0
      %1941 = vmatprep.subr.mxu0 0.0
      %1942 = vmatpush1.msra.mxu0 0.0
      %1943 = vmatprep.subr.mxu0 0.0
      %1944 = vmatpush1.msra.mxu0 0.0
      %1945 = vmatprep.subr.mxu0 0.0
      %1946 = vmatpush1.msra.mxu0 0.0
      %1947 = vmatprep.subr.mxu0 0.0
      %1948 = vmatpush1.msra.mxu0 0.0
      %1949 = vmatprep.subr.mxu0 0.0
      %1950 = vmatpush1.msra.mxu0 0.0
      %1951 = vmatprep.subr.mxu0 0.0
      %1952 = vmatpush1.msra.mxu0 0.0
      %1953 = vmatprep.subr.mxu0 0.0
      %1954 = vmatpush1.msra.mxu0 0.0
      %1955 = vmatprep.subr.mxu0 0.0
      %1956 = vmatpush1.msra.mxu0 0.0
      %1957 = vmatprep.subr.mxu0 0.0
      %1958 = vmatpush1.msra.mxu0 0.0
      %1959 = vmatprep.subr.mxu0 0.0
      %1960 = vmatpush1.msra.mxu0 0.0
      %1961 = vmatprep.subr.mxu0 0.0
      %1962 = vmatpush1.msra.mxu0 0.0
      %1963 = vmatprep.subr.mxu0 0.0
      %1964 = vmatpush1.msra.mxu0 0.0
      %1965 = vmatprep.subr.mxu0 0.0
      %1966 = vmatpush1.msra.mxu0 0.0
      %1967 = vmatprep.subr.mxu0 0.0
      %1968 = vmatpush1.msra.mxu0 0.0
      %1969 = vmatprep.subr.mxu0 0.0
      %1970 = vmatpush1.msra.mxu0 0.0
      %1971 = vmatprep.subr.mxu0 0.0
      %1972 = vmatpush1.msra.mxu0 0.0
      %1973 = vmatprep.subr.mxu0 0.0
      %1974 = vmatpush1.msra.mxu0 0.0
      %1975 = vmatprep.subr.mxu0 0.0
      %1976 = vmatpush1.msra.mxu0 0.0
      %1977 = vmatprep.subr.mxu0 0.0
      %1978 = vmatpush1.msra.mxu0 0.0
      %1979 = vmatprep.subr.mxu0 0.0
      %1980 = vmatpush1.msra.mxu0 0.0
      %1981 = vmatprep.subr.mxu0 0.0
      %1982 = vmatpush1.msra.mxu0 0.0
      %1983 = vmatprep.subr.mxu0 0.0
      %1984 = vmatpush1.msra.mxu0 0.0
      %1985 = vmatprep.mubr.f32.mxu0 0.0
      %1986 = vmatmul.mubr.f32.gmra.mrb[0].mxu0 %v1919
      %v1987 = vpop.f32.mrb[0].mxu0
      %v1988 = vadd.f32 0.0, %v1987
      %v1989 = vpop.f32.mrb[0].mxu0
      %1990 = vdwg.mxu0
      %1992 = vrot.lane.b32.xlu0 %v1988, 16
      %v1993 = vpop.permute.xlu0 %1992
      %v1995 = vsel %vm457, %v1915, %v1993
      %v1996 = vld [vmem:[%s9] sm:$0xff]
      %v1997 = vld [vmem:[%s9 + $0x8] sm:$0xff]
      %v1998 = vld [vmem:[%s9 + $0x10] sm:$0xff]
      %v1999 = vld [vmem:[%s9 + $0x18] sm:$0xff]
      %v2000 = vld [vmem:[%s9 + $0x20] sm:$0xff]
      %v2001 = vld [vmem:[%s9 + $0x28] sm:$0xff]
      %v2002 = vld [vmem:[%s9 + $0x30] sm:$0xff]
      %v2003 = vld [vmem:[%s9 + $0x38] sm:$0xff]
      %v2004 = vld [vmem:[%s9 + $0x40] sm:$0xff]
      %v2005 = vld [vmem:[%s9 + $0x48] sm:$0xff]
      %v2006 = vld [vmem:[%s9 + $0x50] sm:$0xff]
      %v2007 = vld [vmem:[%s9 + $0x58] sm:$0xff]
      %v2008 = vld [vmem:[%s9 + $0x60] sm:$0xff]
      %v2009 = vld [vmem:[%s9 + $0x68] sm:$0xff]
      %v2010 = vld [vmem:[%s9 + $0x70] sm:$0xff]
      %v2011 = vld [vmem:[%s9 + $0x78] sm:$0xff]
      %v2012 = vld [vmem:[%s9 + $0x80] sm:$0xff]
      %v2013 = vld [vmem:[%s9 + $0x88] sm:$0xff]
      %v2014 = vld [vmem:[%s9 + $0x90] sm:$0xff]
      %v2015 = vld [vmem:[%s9 + $0x98] sm:$0xff]
      %v2016 = vld [vmem:[%s10] sm:$0x1]
      %v2017 = vld [vmem:[%s11] sm:$0xff]
      %v2018 = vld [vmem:[%s11 + $0x8] sm:$0xff]
      %v2019 = vld [vmem:[%s11 + $0x10] sm:$0xff]
      %v2020 = vld [vmem:[%s11 + $0x18] sm:$0xff]
      %v2021 = vld [vmem:[%s11 + $0x20] sm:$0xff]
      %v2022 = vld [vmem:[%s11 + $0x28] sm:$0xff]
      %v2023 = vld [vmem:[%s11 + $0x30] sm:$0xff]
      %v2024 = vld [vmem:[%s11 + $0x38] sm:$0xff]
      %v2025 = vld [vmem:[%s11 + $0x40] sm:$0xff]
      %v2026 = vld [vmem:[%s11 + $0x48] sm:$0xff]
      %v2027 = vld [vmem:[%s11 + $0x50] sm:$0xff]
      %v2028 = vld [vmem:[%s11 + $0x58] sm:$0xff]
      %v2029 = vld [vmem:[%s11 + $0x60] sm:$0xff]
      %v2030 = vld [vmem:[%s11 + $0x68] sm:$0xff]
      %v2031 = vld [vmem:[%s11 + $0x70] sm:$0xff]
      %v2032 = vld [vmem:[%s11 + $0x78] sm:$0xff]
      %v2033 = vld [vmem:[%s11 + $0x80] sm:$0xff]
      %v2034 = vld [vmem:[%s11 + $0x88] sm:$0xff]
      %v2035 = vld [vmem:[%s11 + $0x90] sm:$0xff]
      %v2036 = vld [vmem:[%s11 + $0x98] sm:$0xff]
      %v2037 = vld [vmem:[%s11 + $0xa0] sm:$0xff]
      %v2038 = vld [vmem:[%s11 + $0xa8] sm:$0xff]
      %v2039 = vld [vmem:[%s11 + $0xb0] sm:$0xff]
      %v2040 = vld [vmem:[%s11 + $0xb8] sm:$0xff]
      %v2041 = vld [vmem:[%s12] sm:$0x1]
      %v2042 = vlaneseq
      %v2043 = vshrl.u32 %v2042, 7
      %v2044 = vsub.s32 0, %v2043
      %v2045 = vrot.slane %v1995, %v2044
      %v2046 = vlaneseq
      %v2047 = vshrl.u32 %v2046, 7
      %v2048 = vsub.s32 1, %v2047
      %v2049 = vrot.slane %v1995, %v2048
      %v2051 = vrot.slane %v1995, 5
      %v2053 = vsel %vm634, %v2045, %v2051
      %v2054 = vsel %vm659, %v2053, %v2049
      %v2056 = vrot.slane %v2054, 1
      %2057 = vrot.lane.b32.xlu0 %v2056, 32
      %v2058 = vpop.permute.xlu0 %2057
      %v2060 = vrot.slane %v2054, 2
      %2061 = vrot.lane.b32.xlu0 %v2060, 64
      %v2062 = vpop.permute.xlu0 %2061
      %v2064 = vrot.slane %v2054, 3
      %2065 = vrot.lane.b32.xlu0 %v2064, 96
      %v2066 = vpop.permute.xlu0 %2065
      %v2068 = vrot.slane %v2054, 4
      %v2069 = vsel %vm687, %v2054, %v2058
      %v2070 = vsel %vm1387, %v2069, %v2062
      %v2071 = vsel %vm1489, %v2070, %v2066
      %v2073 = vlaneseq
      %v2074 = vshrl.u32 %v2073, 7
      %v2075 = vsub.s32 0, %v2074
      %v2076 = vrot.slane %v2016, %v2075
      %v2078 = vsel %vm687, %v2068, 0
      %2080 = vmatprep.subr.mxu0 0.0
      %2081 = vmatpush1.msra.mxu0 %v1996
      %2082 = vmatprep.subr.mxu0 0.0
      %2083 = vmatpush1.msra.mxu0 %v1997
      %2084 = vmatprep.subr.mxu0 0.0
      %2085 = vmatpush1.msra.mxu0 %v1998
      %2086 = vmatprep.subr.mxu0 0.0
      %2087 = vmatpush1.msra.mxu0 %v1999
      %2088 = vmatprep.subr.mxu0 0.0
      %2089 = vmatpush1.msra.mxu0 %v2000
      %2090 = vmatprep.subr.mxu0 0.0
      %2091 = vmatpush1.msra.mxu0 %v2001
      %2092 = vmatprep.subr.mxu0 0.0
      %2093 = vmatpush1.msra.mxu0 %v2002
      %2094 = vmatprep.subr.mxu0 0.0
      %2095 = vmatpush1.msra.mxu0 %v2003
      %2096 = vmatprep.subr.mxu0 0.0
      %2097 = vmatpush1.msra.mxu0 %v2004
      %2098 = vmatprep.subr.mxu0 0.0
      %2099 = vmatpush1.msra.mxu0 %v2005
      %2100 = vmatprep.subr.mxu0 0.0
      %2101 = vmatpush1.msra.mxu0 %v2006
      %2102 = vmatprep.subr.mxu0 0.0
      %2103 = vmatpush1.msra.mxu0 %v2007
      %2104 = vmatprep.subr.mxu0 0.0
      %2105 = vmatpush1.msra.mxu0 %v2008
      %2106 = vmatprep.subr.mxu0 0.0
      %2107 = vmatpush1.msra.mxu0 %v2009
      %2108 = vmatprep.subr.mxu0 0.0
      %2109 = vmatpush1.msra.mxu0 %v2010
      %2110 = vmatprep.subr.mxu0 0.0
      %2111 = vmatpush1.msra.mxu0 %v2011
      %2112 = vmatprep.subr.mxu0 0.0
      %2113 = vmatpush1.msra.mxu0 %v2012
      %2114 = vmatprep.subr.mxu0 0.0
      %2115 = vmatpush1.msra.mxu0 %v2013
      %2116 = vmatprep.subr.mxu0 0.0
      %2117 = vmatpush1.msra.mxu0 %v2014
      %2118 = vmatprep.subr.mxu0 0.0
      %2119 = vmatpush1.msra.mxu0 %v2015
      %2120 = vmatprep.subr.mxu0 0.0
      %2121 = vmatpush1.msra.mxu0 0.0
      %2122 = vmatprep.subr.mxu0 0.0
      %2123 = vmatpush1.msra.mxu0 0.0
      %2124 = vmatprep.subr.mxu0 0.0
      %2125 = vmatpush1.msra.mxu0 0.0
      %2126 = vmatprep.subr.mxu0 0.0
      %2127 = vmatpush1.msra.mxu0 0.0
      %2128 = vmatprep.subr.mxu0 0.0
      %2129 = vmatpush1.msra.mxu0 0.0
      %2130 = vmatprep.subr.mxu0 0.0
      %2131 = vmatpush1.msra.mxu0 0.0
      %2132 = vmatprep.subr.mxu0 0.0
      %2133 = vmatpush1.msra.mxu0 0.0
      %2134 = vmatprep.subr.mxu0 0.0
      %2135 = vmatpush1.msra.mxu0 0.0
      %2136 = vmatprep.subr.mxu0 0.0
      %2137 = vmatpush1.msra.mxu0 0.0
      %2138 = vmatprep.subr.mxu0 0.0
      %2139 = vmatpush1.msra.mxu0 0.0
      %2140 = vmatprep.subr.mxu0 0.0
      %2141 = vmatpush1.msra.mxu0 0.0
      %2142 = vmatprep.subr.mxu0 0.0
      %2143 = vmatpush1.msra.mxu0 0.0
      %2144 = vmatprep.mubr.f32.mxu0 %v2078
      %2145 = vmatmul.mubr.f32.gmra.mrb[0].mxu0 %v2071
      %v2146 = vpop.f32.mrb[0].mxu0
      %v2147 = vadd.f32 %v2076, %v2146
      %v2148 = vpop.f32.mrb[0].mxu0
      %2149 = vdwg.mxu0
      %vm2150 = vcmp.gt.f32.partialorder %v2147, 0.0
      %v2151 = vmul.f32 %v2147, 0.01
      %v2152 = vsel %vm2150, %v2147, %v2151
      %v2154 = vrot.slane %v2152, 1
      %2155 = vrot.lane.b32.xlu0 %v2154, 64
      %v2156 = vpop.permute.xlu0 %2155
      %v2158 = vrot.slane %v2152, 2
      %v2159 = vsel %vm1387, %v2152, %v2156
      %v2161 = vlaneseq
      %v2162 = vshrl.u32 %v2161, 7
      %v2163 = vsub.s32 0, %v2162
      %v2164 = vrot.slane %v2041, %v2163
      %v2166 = vsel %vm1387, %v2158, 0
      %2168 = vmatprep.subr.mxu0 0.0
      %2169 = vmatpush1.msra.mxu0 %v2017
      %2170 = vmatprep.subr.mxu0 0.0
      %2171 = vmatpush1.msra.mxu0 %v2018
      %2172 = vmatprep.subr.mxu0 0.0
      %2173 = vmatpush1.msra.mxu0 %v2019
      %2174 = vmatprep.subr.mxu0 0.0
      %2175 = vmatpush1.msra.mxu0 %v2020
      %2176 = vmatprep.subr.mxu0 0.0
      %2177 = vmatpush1.msra.mxu0 %v2021
      %2178 = vmatprep.subr.mxu0 0.0
      %2179 = vmatpush1.msra.mxu0 %v2022
      %2180 = vmatprep.subr.mxu0 0.0
      %2181 = vmatpush1.msra.mxu0 %v2023
      %2182 = vmatprep.subr.mxu0 0.0
      %2183 = vmatpush1.msra.mxu0 %v2024
      %2184 = vmatprep.subr.mxu0 0.0
      %2185 = vmatpush1.msra.mxu0 %v2025
      %2186 = vmatprep.subr.mxu0 0.0
      %2187 = vmatpush1.msra.mxu0 %v2026
      %2188 = vmatprep.subr.mxu0 0.0
      %2189 = vmatpush1.msra.mxu0 %v2027
      %2190 = vmatprep.subr.mxu0 0.0
      %2191 = vmatpush1.msra.mxu0 %v2028
      %2192 = vmatprep.subr.mxu0 0.0
      %2193 = vmatpush1.msra.mxu0 %v2029
      %2194 = vmatprep.subr.mxu0 0.0
      %2195 = vmatpush1.msra.mxu0 %v2030
      %2196 = vmatprep.subr.mxu0 0.0
      %2197 = vmatpush1.msra.mxu0 %v2031
      %2198 = vmatprep.subr.mxu0 0.0
      %2199 = vmatpush1.msra.mxu0 %v2032
      %2200 = vmatprep.subr.mxu0 0.0
      %2201 = vmatpush1.msra.mxu0 %v2033
      %2202 = vmatprep.subr.mxu0 0.0
      %2203 = vmatpush1.msra.mxu0 %v2034
      %2204 = vmatprep.subr.mxu0 0.0
      %2205 = vmatpush1.msra.mxu0 %v2035
      %2206 = vmatprep.subr.mxu0 0.0
      %2207 = vmatpush1.msra.mxu0 %v2036
      %2208 = vmatprep.subr.mxu0 0.0
      %2209 = vmatpush1.msra.mxu0 %v2037
      %2210 = vmatprep.subr.mxu0 0.0
      %2211 = vmatpush1.msra.mxu0 %v2038
      %2212 = vmatprep.subr.mxu0 0.0
      %2213 = vmatpush1.msra.mxu0 %v2039
      %2214 = vmatprep.subr.mxu0 0.0
      %2215 = vmatpush1.msra.mxu0 %v2040
      %2216 = vmatprep.subr.mxu0 0.0
      %2217 = vmatpush1.msra.mxu0 0.0
      %2218 = vmatprep.subr.mxu0 0.0
      %2219 = vmatpush1.msra.mxu0 0.0
      %2220 = vmatprep.subr.mxu0 0.0
      %2221 = vmatpush1.msra.mxu0 0.0
      %2222 = vmatprep.subr.mxu0 0.0
      %2223 = vmatpush1.msra.mxu0 0.0
      %2224 = vmatprep.subr.mxu0 0.0
      %2225 = vmatpush1.msra.mxu0 0.0
      %2226 = vmatprep.subr.mxu0 0.0
      %2227 = vmatpush1.msra.mxu0 0.0
      %2228 = vmatprep.subr.mxu0 0.0
      %2229 = vmatpush1.msra.mxu0 0.0
      %2230 = vmatprep.subr.mxu0 0.0
      %2231 = vmatpush1.msra.mxu0 0.0
      %2232 = vmatprep.mubr.f32.mxu0 %v2166
      %2233 = vmatmul.mubr.f32.gmra.mrb[0].mxu0 %v2159
      %v2234 = vpop.f32.mrb[0].mxu0
      %v2235 = vadd.f32 %v2164, %v2234
      %v2236 = vpop.f32.mrb[0].mxu0
      %2237 = vdwg.mxu0
      %v2238 = vtanh.pop %v2235
      %v2239 = vmul.f32 %v2238, 1.442695
      %v2240 = vpow.pop %v2239
      %v2241 = vmul.f32 %v1988, %v2240
      %2243 = vrot.lane.b32.xlu0 %v2240, 112
      %v2244 = vpop.permute.xlu0 %2243
      %v2246 = vmul.f32 %v1915, %v2244
      %2248 = vrot.lane.b32.xlu0 %v2246, 16
      %v2249 = vpop.permute.xlu0 %2248
      %v2251 = vsel %vm457, %v2241, %v2249
      %s2252 = scalar_lea.vmem %s9, 160
      %v2253 = vld [vmem:[%s2252] sm:$0xff]
      %v2254 = vld [vmem:[%s2252 + $0x8] sm:$0xff]
      %v2255 = vld [vmem:[%s2252 + $0x10] sm:$0xff]
      %v2256 = vld [vmem:[%s2252 + $0x18] sm:$0xff]
      %v2257 = vld [vmem:[%s2252 + $0x20] sm:$0xff]
      %v2258 = vld [vmem:[%s2252 + $0x28] sm:$0xff]
      %v2259 = vld [vmem:[%s2252 + $0x30] sm:$0xff]
      %v2260 = vld [vmem:[%s2252 + $0x38] sm:$0xff]
      %v2261 = vld [vmem:[%s2252 + $0x40] sm:$0xff]
      %v2262 = vld [vmem:[%s2252 + $0x48] sm:$0xff]
      %v2263 = vld [vmem:[%s2252 + $0x50] sm:$0xff]
      %v2264 = vld [vmem:[%s2252 + $0x58] sm:$0xff]
      %v2265 = vld [vmem:[%s2252 + $0x60] sm:$0xff]
      %v2266 = vld [vmem:[%s2252 + $0x68] sm:$0xff]
      %v2267 = vld [vmem:[%s2252 + $0x70] sm:$0xff]
      %v2268 = vld [vmem:[%s2252 + $0x78] sm:$0xff]
      %v2269 = vld [vmem:[%s2252 + $0x80] sm:$0xff]
      %v2270 = vld [vmem:[%s2252 + $0x88] sm:$0xff]
      %v2271 = vld [vmem:[%s2252 + $0x90] sm:$0xff]
      %v2272 = vld [vmem:[%s2252 + $0x98] sm:$0xff]
      %s2273 = scalar_lea.vmem %s10, 1
      %v2274 = vld [vmem:[%s2273] sm:$0x1]
      %s2275 = scalar_lea.vmem %s11, 192
      %v2276 = vld [vmem:[%s2275] sm:$0xff]
      %v2277 = vld [vmem:[%s2275 + $0x8] sm:$0xff]
      %v2278 = vld [vmem:[%s2275 + $0x10] sm:$0xff]
      %v2279 = vld [vmem:[%s2275 + $0x18] sm:$0xff]
      %v2280 = vld [vmem:[%s2275 + $0x20] sm:$0xff]
      %v2281 = vld [vmem:[%s2275 + $0x28] sm:$0xff]
      %v2282 = vld [vmem:[%s2275 + $0x30] sm:$0xff]
      %v2283 = vld [vmem:[%s2275 + $0x38] sm:$0xff]
      %v2284 = vld [vmem:[%s2275 + $0x40] sm:$0xff]
      %v2285 = vld [vmem:[%s2275 + $0x48] sm:$0xff]
      %v2286 = vld [vmem:[%s2275 + $0x50] sm:$0xff]
      %v2287 = vld [vmem:[%s2275 + $0x58] sm:$0xff]
      %v2288 = vld [vmem:[%s2275 + $0x60] sm:$0xff]
      %v2289 = vld [vmem:[%s2275 + $0x68] sm:$0xff]
      %v2290 = vld [vmem:[%s2275 + $0x70] sm:$0xff]
      %v2291 = vld [vmem:[%s2275 + $0x78] sm:$0xff]
      %v2292 = vld [vmem:[%s2275 + $0x80] sm:$0xff]
      %v2293 = vld [vmem:[%s2275 + $0x88] sm:$0xff]
      %v2294 = vld [vmem:[%s2275 + $0x90] sm:$0xff]
      %v2295 = vld [vmem:[%s2275 + $0x98] sm:$0xff]
      %v2296 = vld [vmem:[%s2275 + $0xa0] sm:$0xff]
      %v2297 = vld [vmem:[%s2275 + $0xa8] sm:$0xff]
      %v2298 = vld [vmem:[%s2275 + $0xb0] sm:$0xff]
      %v2299 = vld [vmem:[%s2275 + $0xb8] sm:$0xff]
      %s2300 = scalar_lea.vmem %s12, 1
      %v2301 = vld [vmem:[%s2300] sm:$0x1]
      %v2302 = vlaneseq
      %v2303 = vshrl.u32 %v2302, 7
      %v2304 = vsub.s32 0, %v2303
      %v2305 = vrot.slane %v2251, %v2304
      %v2306 = vlaneseq
      %v2307 = vshrl.u32 %v2306, 7
      %v2308 = vsub.s32 1, %v2307
      %v2309 = vrot.slane %v2251, %v2308
      %v2311 = vrot.slane %v2251, 5
      %v2313 = vsel %vm634, %v2305, %v2311
      %v2314 = vsel %vm659, %v2313, %v2309
      %v2316 = vrot.slane %v2314, 1
      %2317 = vrot.lane.b32.xlu0 %v2316, 32
      %v2318 = vpop.permute.xlu0 %2317
      %v2320 = vrot.slane %v2314, 2
      %2321 = vrot.lane.b32.xlu0 %v2320, 64
      %v2322 = vpop.permute.xlu0 %2321
      %v2324 = vrot.slane %v2314, 3
      %2325 = vrot.lane.b32.xlu0 %v2324, 96
      %v2326 = vpop.permute.xlu0 %2325
      %v2328 = vrot.slane %v2314, 4
      %v2329 = vsel %vm687, %v2314, %v2318
      %v2330 = vsel %vm1387, %v2329, %v2322
      %v2331 = vsel %vm1489, %v2330, %v2326
      %v2333 = vlaneseq
      %v2334 = vshrl.u32 %v2333, 7
      %v2335 = vsub.s32 0, %v2334
      %v2336 = vrot.slane %v2274, %v2335
      %v2338 = vsel %vm687, %v2328, 0
      %2340 = vmatprep.subr.mxu0 0.0
      %2341 = vmatpush1.msra.mxu0 %v2253
      %2342 = vmatprep.subr.mxu0 0.0
      %2343 = vmatpush1.msra.mxu0 %v2254
      %2344 = vmatprep.subr.mxu0 0.0
      %2345 = vmatpush1.msra.mxu0 %v2255
      %2346 = vmatprep.subr.mxu0 0.0
      %2347 = vmatpush1.msra.mxu0 %v2256
      %2348 = vmatprep.subr.mxu0 0.0
      %2349 = vmatpush1.msra.mxu0 %v2257
      %2350 = vmatprep.subr.mxu0 0.0
      %2351 = vmatpush1.msra.mxu0 %v2258
      %2352 = vmatprep.subr.mxu0 0.0
      %2353 = vmatpush1.msra.mxu0 %v2259
      %2354 = vmatprep.subr.mxu0 0.0
      %2355 = vmatpush1.msra.mxu0 %v2260
      %2356 = vmatprep.subr.mxu0 0.0
      %2357 = vmatpush1.msra.mxu0 %v2261
      %2358 = vmatprep.subr.mxu0 0.0
      %2359 = vmatpush1.msra.mxu0 %v2262
      %2360 = vmatprep.subr.mxu0 0.0
      %2361 = vmatpush1.msra.mxu0 %v2263
      %2362 = vmatprep.subr.mxu0 0.0
      %2363 = vmatpush1.msra.mxu0 %v2264
      %2364 = vmatprep.subr.mxu0 0.0
      %2365 = vmatpush1.msra.mxu0 %v2265
      %2366 = vmatprep.subr.mxu0 0.0
      %2367 = vmatpush1.msra.mxu0 %v2266
      %2368 = vmatprep.subr.mxu0 0.0
      %2369 = vmatpush1.msra.mxu0 %v2267
      %2370 = vmatprep.subr.mxu0 0.0
      %2371 = vmatpush1.msra.mxu0 %v2268
      %2372 = vmatprep.subr.mxu0 0.0
      %2373 = vmatpush1.msra.mxu0 %v2269
      %2374 = vmatprep.subr.mxu0 0.0
      %2375 = vmatpush1.msra.mxu0 %v2270
      %2376 = vmatprep.subr.mxu0 0.0
      %2377 = vmatpush1.msra.mxu0 %v2271
      %2378 = vmatprep.subr.mxu0 0.0
      %2379 = vmatpush1.msra.mxu0 %v2272
      %2380 = vmatprep.subr.mxu0 0.0
      %2381 = vmatpush1.msra.mxu0 0.0
      %2382 = vmatprep.subr.mxu0 0.0
      %2383 = vmatpush1.msra.mxu0 0.0
      %2384 = vmatprep.subr.mxu0 0.0
      %2385 = vmatpush1.msra.mxu0 0.0
      %2386 = vmatprep.subr.mxu0 0.0
      %2387 = vmatpush1.msra.mxu0 0.0
      %2388 = vmatprep.subr.mxu0 0.0
      %2389 = vmatpush1.msra.mxu0 0.0
      %2390 = vmatprep.subr.mxu0 0.0
      %2391 = vmatpush1.msra.mxu0 0.0
      %2392 = vmatprep.subr.mxu0 0.0
      %2393 = vmatpush1.msra.mxu0 0.0
      %2394 = vmatprep.subr.mxu0 0.0
      %2395 = vmatpush1.msra.mxu0 0.0
      %2396 = vmatprep.subr.mxu0 0.0
      %2397 = vmatpush1.msra.mxu0 0.0
      %2398 = vmatprep.subr.mxu0 0.0
      %2399 = vmatpush1.msra.mxu0 0.0
      %2400 = vmatprep.subr.mxu0 0.0
      %2401 = vmatpush1.msra.mxu0 0.0
      %2402 = vmatprep.subr.mxu0 0.0
      %2403 = vmatpush1.msra.mxu0 0.0
      %2404 = vmatprep.mubr.f32.mxu0 %v2338
      %2405 = vmatmul.mubr.f32.gmra.mrb[0].mxu0 %v2331
      %v2406 = vpop.f32.mrb[0].mxu0
      %v2407 = vadd.f32 %v2336, %v2406
      %v2408 = vpop.f32.mrb[0].mxu0
      %2409 = vdwg.mxu0
      %vm2410 = vcmp.gt.f32.partialorder %v2407, 0.0
      %v2411 = vmul.f32 %v2407, 0.01
      %v2412 = vsel %vm2410, %v2407, %v2411
      %v2414 = vrot.slane %v2412, 1
      %2415 = vrot.lane.b32.xlu0 %v2414, 64
      %v2416 = vpop.permute.xlu0 %2415
      %v2418 = vrot.slane %v2412, 2
      %v2419 = vsel %vm1387, %v2412, %v2416
      %v2421 = vlaneseq
      %v2422 = vshrl.u32 %v2421, 7
      %v2423 = vsub.s32 0, %v2422
      %v2424 = vrot.slane %v2301, %v2423
      %v2426 = vsel %vm1387, %v2418, 0
      %2428 = vmatprep.subr.mxu0 0.0
      %2429 = vmatpush1.msra.mxu0 %v2276
      %2430 = vmatprep.subr.mxu0 0.0
      %2431 = vmatpush1.msra.mxu0 %v2277
      %2432 = vmatprep.subr.mxu0 0.0
      %2433 = vmatpush1.msra.mxu0 %v2278
      %2434 = vmatprep.subr.mxu0 0.0
      %2435 = vmatpush1.msra.mxu0 %v2279
      %2436 = vmatprep.subr.mxu0 0.0
      %2437 = vmatpush1.msra.mxu0 %v2280
      %2438 = vmatprep.subr.mxu0 0.0
      %2439 = vmatpush1.msra.mxu0 %v2281
      %2440 = vmatprep.subr.mxu0 0.0
      %2441 = vmatpush1.msra.mxu0 %v2282
      %2442 = vmatprep.subr.mxu0 0.0
      %2443 = vmatpush1.msra.mxu0 %v2283
      %2444 = vmatprep.subr.mxu0 0.0
      %2445 = vmatpush1.msra.mxu0 %v2284
      %2446 = vmatprep.subr.mxu0 0.0
      %2447 = vmatpush1.msra.mxu0 %v2285
      %2448 = vmatprep.subr.mxu0 0.0
      %2449 = vmatpush1.msra.mxu0 %v2286
      %2450 = vmatprep.subr.mxu0 0.0
      %2451 = vmatpush1.msra.mxu0 %v2287
      %2452 = vmatprep.subr.mxu0 0.0
      %2453 = vmatpush1.msra.mxu0 %v2288
      %2454 = vmatprep.subr.mxu0 0.0
      %2455 = vmatpush1.msra.mxu0 %v2289
      %2456 = vmatprep.subr.mxu0 0.0
      %2457 = vmatpush1.msra.mxu0 %v2290
      %2458 = vmatprep.subr.mxu0 0.0
      %2459 = vmatpush1.msra.mxu0 %v2291
      %2460 = vmatprep.subr.mxu0 0.0
      %2461 = vmatpush1.msra.mxu0 %v2292
      %2462 = vmatprep.subr.mxu0 0.0
      %2463 = vmatpush1.msra.mxu0 %v2293
      %2464 = vmatprep.subr.mxu0 0.0
      %2465 = vmatpush1.msra.mxu0 %v2294
      %2466 = vmatprep.subr.mxu0 0.0
      %2467 = vmatpush1.msra.mxu0 %v2295
      %2468 = vmatprep.subr.mxu0 0.0
      %2469 = vmatpush1.msra.mxu0 %v2296
      %2470 = vmatprep.subr.mxu0 0.0
      %2471 = vmatpush1.msra.mxu0 %v2297
      %2472 = vmatprep.subr.mxu0 0.0
      %2473 = vmatpush1.msra.mxu0 %v2298
      %2474 = vmatprep.subr.mxu0 0.0
      %2475 = vmatpush1.msra.mxu0 %v2299
      %2476 = vmatprep.subr.mxu0 0.0
      %2477 = vmatpush1.msra.mxu0 0.0
      %2478 = vmatprep.subr.mxu0 0.0
      %2479 = vmatpush1.msra.mxu0 0.0
      %2480 = vmatprep.subr.mxu0 0.0
      %2481 = vmatpush1.msra.mxu0 0.0
      %2482 = vmatprep.subr.mxu0 0.0
      %2483 = vmatpush1.msra.mxu0 0.0
      %2484 = vmatprep.subr.mxu0 0.0
      %2485 = vmatpush1.msra.mxu0 0.0
      %2486 = vmatprep.subr.mxu0 0.0
      %2487 = vmatpush1.msra.mxu0 0.0
      %2488 = vmatprep.subr.mxu0 0.0
      %2489 = vmatpush1.msra.mxu0 0.0
      %2490 = vmatprep.subr.mxu0 0.0
      %2491 = vmatpush1.msra.mxu0 0.0
      %2492 = vmatprep.mubr.f32.mxu0 %v2426
      %2493 = vmatmul.mubr.f32.gmra.mrb[0].mxu0 %v2419
      %v2494 = vpop.f32.mrb[0].mxu0
      %v2495 = vadd.f32 %v2424, %v2494
      %v2496 = vpop.f32.mrb[0].mxu0
      %2497 = vdwg.mxu0
      %v2498 = vtanh.pop %v2495
      %v2499 = vadd.f32 %v2246, %v2498
      %2501 = vrot.lane.b32.xlu0 %v2498, 112
      %v2502 = vpop.permute.xlu0 %2501
      %v2504 = vsub.f32 %v2241, %v2502
      %vm2505 = vcmask 25600
      %2506 = vst.msk [vmem:[%s440] sm:$0x3] %vm2505, %v2499
      %2507 = vst.msk [vmem:[%s440 + $0x2] sm:$0x3] %vm2505, %v2504
      %2509 = vrot.lane.b32.xlu0 %v2499, 124
      %v2510 = vpop.permute.xlu0 %2509
      %2512 = vst.msk [vmem:[%s440 + $0x4] sm:$0x3] %vm2505, %v2510
      %2514 = vrot.lane.b32.xlu0 %v2504, 124
      %v2515 = vpop.permute.xlu0 %2514
      %2517 = vst.msk [vmem:[%s440 + $0x6] sm:$0x3] %vm2505, %v2515
      %2518 = vrot.lane.b32.xlu0 %v2499, 120
      %v2519 = vpop.permute.xlu0 %2518
      %2521 = vst.msk [vmem:[%s440 + $0x8] sm:$0x3] %vm2505, %v2519
      %2522 = vrot.lane.b32.xlu0 %v2504, 120
      %v2523 = vpop.permute.xlu0 %2522
      %2525 = vst.msk [vmem:[%s440 + $0xa] sm:$0x3] %vm2505, %v2523
      %2526 = vrot.lane.b32.xlu0 %v2499, 116
      %v2527 = vpop.permute.xlu0 %2526
      %2529 = vst.msk [vmem:[%s440 + $0xc] sm:$0x3] %vm2505, %v2527
      %2530 = vrot.lane.b32.xlu0 %v2504, 116
      %v2531 = vpop.permute.xlu0 %2530
      %2533 = vst.msk [vmem:[%s440 + $0xe] sm:$0x3] %vm2505, %v2531
      %p2534 = scmp.lt.s32.totalorder %s24, 1
      %s2535 = scalar_select %p2534, %s24, 1
      %s2536 = smul.addr %s2535, 2
      %s2537 = smul.addr %s2536, 8
      %s2538 = scalar_lea.vmem %s13, %s2537
      // Predicated region
      $region73: #{scinet_tree_forward.1} parent=71 // pred_check
        %p2539 = pneg %p320
      $region74: #{scinet_tree_forward.1} parent=71 // pred_check_branch
        %2541 = sbr.rel (%p2539) target = $region76
      $region75: #{scinet_tree_forward.1} parent=71 // pred_region
        _
      $region76: #{scinet_tree_forward.1} parent=71 // pred_fallthru
        _
    $region72: #{scinet_tree_forward.1} parent=5 // pred_fallthru
      _
    %p2542 = scmp.le.s32.totalorder 2, %s19
    // Predicated region
    $region77: #{scinet_tree_forward.1} parent=5 // pred_check
      %p2543 = pneg %p2542
    $region78: #{scinet_tree_forward.1} parent=5 // pred_check_branch
      %2545 = sbr.rel (%p2543) target = $region80
    $region79: #{scinet_tree_forward.1} parent=5 // pred_region
      %s2546 = ssub.s32 %s19, 2
      // Predicated region
      $region81: #{scinet_tree_forward.1} parent=79 // pred_check
        %p2547 = pneg %p326
      $region82: #{scinet_tree_forward.1} parent=79 // pred_check_branch
        %2549 = sbr.rel (%p2547) target = $region84
      $region83: #{scinet_tree_forward.1} parent=79 // pred_region
        %p2550 = scmp.lt.s32.totalorder %s25, 1
        %s2551 = scalar_select %p2550, %s25, 1
        %s2552 = smul.addr %s2551, 2
        %s2553 = smul.addr %s2552, 8
        %s2554 = scalar_lea.vmem %s13, %s2553
      $region84: #{scinet_tree_forward.1} parent=79 // pred_fallthru
        _
    $region80: #{scinet_tree_forward.1} parent=5 // pred_fallthru
      _
  $region6: #{scinet_tree_forward.1} parent=0 // loop_footer
    %s23 = sadd.s32 1, %s19
  $region7: #{scinet_tree_forward.1} parent=0 // loop_footer_branch
    %18 = sbr.rel target = $region3
  $region8: #{scinet_tree_forward.1} parent=0 // loop_exit
    _

</llo_original>
